<compile_context>
chip_gen: v6e
topology: v6e:2x2x1
jax: 0.10.0
libtpu: 0.0.40
codegen_flags: <defaults>
</compile_context>

<pallas_src>
import jax
import jax.numpy as jnp
from jax.experimental import pallas as pl
from jax.experimental.pallas import tpu as pltpu


def _round_up(x, m):
    return (x + m - 1) // m * m


def _pick_row_tile(h):
    # Largest convenient row tile that divides H; fall back to whole image.
    for t in (32, 16, 8):
        if h % t == 0:
            return t
    return h


# ------------------------------ fused kernel --------------------------------

def _bottleneck_kernel(xc_ref, xh_ref, w1_ref, b1_ref, w2_ref, b2_ref,
                       w3_ref, b3_ref, o_ref, h1_ref):
    """One (batch, row-tile) step of the fused Bottleneck block.

    xc_ref : (TH, W, Cin)   f32   core input rows (also the identity residual)
    xh_ref : (2,  W, Cin)   f32   top/bottom halo rows (zeros at image edges)
    w1_ref : (Cin, P)       bf16  conv1 weight with bn1 scale folded in
    b1_ref : (1, P)         f32   bn1 bias
    w2_ref : (9, P, P)      bf16  conv2 taps (ky*3+kx, Cin, Cout), bn2 scale folded in
    b2_ref : (1, P)         f32   bn2 bias
    w3_ref : (P, Cout)      bf16  conv3 weight with bn3 scale folded in
    b3_ref : (1, Cout)      f32   bn3 bias
    o_ref  : (TH*W, Cout)   f32   lane-dense output block
    h1_ref : (TH+2, WB, P)  bf16  VMEM scratch: zero-padded relu(bn1(conv1(x))) band
    """
    TH, W, Cin = xc_ref.shape
    P = w1_ref.shape[1]
    WB = h1_ref.shape[1]

    r = pl.program_id(1)
    num_r = pl.num_programs(1)

    w1 = w1_ref[...]
    b1 = b1_ref[...]

    # ---- conv1 (1x1) + bn1 + relu, written into a zero-padded VMEM band -----
    h1_ref[...] = jnp.zeros_like(h1_ref)          # borders / halo rows default to 0

    xc = xc_ref[...]                               # (TH, W, Cin) f32 (kept for residual)
    core = xc.reshape(TH * W, Cin)
    h1_core = jnp.dot(core.astype(jnp.bfloat16), w1,
                      preferred_element_type=jnp.float32) + b1
    h1_core = jnp.maximum(h1_core, 0.0)
    h1_ref[1:TH + 1, 1:W + 1, :] = h1_core.reshape(TH, W, P).astype(h1_ref.dtype)

    halo = xh_ref[...].reshape(2 * W, Cin).astype(jnp.bfloat16)
    h1_halo = jnp.maximum(
        jnp.dot(halo, w1, preferred_element_type=jnp.float32) + b1, 0.0)
    h1_halo = h1_halo.reshape(2, W, P)
    # Rows outside the image are conv2 zero padding, NOT relu(bn1 bias): mask them.
    top_m = (r > 0).astype(jnp.float32)
    bot_m = (r < num_r - 1).astype(jnp.float32)
    h1_ref[0:1, 1:W + 1, :] = (h1_halo[0:1] * top_m).astype(h1_ref.dtype)
    h1_ref[TH + 1:TH + 2, 1:W + 1, :] = (h1_halo[1:2] * bot_m).astype(h1_ref.dtype)

    # ---- conv2 (3x3, pad=1) + bn2 + relu ------------------------------------
    # q[kx][i, u] = sum_ky h1[i+ky, u] @ w2[ky, kx]  -- only leading-dim row slices.
    q = [jnp.zeros((TH * WB, P), jnp.float32) for _ in range(3)]
    for ky in range(3):
        rows = h1_ref[ky:ky + TH, :, :].reshape(TH * WB, P)
        for kx in range(3):
            q[kx] = q[kx] + jnp.dot(rows, w2_ref[3 * ky + kx],
                                    preferred_element_type=jnp.float32)
    q0 = q[0].reshape(TH, WB, P)
    q1 = q[1].reshape(TH, WB, P)
    q2 = q[2].reshape(TH, WB, P)
    # out2[i, x] = q0[i, x] + q1[i, x+1] + q2[i, x+2]   (3 shifted adds total)
    conv2 = q0[:, 0:W, :] + q1[:, 1:W + 1, :] + q2[:, 2:W + 2, :]
    h2 = jnp.maximum(conv2.reshape(TH * W, P) + b2_ref[...], 0.0).astype(jnp.bfloat16)

    # ---- conv3 (1x1) + bn3 + residual add + relu ----------------------------
    res = core                                     # identity residual (downsample=None)
    y = jnp.dot(h2, w3_ref[...], preferred_element_type=jnp.float32) + b3_ref[...] + res
    o_ref[...] = jnp.maximum(y, 0.0).astype(o_ref.dtype)


# ------------------------------ wrappers -------------------------------------

def _fold_bn(gamma, beta, mean, var, eps=1e-5):
    scale = gamma / jnp.sqrt(var + eps)
    bias = beta - mean * scale
    return scale, bias


def prepare_params(params, compute_dtype=jnp.bfloat16):
    """Fold BN scales into the conv weights and lay them out for the kernel (run once)."""
    s1, b1 = _fold_bn(*params["bn1"])
    s2, b2 = _fold_bn(*params["bn2"])
    s3, b3 = _fold_bn(*params["bn3"])

    w1 = params["w1"][:, :, 0, 0]                                  # (P, Cin)
    w2 = params["w2"]                                              # (P, P, 3, 3)
    w3 = params["w3"][:, :, 0, 0]                                  # (Cout, P)

    w1f = (w1 * s1[:, None]).T.astype(compute_dtype)               # (Cin, P)
    w2f = jnp.transpose(w2 * s2[:, None, None, None], (2, 3, 1, 0))
    w2f = w2f.reshape(9, w2.shape[1], w2.shape[0]).astype(compute_dtype)  # (9, Cin, Cout)
    w3f = (w3 * s3[:, None]).T.astype(compute_dtype)               # (P, Cout)

    return {
        "w1": w1f, "b1": b1.reshape(1, -1).astype(jnp.float32),
        "w2": w2f, "b2": b2.reshape(1, -1).astype(jnp.float32),
        "w3": w3f, "b3": b3.reshape(1, -1).astype(jnp.float32),
    }


@jax.jit
def bottleneck_forward(x_nchw, prepped):
    """x_nchw: (N, inplanes, H, W) float32 (PyTorch layout). Returns the same layout."""
    N, Cin, H, W = x_nchw.shape
    P = prepped["w1"].shape[1]
    Cout = prepped["w3"].shape[1]
    assert Cin == Cout, "identity residual requires inplanes == planes * expansion"
    # TODO(synk): stride>1 / downsample branch of Bottleneck is not implemented.

    TH = _pick_row_tile(H)
    RT = H // TH
    WB = _round_up(W + 2, 8)

    # Boundary-only layout conversion; a full network would stay NHWC end-to-end.
    x = jnp.transpose(x_nchw, (0, 2, 3, 1))                        # (N, H, W, Cin)

    # Halo rows for each 3x3 row tile (zeros at the image top/bottom edges).
    zrow = jnp.zeros((N, 1, W, Cin), x.dtype)
    top = jnp.concatenate([zrow, x[:, TH - 1:H - 1:TH]], axis=1)   # (N, RT, W, Cin)
    bot = jnp.concatenate([x[:, TH:H:TH], zrow], axis=1)           # (N, RT, W, Cin)
    xhalo = jnp.stack([top, bot], axis=2).reshape(N * RT, 2, W, Cin)

    out_flat = pl.pallas_call(
        _bottleneck_kernel,
        out_shape=jax.ShapeDtypeStruct((N, H * W, Cout), x.dtype),
        grid_spec=pltpu.PrefetchScalarGridSpec(
            num_scalar_prefetch=0,
            grid=(N, RT),
            in_specs=[
                pl.BlockSpec((pl.Squeezed(), TH, W, Cin), lambda n, r: (n, r, 0, 0)),
                pl.BlockSpec((pl.Squeezed(), 2, W, Cin),
                             lambda n, r: (n * RT + r, 0, 0, 0)),
                pl.BlockSpec((Cin, P), lambda n, r: (0, 0)),
                pl.BlockSpec((1, P), lambda n, r: (0, 0)),
                pl.BlockSpec((9, P, P), lambda n, r: (0, 0, 0)),
                pl.BlockSpec((1, P), lambda n, r: (0, 0)),
                pl.BlockSpec((P, Cout), lambda n, r: (0, 0)),
                pl.BlockSpec((1, Cout), lambda n, r: (0, 0)),
            ],
            out_specs=pl.BlockSpec((pl.Squeezed(), TH * W, Cout),
                                   lambda n, r: (n, r, 0)),
            scratch_shapes=[pltpu.VMEM((TH + 2, WB, P), jnp.bfloat16)],
        ),
        compiler_params=pltpu.CompilerParams(
            dimension_semantics=("parallel", "parallel")),
    )(x, xhalo, prepped["w1"], prepped["b1"], prepped["w2"], prepped["b2"],
      prepped["w3"], prepped["b3"])

    out = out_flat.reshape(N, H, W, Cout)
    return jnp.transpose(out, (0, 3, 1, 2))                        # NHWC -> NCHW


# ------------------------------ driver ---------------------------------------

def _make_params(key, inplanes, planes):
    expansion = 4
    ks = jax.random.split(key, 6)

    def bn_params(k, c):
        k1, k2, k3, k4 = jax.random.split(k, 4)
        gamma = 1.0 + 0.1 * jax.random.normal(k1, (c,), jnp.float32)
        beta = 0.1 * jax.random.normal(k2, (c,), jnp.float32)
        mean = 0.1 * jax.random.normal(k3, (c,), jnp.float32)
        var = jax.random.uniform(k4, (c,), jnp.float32, 0.5, 1.5)
        return gamma, beta, mean, var

    return {
        # PyTorch Conv2d weight layout: (out_ch, in_ch, kh, kw)
        "w1": 0.1 * jax.random.normal(ks[0], (planes, inplanes, 1, 1), jnp.float32),
        "w2": 0.1 * jax.random.normal(ks[1], (planes, planes, 3, 3), jnp.float32),
        "w3": 0.1 * jax.random.normal(ks[2], (planes * expansion, planes, 1, 1), jnp.float32),
        "bn1": bn_params(ks[3], planes),
        "bn2": bn_params(ks[4], planes),
        "bn3": bn_params(ks[5], planes * expansion),
    }


if __name__ == "__main__":
    key = jax.random.PRNGKey(0)
    # NOTE: real ResNet deployments use planes >= 64 (so channels fill the 128-lane
    # vregs); these small shapes are just the self-contained driver.
    N, planes, H, W = 2, 4, 16, 16
    inplanes = planes * 4          # identity residual requires matching channels
    kx_, kp_ = jax.random.split(key)
    x = jax.random.normal(kx_, (N, inplanes, H, W), jnp.float32)
    params = _make_params(kp_, inplanes, planes)

    prepped = prepare_params(params)       # one-time BN folding / weight layout prep
    out = bottleneck_forward(x, prepped)
    jax.block_until_ready(out)
    assert out.shape == (N, inplanes, H, W)
    print("KERNEL_OK")
</pallas_src>

<mosaic_0001>
module attributes {stable_mosaic.version = 11 : i64} {
  func.func @_bottleneck_kernel(%arg0: i32, %arg1: i32, %arg2: memref<1x16x16x16xf32, #tpu.memory_space<vmem>>, %arg3: memref<1x2x16x16xf32, #tpu.memory_space<vmem>>, %arg4: memref<16x4xbf16, #tpu.memory_space<vmem>>, %arg5: memref<1x4xf32, #tpu.memory_space<vmem>>, %arg6: memref<9x4x4xbf16, #tpu.memory_space<vmem>>, %arg7: memref<1x4xf32, #tpu.memory_space<vmem>>, %arg8: memref<4x16xbf16, #tpu.memory_space<vmem>>, %arg9: memref<1x16xf32, #tpu.memory_space<vmem>>, %arg10: memref<1x256x16xf32, #tpu.memory_space<vmem>>, %arg11: memref<18x24x4xbf16, #tpu.memory_space<vmem>>) attributes {dimension_semantics = [#tpu.dimension_semantics<parallel>, #tpu.dimension_semantics<parallel>], iteration_bounds = array<i64: 2, 1>, scalar_prefetch = 0 : i64, scratch_operands = 1 : i64, tpu.core_type = #tpu.core_type<tc>, window_params = [{transform_indices = @transform_0, window_bounds = array<i64: 1, 16, 16, 16>}, {transform_indices = @transform_1, window_bounds = array<i64: 1, 2, 16, 16>}, {pipeline_mode = #tpu.pipeline_mode<synchronous>, transform_indices = @transform_2, window_bounds = array<i64: 16, 4>}, {pipeline_mode = #tpu.pipeline_mode<synchronous>, transform_indices = @transform_3, window_bounds = array<i64: 1, 4>}, {pipeline_mode = #tpu.pipeline_mode<synchronous>, transform_indices = @transform_4, window_bounds = array<i64: 9, 4, 4>}, {pipeline_mode = #tpu.pipeline_mode<synchronous>, transform_indices = @transform_5, window_bounds = array<i64: 1, 4>}, {pipeline_mode = #tpu.pipeline_mode<synchronous>, transform_indices = @transform_6, window_bounds = array<i64: 4, 16>}, {pipeline_mode = #tpu.pipeline_mode<synchronous>, transform_indices = @transform_7, window_bounds = array<i64: 1, 16>}, {transform_indices = @transform_8, window_bounds = array<i64: 1, 256, 16>}]} {
    %c0 = arith.constant 0 : index
    %c0_0 = arith.constant 0 : index
    %0 = vector.load %arg4[%c0, %c0_0] : memref<16x4xbf16, #tpu.memory_space<vmem>>, vector<16x4xbf16>
    %c0_1 = arith.constant 0 : index
    %c0_2 = arith.constant 0 : index
    %1 = vector.load %arg5[%c0_1, %c0_2] : memref<1x4xf32, #tpu.memory_space<vmem>>, vector<1x4xf32>
    %cst = arith.constant 0.000000e+00 : bf16
    %2 = vector.broadcast %cst : bf16 to vector<18x24x4xbf16>
    %c0_3 = arith.constant 0 : index
    %c0_4 = arith.constant 0 : index
    %c0_5 = arith.constant 0 : index
    %3 = vector.load %arg11[%c0_3, %c0_4, %c0_5] : memref<18x24x4xbf16, #tpu.memory_space<vmem>>, vector<18x24x4xbf16>
    tpu.vector_store %arg11[%c0_3, %c0_4, %c0_5], %2 {strides = array<i32>} : memref<18x24x4xbf16, #tpu.memory_space<vmem>>, vector<18x24x4xbf16>,
    %c0_6 = arith.constant 0 : index
    %c0_7 = arith.constant 0 : index
    %c0_8 = arith.constant 0 : index
    %c0_9 = arith.constant 0 : index
    %4 = vector.load %arg2[%c0_6, %c0_7, %c0_8, %c0_9] : memref<1x16x16x16xf32, #tpu.memory_space<vmem>>, vector<1x16x16x16xf32>
    %5 = vector.shape_cast %4 : vector<1x16x16x16xf32> to vector<16x16x16xf32>
    %6 = vector.shape_cast %5 : vector<16x16x16xf32> to vector<256x16xf32>
    %7 = arith.truncf %6 : vector<256x16xf32> to vector<256x16xbf16>
    %cst_10 = arith.constant dense<0.000000e+00> : vector<256x4xf32>
    %8 = tpu.matmul %7, %0, %cst_10 {dimension_numbers = #tpu.dot_dimension_numbers<[1], [0], [0], [1], [0, 0, 1, 1], [], []>} : vector<256x16xbf16>, vector<16x4xbf16>, vector<256x4xf32> -> vector<256x4xf32>
    %9 = vector.broadcast %1 : vector<1x4xf32> to vector<256x4xf32>
    %10 = arith.addf %8, %9 : vector<256x4xf32>
    %cst_11 = arith.constant 0.000000e+00 : f32
    %11 = vector.broadcast %cst_11 : f32 to vector<256x4xf32>
    %12 = arith.maximumf %10, %11 : vector<256x4xf32>
    %13 = vector.shape_cast %12 : vector<256x4xf32> to vector<16x16x4xf32>
    %14 = arith.truncf %13 : vector<16x16x4xf32> to vector<16x16x4xbf16>
    %c1 = arith.constant 1 : index
    %c1_12 = arith.constant 1 : index
    %c0_13 = arith.constant 0 : index
    %15 = vector.load %arg11[%c1, %c1_12, %c0_13] : memref<18x24x4xbf16, #tpu.memory_space<vmem>>, vector<16x16x4xbf16>
    tpu.vector_store %arg11[%c1, %c1_12, %c0_13], %14 {strides = array<i32>} : memref<18x24x4xbf16, #tpu.memory_space<vmem>>, vector<16x16x4xbf16>,
    %c0_14 = arith.constant 0 : index
    %c0_15 = arith.constant 0 : index
    %c0_16 = arith.constant 0 : index
    %c0_17 = arith.constant 0 : index
    %16 = vector.load %arg3[%c0_14, %c0_15, %c0_16, %c0_17] : memref<1x2x16x16xf32, #tpu.memory_space<vmem>>, vector<1x2x16x16xf32>
    %17 = vector.shape_cast %16 : vector<1x2x16x16xf32> to vector<2x16x16xf32>
    %18 = vector.shape_cast %17 : vector<2x16x16xf32> to vector<32x16xf32>
    %19 = arith.truncf %18 : vector<32x16xf32> to vector<32x16xbf16>
    %cst_18 = arith.constant dense<0.000000e+00> : vector<32x4xf32>
    %20 = tpu.matmul %19, %0, %cst_18 {dimension_numbers = #tpu.dot_dimension_numbers<[1], [0], [0], [1], [0, 0, 1, 1], [], []>} : vector<32x16xbf16>, vector<16x4xbf16>, vector<32x4xf32> -> vector<32x4xf32>
    %21 = vector.broadcast %1 : vector<1x4xf32> to vector<32x4xf32>
    %22 = arith.addf %20, %21 : vector<32x4xf32>
    %cst_19 = arith.constant 0.000000e+00 : f32
    %23 = vector.broadcast %cst_19 : f32 to vector<32x4xf32>
    %24 = arith.maximumf %22, %23 : vector<32x4xf32>
    %25 = vector.shape_cast %24 : vector<32x4xf32> to vector<2x16x4xf32>
    %c0_i32 = arith.constant 0 : i32
    %26 = arith.cmpi sgt, %arg1, %c0_i32 : i32
    %27 = arith.extui %26 : i1 to i32
    %28 = arith.sitofp %27 : i32 to f32
    %c0_i32_20 = arith.constant 0 : i32
    %29 = arith.cmpi slt, %arg1, %c0_i32_20 : i32
    %30 = arith.extui %29 : i1 to i32
    %31 = arith.sitofp %30 : i32 to f32
    %32 = vector.extract_strided_slice %25 {offsets = [0, 0, 0], sizes = [1, 16, 4], strides = [1, 1, 1]} : vector<2x16x4xf32> to vector<1x16x4xf32>
    %33 = vector.broadcast %28 : f32 to vector<1x16x4xf32>
    %34 = arith.mulf %32, %33 : vector<1x16x4xf32>
    %35 = arith.truncf %34 : vector<1x16x4xf32> to vector<1x16x4xbf16>
    %c0_21 = arith.constant 0 : index
    %c1_22 = arith.constant 1 : index
    %c0_23 = arith.constant 0 : index
    %36 = vector.load %arg11[%c0_21, %c1_22, %c0_23] : memref<18x24x4xbf16, #tpu.memory_space<vmem>>, vector<1x16x4xbf16>
    tpu.vector_store %arg11[%c0_21, %c1_22, %c0_23], %35 {strides = array<i32>} : memref<18x24x4xbf16, #tpu.memory_space<vmem>>, vector<1x16x4xbf16>,
    %37 = vector.extract_strided_slice %25 {offsets = [1, 0, 0], sizes = [1, 16, 4], strides = [1, 1, 1]} : vector<2x16x4xf32> to vector<1x16x4xf32>
    %38 = vector.broadcast %31 : f32 to vector<1x16x4xf32>
    %39 = arith.mulf %37, %38 : vector<1x16x4xf32>
    %40 = arith.truncf %39 : vector<1x16x4xf32> to vector<1x16x4xbf16>
    %c17 = arith.constant 17 : index
    %c1_24 = arith.constant 1 : index
    %c0_25 = arith.constant 0 : index
    %41 = vector.load %arg11[%c17, %c1_24, %c0_25] : memref<18x24x4xbf16, #tpu.memory_space<vmem>>, vector<1x16x4xbf16>
    tpu.vector_store %arg11[%c17, %c1_24, %c0_25], %40 {strides = array<i32>} : memref<18x24x4xbf16, #tpu.memory_space<vmem>>, vector<1x16x4xbf16>,
    %cst_26 = arith.constant 0.000000e+00 : f32
    %42 = vector.broadcast %cst_26 : f32 to vector<384x4xf32>
    %cst_27 = arith.constant 0.000000e+00 : f32
    %43 = vector.broadcast %cst_27 : f32 to vector<384x4xf32>
    %cst_28 = arith.constant 0.000000e+00 : f32
    %44 = vector.broadcast %cst_28 : f32 to vector<384x4xf32>
    %c0_29 = arith.constant 0 : index
    %c0_30 = arith.constant 0 : index
    %c0_31 = arith.constant 0 : index
    %45 = vector.load %arg11[%c0_29, %c0_30, %c0_31] : memref<18x24x4xbf16, #tpu.memory_space<vmem>>, vector<16x24x4xbf16>
    %46 = vector.shape_cast %45 : vector<16x24x4xbf16> to vector<384x4xbf16>
    %c0_32 = arith.constant 0 : index
    %c0_33 = arith.constant 0 : index
    %c0_34 = arith.constant 0 : index
    %47 = vector.load %arg6[%c0_32, %c0_33, %c0_34] : memref<9x4x4xbf16, #tpu.memory_space<vmem>>, vector<1x4x4xbf16>
    %48 = vector.shape_cast %47 : vector<1x4x4xbf16> to vector<4x4xbf16>
    %cst_35 = arith.constant dense<0.000000e+00> : vector<384x4xf32>
    %49 = tpu.matmul %46, %48, %cst_35 {dimension_numbers = #tpu.dot_dimension_numbers<[1], [0], [0], [1], [0, 0, 1, 1], [], []>} : vector<384x4xbf16>, vector<4x4xbf16>, vector<384x4xf32> -> vector<384x4xf32>
    %50 = arith.addf %42, %49 : vector<384x4xf32>
    %c1_36 = arith.constant 1 : index
    %c0_37 = arith.constant 0 : index
    %c0_38 = arith.constant 0 : index
    %51 = vector.load %arg6[%c1_36, %c0_37, %c0_38] : memref<9x4x4xbf16, #tpu.memory_space<vmem>>, vector<1x4x4xbf16>
    %52 = vector.shape_cast %51 : vector<1x4x4xbf16> to vector<4x4xbf16>
    %cst_39 = arith.constant dense<0.000000e+00> : vector<384x4xf32>
    %53 = tpu.matmul %46, %52, %cst_39 {dimension_numbers = #tpu.dot_dimension_numbers<[1], [0], [0], [1], [0, 0, 1, 1], [], []>} : vector<384x4xbf16>, vector<4x4xbf16>, vector<384x4xf32> -> vector<384x4xf32>
    %54 = arith.addf %43, %53 : vector<384x4xf32>
    %c2 = arith.constant 2 : index
    %c0_40 = arith.constant 0 : index
    %c0_41 = arith.constant 0 : index
    %55 = vector.load %arg6[%c2, %c0_40, %c0_41] : memref<9x4x4xbf16, #tpu.memory_space<vmem>>, vector<1x4x4xbf16>
    %56 = vector.shape_cast %55 : vector<1x4x4xbf16> to vector<4x4xbf16>
    %cst_42 = arith.constant dense<0.000000e+00> : vector<384x4xf32>
    %57 = tpu.matmul %46, %56, %cst_42 {dimension_numbers = #tpu.dot_dimension_numbers<[1], [0], [0], [1], [0, 0, 1, 1], [], []>} : vector<384x4xbf16>, vector<4x4xbf16>, vector<384x4xf32> -> vector<384x4xf32>
    %58 = arith.addf %44, %57 : vector<384x4xf32>
    %c1_43 = arith.constant 1 : index
    %c0_44 = arith.constant 0 : index
    %c0_45 = arith.constant 0 : index
    %59 = vector.load %arg11[%c1_43, %c0_44, %c0_45] : memref<18x24x4xbf16, #tpu.memory_space<vmem>>, vector<16x24x4xbf16>
    %60 = vector.shape_cast %59 : vector<16x24x4xbf16> to vector<384x4xbf16>
    %c3 = arith.constant 3 : index
    %c0_46 = arith.constant 0 : index
    %c0_47 = arith.constant 0 : index
    %61 = vector.load %arg6[%c3, %c0_46, %c0_47] : memref<9x4x4xbf16, #tpu.memory_space<vmem>>, vector<1x4x4xbf16>
    %62 = vector.shape_cast %61 : vector<1x4x4xbf16> to vector<4x4xbf16>
    %cst_48 = arith.constant dense<0.000000e+00> : vector<384x4xf32>
    %63 = tpu.matmul %60, %62, %cst_48 {dimension_numbers = #tpu.dot_dimension_numbers<[1], [0], [0], [1], [0, 0, 1, 1], [], []>} : vector<384x4xbf16>, vector<4x4xbf16>, vector<384x4xf32> -> vector<384x4xf32>
    %64 = arith.addf %50, %63 : vector<384x4xf32>
    %c4 = arith.constant 4 : index
    %c0_49 = arith.constant 0 : index
    %c0_50 = arith.constant 0 : index
    %65 = vector.load %arg6[%c4, %c0_49, %c0_50] : memref<9x4x4xbf16, #tpu.memory_space<vmem>>, vector<1x4x4xbf16>
    %66 = vector.shape_cast %65 : vector<1x4x4xbf16> to vector<4x4xbf16>
    %cst_51 = arith.constant dense<0.000000e+00> : vector<384x4xf32>
    %67 = tpu.matmul %60, %66, %cst_51 {dimension_numbers = #tpu.dot_dimension_numbers<[1], [0], [0], [1], [0, 0, 1, 1], [], []>} : vector<384x4xbf16>, vector<4x4xbf16>, vector<384x4xf32> -> vector<384x4xf32>
    %68 = arith.addf %54, %67 : vector<384x4xf32>
    %c5 = arith.constant 5 : index
    %c0_52 = arith.constant 0 : index
    %c0_53 = arith.constant 0 : index
    %69 = vector.load %arg6[%c5, %c0_52, %c0_53] : memref<9x4x4xbf16, #tpu.memory_space<vmem>>, vector<1x4x4xbf16>
    %70 = vector.shape_cast %69 : vector<1x4x4xbf16> to vector<4x4xbf16>
    %cst_54 = arith.constant dense<0.000000e+00> : vector<384x4xf32>
    %71 = tpu.matmul %60, %70, %cst_54 {dimension_numbers = #tpu.dot_dimension_numbers<[1], [0], [0], [1], [0, 0, 1, 1], [], []>} : vector<384x4xbf16>, vector<4x4xbf16>, vector<384x4xf32> -> vector<384x4xf32>
    %72 = arith.addf %58, %71 : vector<384x4xf32>
    %c2_55 = arith.constant 2 : index
    %c0_56 = arith.constant 0 : index
    %c0_57 = arith.constant 0 : index
    %73 = vector.load %arg11[%c2_55, %c0_56, %c0_57] : memref<18x24x4xbf16, #tpu.memory_space<vmem>>, vector<16x24x4xbf16>
    %74 = vector.shape_cast %73 : vector<16x24x4xbf16> to vector<384x4xbf16>
    %c6 = arith.constant 6 : index
    %c0_58 = arith.constant 0 : index
    %c0_59 = arith.constant 0 : index
    %75 = vector.load %arg6[%c6, %c0_58, %c0_59] : memref<9x4x4xbf16, #tpu.memory_space<vmem>>, vector<1x4x4xbf16>
    %76 = vector.shape_cast %75 : vector<1x4x4xbf16> to vector<4x4xbf16>
    %cst_60 = arith.constant dense<0.000000e+00> : vector<384x4xf32>
    %77 = tpu.matmul %74, %76, %cst_60 {dimension_numbers = #tpu.dot_dimension_numbers<[1], [0], [0], [1], [0, 0, 1, 1], [], []>} : vector<384x4xbf16>, vector<4x4xbf16>, vector<384x4xf32> -> vector<384x4xf32>
    %78 = arith.addf %64, %77 : vector<384x4xf32>
    %c7 = arith.constant 7 : index
    %c0_61 = arith.constant 0 : index
    %c0_62 = arith.constant 0 : index
    %79 = vector.load %arg6[%c7, %c0_61, %c0_62] : memref<9x4x4xbf16, #tpu.memory_space<vmem>>, vector<1x4x4xbf16>
    %80 = vector.shape_cast %79 : vector<1x4x4xbf16> to vector<4x4xbf16>
    %cst_63 = arith.constant dense<0.000000e+00> : vector<384x4xf32>
    %81 = tpu.matmul %74, %80, %cst_63 {dimension_numbers = #tpu.dot_dimension_numbers<[1], [0], [0], [1], [0, 0, 1, 1], [], []>} : vector<384x4xbf16>, vector<4x4xbf16>, vector<384x4xf32> -> vector<384x4xf32>
    %82 = arith.addf %68, %81 : vector<384x4xf32>
    %c8 = arith.constant 8 : index
    %c0_64 = arith.constant 0 : index
    %c0_65 = arith.constant 0 : index
    %83 = vector.load %arg6[%c8, %c0_64, %c0_65] : memref<9x4x4xbf16, #tpu.memory_space<vmem>>, vector<1x4x4xbf16>
    %84 = vector.shape_cast %83 : vector<1x4x4xbf16> to vector<4x4xbf16>
    %cst_66 = arith.constant dense<0.000000e+00> : vector<384x4xf32>
    %85 = tpu.matmul %74, %84, %cst_66 {dimension_numbers = #tpu.dot_dimension_numbers<[1], [0], [0], [1], [0, 0, 1, 1], [], []>} : vector<384x4xbf16>, vector<4x4xbf16>, vector<384x4xf32> -> vector<384x4xf32>
    %86 = arith.addf %72, %85 : vector<384x4xf32>
    %87 = vector.shape_cast %78 : vector<384x4xf32> to vector<16x24x4xf32>
    %88 = vector.shape_cast %82 : vector<384x4xf32> to vector<16x24x4xf32>
    %89 = vector.shape_cast %86 : vector<384x4xf32> to vector<16x24x4xf32>
    %90 = vector.extract_strided_slice %87 {offsets = [0, 0, 0], sizes = [16, 16, 4], strides = [1, 1, 1]} : vector<16x24x4xf32> to vector<16x16x4xf32>
    %91 = vector.extract_strided_slice %88 {offsets = [0, 1, 0], sizes = [16, 16, 4], strides = [1, 1, 1]} : vector<16x24x4xf32> to vector<16x16x4xf32>
    %92 = arith.addf %90, %91 : vector<16x16x4xf32>
    %93 = vector.extract_strided_slice %89 {offsets = [0, 2, 0], sizes = [16, 16, 4], strides = [1, 1, 1]} : vector<16x24x4xf32> to vector<16x16x4xf32>
    %94 = arith.addf %92, %93 : vector<16x16x4xf32>
    %95 = vector.shape_cast %94 : vector<16x16x4xf32> to vector<256x4xf32>
    %c0_67 = arith.constant 0 : index
    %c0_68 = arith.constant 0 : index
    %96 = vector.load %arg7[%c0_67, %c0_68] : memref<1x4xf32, #tpu.memory_space<vmem>>, vector<1x4xf32>
    %97 = vector.broadcast %96 : vector<1x4xf32> to vector<256x4xf32>
    %98 = arith.addf %95, %97 : vector<256x4xf32>
    %cst_69 = arith.constant 0.000000e+00 : f32
    %99 = vector.broadcast %cst_69 : f32 to vector<256x4xf32>
    %100 = arith.maximumf %98, %99 : vector<256x4xf32>
    %101 = arith.truncf %100 : vector<256x4xf32> to vector<256x4xbf16>
    %c0_70 = arith.constant 0 : index
    %c0_71 = arith.constant 0 : index
    %102 = vector.load %arg8[%c0_70, %c0_71] : memref<4x16xbf16, #tpu.memory_space<vmem>>, vector<4x16xbf16>
    %cst_72 = arith.constant dense<0.000000e+00> : vector<256x16xf32>
    %103 = tpu.matmul %101, %102, %cst_72 {dimension_numbers = #tpu.dot_dimension_numbers<[1], [0], [0], [1], [0, 0, 1, 1], [], []>} : vector<256x4xbf16>, vector<4x16xbf16>, vector<256x16xf32> -> vector<256x16xf32>
    %c0_73 = arith.constant 0 : index
    %c0_74 = arith.constant 0 : index
    %104 = vector.load %arg9[%c0_73, %c0_74] : memref<1x16xf32, #tpu.memory_space<vmem>>, vector<1x16xf32>
    %105 = vector.broadcast %104 : vector<1x16xf32> to vector<256x16xf32>
    %106 = arith.addf %103, %105 : vector<256x16xf32>
    %107 = arith.addf %106, %6 : vector<256x16xf32>
    %cst_75 = arith.constant 0.000000e+00 : f32
    %108 = vector.broadcast %cst_75 : f32 to vector<256x16xf32>
    %109 = arith.maximumf %107, %108 : vector<256x16xf32>
    %c0_76 = arith.constant 0 : index
    %c0_77 = arith.constant 0 : index
    %c0_78 = arith.constant 0 : index
    %110 = vector.load %arg10[%c0_76, %c0_77, %c0_78] : memref<1x256x16xf32, #tpu.memory_space<vmem>>, vector<1x256x16xf32>
    %111 = vector.shape_cast %110 : vector<1x256x16xf32> to vector<256x16xf32>
    %112 = vector.shape_cast %109 : vector<256x16xf32> to vector<1x256x16xf32>
    tpu.vector_store %arg10[%c0_76, %c0_77, %c0_78], %112 {strides = array<i32>} : memref<1x256x16xf32, #tpu.memory_space<vmem>>, vector<1x256x16xf32>,
    return
  }
  func.func @transform_0(%arg0: i32, %arg1: i32) -> (i32, i32, i32, i32) {
    %c0_i32 = arith.constant 0 : i32
    %c0_i32_0 = arith.constant 0 : i32
    %c0_i32_1 = arith.constant 0 : i32
    return %arg0, %arg1, %c0_i32, %c0_i32_0 : i32, i32, i32, i32
  }
  func.func @transform_1(%arg0: i32, %arg1: i32) -> (i32, i32, i32, i32) {
    %c1_i32 = arith.constant 1 : i32
    %0 = arith.muli %arg0, %c1_i32 : i32
    %1 = arith.addi %0, %arg1 : i32
    %c0_i32 = arith.constant 0 : i32
    %c0_i32_0 = arith.constant 0 : i32
    %c0_i32_1 = arith.constant 0 : i32
    %c0_i32_2 = arith.constant 0 : i32
    return %1, %c0_i32, %c0_i32_0, %c0_i32_1 : i32, i32, i32, i32
  }
  func.func @transform_2(%arg0: i32, %arg1: i32) -> (i32, i32) {
    %c0_i32 = arith.constant 0 : i32
    %c0_i32_0 = arith.constant 0 : i32
    %c0_i32_1 = arith.constant 0 : i32
    return %c0_i32, %c0_i32_0 : i32, i32
  }
  func.func @transform_3(%arg0: i32, %arg1: i32) -> (i32, i32) {
    %c0_i32 = arith.constant 0 : i32
    %c0_i32_0 = arith.constant 0 : i32
    %c0_i32_1 = arith.constant 0 : i32
    return %c0_i32, %c0_i32_0 : i32, i32
  }
  func.func @transform_4(%arg0: i32, %arg1: i32) -> (i32, i32, i32) {
    %c0_i32 = arith.constant 0 : i32
    %c0_i32_0 = arith.constant 0 : i32
    %c0_i32_1 = arith.constant 0 : i32
    %c0_i32_2 = arith.constant 0 : i32
    return %c0_i32, %c0_i32_0, %c0_i32_1 : i32, i32, i32
  }
  func.func @transform_5(%arg0: i32, %arg1: i32) -> (i32, i32) {
    %c0_i32 = arith.constant 0 : i32
    %c0_i32_0 = arith.constant 0 : i32
    %c0_i32_1 = arith.constant 0 : i32
    return %c0_i32, %c0_i32_0 : i32, i32
  }
  func.func @transform_6(%arg0: i32, %arg1: i32) -> (i32, i32) {
    %c0_i32 = arith.constant 0 : i32
    %c0_i32_0 = arith.constant 0 : i32
    %c0_i32_1 = arith.constant 0 : i32
    return %c0_i32, %c0_i32_0 : i32, i32
  }
  func.func @transform_7(%arg0: i32, %arg1: i32) -> (i32, i32) {
    %c0_i32 = arith.constant 0 : i32
    %c0_i32_0 = arith.constant 0 : i32
    %c0_i32_1 = arith.constant 0 : i32
    return %c0_i32, %c0_i32_0 : i32, i32
  }
  func.func @transform_8(%arg0: i32, %arg1: i32) -> (i32, i32, i32) {
    %c0_i32 = arith.constant 0 : i32
    %c0_i32_0 = arith.constant 0 : i32
    return %arg0, %arg1, %c0_i32 : i32, i32, i32
  }
}

</mosaic_0001>

<llo_original>
// kernel: bottleneck_forward.1
$region0: #{bottleneck_forward.1}
  #allocation0 [shape = 'u32[]', space=smem, size = 0x4, offset = 0x4, fixed_abs, tag = 'smem constant byte address 0x4 - core index']
  #allocation1 [shape = 'u32[144,128]{1,0:T(1,128)}', space=vmem, size = 0x12000, scoped, tag = 'internal scratch']
  #allocation2 [shape = 'bf16[18,24,4]{2,1,0:T(8,128)(2,1)}', space=vmem, size = 0x1b000, scoped, tag = 'scratch operand']
  %s0 = inlined_call_operand.vmem [shape: f32[2,16,16,16], index: 0, kind: input, shape index: {}]
  %s1 = inlined_call_operand.vmem [shape: f32[2,2,16,16], index: 1, kind: input, shape index: {}]
  %s2 = inlined_call_operand.vmem [shape: bf16[16,4], index: 2, kind: input, shape index: {}]
  %s3 = inlined_call_operand.vmem [shape: f32[1,4], index: 3, kind: input, shape index: {}]
  %s4 = inlined_call_operand.vmem [shape: bf16[9,4,4], index: 4, kind: input, shape index: {}]
  %s5 = inlined_call_operand.vmem [shape: f32[1,4], index: 5, kind: input, shape index: {}]
  %s6 = inlined_call_operand.vmem [shape: bf16[4,16], index: 6, kind: input, shape index: {}]
  %s7 = inlined_call_operand.vmem [shape: f32[1,16], index: 7, kind: input, shape index: {}]
  %s8 = inlined_call_operand.vmem [shape: f32[2,256,16], index: 8, kind: output, shape index: {}]
  %s9 = sld [smem:[#allocation0]]
  $region65: #{bottleneck_forward.1} parent=0
    _
  %s11 = ssub.s32 1, %s9
  %s12 = scalar_select 0, %s11, %s9
  loop: start=0, step=1, limit=4
  $region2: #{bottleneck_forward.1} parent=0 // loop_pre_header
    _
  $region3: #{bottleneck_forward.1} parent=0 // loop_header
    %s14 = sphi 0, %s18
    %p15 = scmp.ge.s32.totalorder %s14, 4
    %s21 = sphi 0, %s33
    %s22 = sphi 0, %s29
    %s23 = sphi 0, %s21
    %s24 = sphi 0, %s22
    %s25 = sphi 0, %s23
    %s26 = sphi 0, %s24
    %s38 = sphi 0, %s40
    %s41 = sphi 0, %s38
    %s42 = sphi 0, %s41
    %s58 = sphi 0, %s42
    %s66 = sphi 0, %s68
    %s69 = sphi 0, %s66
    %s70 = sphi 0, %s69
    %s86 = sphi 0, %s70
    %s90 = sphi 0, %s90
    %s92 = sphi 0, %s90
    %s93 = sphi 0, %s92
    %s107 = sphi 0, %s93
    %s111 = sphi 0, %s111
    %s113 = sphi 0, %s111
    %s114 = sphi 0, %s113
    %s128 = sphi 0, %s114
    %s132 = sphi 0, %s132
    %s134 = sphi 0, %s132
    %s135 = sphi 0, %s134
    %s149 = sphi 0, %s135
    %s153 = sphi 0, %s153
    %s155 = sphi 0, %s153
    %s156 = sphi 0, %s155
    %s170 = sphi 0, %s156
    %s174 = sphi 0, %s174
    %s176 = sphi 0, %s174
    %s177 = sphi 0, %s176
    %s191 = sphi 0, %s177
    %s195 = sphi 0, %s195
    %s197 = sphi 0, %s195
    %s198 = sphi 0, %s197
    %s212 = sphi 0, %s198
    %s220 = sphi 0, %s222
    %s223 = sphi 0, %s220
    %s224 = sphi 0, %s223
    %s240 = sphi 0, %s224
  $region4: #{bottleneck_forward.1} parent=0 // loop_header_branch
    %17 = sbr.rel (%p15) target = $region8
  $region5: #{bottleneck_forward.1} parent=0 // loop_body
    %s19 = ssub.s32 %s14, 1
    %s20 = ssub.s32 %s14, 2
    %s27 = sadd.s32 1, %s22
    %p28 = scmp.ge.s32.totalorder %s27, 1
    %s29 = scalar_select %p28, 0, %s27
    %s30 = sadd.s32 1, %s21
    %s31 = scalar_select %p28, %s30, %s21
    %p32 = scmp.ge.s32.totalorder %s31, 2
    %s33 = scalar_select %p32, 0, %s31
    %s34 = ssub.s32 %s21, %s33
    %s35 = ssub.s32 %s22, %s29
    %s36 = sor.u32 %s34, %s35
    %p37 = scmp.eq.s32.totalorder %s36, 0
    %s39 = sadd.s32 %s38, 1
    %s40 = scalar_select %p37, %s38, %s39
    %p43 = pneg %p37
    %p44 = scmp.eq.s32.totalorder %s14, 1
    %p45 = por %p43, %p44
    %p46 = scmp.ne.s32.totalorder %s38, %s41
    %p47 = scmp.eq.s32.totalorder %s14, 0
    %p48 = por %p46, %p47
    %p49 = scmp.ne.s32.totalorder %s38, %s41
    %p50 = scmp.eq.s32.totalorder %s19, 1
    %p51 = por %p49, %p50
    %p52 = scmp.ne.s32.totalorder %s41, %s42
    %p53 = scmp.eq.s32.totalorder %s19, 0
    %p54 = por %p52, %p53
    %p55 = scmp.ne.s32.totalorder %s41, %s42
    %p56 = scmp.eq.s32.totalorder %s20, 1
    %p57 = por %p55, %p56
    %p59 = scmp.ne.s32.totalorder %s42, %s58
    %p60 = scmp.eq.s32.totalorder %s20, 0
    %p61 = por %p59, %p60
    %s62 = sadd.s32 %s21, %s22
    %s63 = sadd.s32 %s33, %s29
    %s64 = ssub.s32 %s62, %s63
    %p65 = scmp.eq.s32.totalorder %s64, 0
    %s67 = sadd.s32 %s66, 1
    %s68 = scalar_select %p65, %s66, %s67
    %p71 = pneg %p65
    %p72 = scmp.eq.s32.totalorder %s14, 1
    %p73 = por %p71, %p72
    %p74 = scmp.ne.s32.totalorder %s66, %s69
    %p75 = scmp.eq.s32.totalorder %s14, 0
    %p76 = por %p74, %p75
    %p77 = scmp.ne.s32.totalorder %s66, %s69
    %p78 = scmp.eq.s32.totalorder %s19, 1
    %p79 = por %p77, %p78
    %p80 = scmp.ne.s32.totalorder %s69, %s70
    %p81 = scmp.eq.s32.totalorder %s19, 0
    %p82 = por %p80, %p81
    %p83 = scmp.ne.s32.totalorder %s69, %s70
    %p84 = scmp.eq.s32.totalorder %s20, 1
    %p85 = por %p83, %p84
    %p87 = scmp.ne.s32.totalorder %s70, %s86
    %p88 = scmp.eq.s32.totalorder %s20, 0
    %p89 = por %p87, %p88
    %s91 = sadd.s32 %s90, 1
    %p94 = scmp.eq.s32.totalorder %s14, 1
    %p95 = scmp.ne.s32.totalorder %s90, %s92
    %p96 = scmp.eq.s32.totalorder %s14, 0
    %p97 = por %p95, %p96
    %p98 = scmp.ne.s32.totalorder %s90, %s92
    %p99 = scmp.eq.s32.totalorder %s19, 1
    %p100 = por %p98, %p99
    %p101 = scmp.ne.s32.totalorder %s92, %s93
    %p102 = scmp.eq.s32.totalorder %s19, 0
    %p103 = por %p101, %p102
    %p104 = scmp.ne.s32.totalorder %s92, %s93
    %p105 = scmp.eq.s32.totalorder %s20, 1
    %p106 = por %p104, %p105
    %p108 = scmp.ne.s32.totalorder %s93, %s107
    %p109 = scmp.eq.s32.totalorder %s20, 0
    %p110 = por %p108, %p109
    %s112 = sadd.s32 %s111, 1
    %p115 = scmp.eq.s32.totalorder %s14, 1
    %p116 = scmp.ne.s32.totalorder %s111, %s113
    %p117 = scmp.eq.s32.totalorder %s14, 0
    %p118 = por %p116, %p117
    %p119 = scmp.ne.s32.totalorder %s111, %s113
    %p120 = scmp.eq.s32.totalorder %s19, 1
    %p121 = por %p119, %p120
    %p122 = scmp.ne.s32.totalorder %s113, %s114
    %p123 = scmp.eq.s32.totalorder %s19, 0
    %p124 = por %p122, %p123
    %p125 = scmp.ne.s32.totalorder %s113, %s114
    %p126 = scmp.eq.s32.totalorder %s20, 1
    %p127 = por %p125, %p126
    %p129 = scmp.ne.s32.totalorder %s114, %s128
    %p130 = scmp.eq.s32.totalorder %s20, 0
    %p131 = por %p129, %p130
    %s133 = sadd.s32 %s132, 1
    %p136 = scmp.eq.s32.totalorder %s14, 1
    %p137 = scmp.ne.s32.totalorder %s132, %s134
    %p138 = scmp.eq.s32.totalorder %s14, 0
    %p139 = por %p137, %p138
    %p140 = scmp.ne.s32.totalorder %s132, %s134
    %p141 = scmp.eq.s32.totalorder %s19, 1
    %p142 = por %p140, %p141
    %p143 = scmp.ne.s32.totalorder %s134, %s135
    %p144 = scmp.eq.s32.totalorder %s19, 0
    %p145 = por %p143, %p144
    %p146 = scmp.ne.s32.totalorder %s134, %s135
    %p147 = scmp.eq.s32.totalorder %s20, 1
    %p148 = por %p146, %p147
    %p150 = scmp.ne.s32.totalorder %s135, %s149
    %p151 = scmp.eq.s32.totalorder %s20, 0
    %p152 = por %p150, %p151
    %s154 = sadd.s32 %s153, 1
    %p157 = scmp.eq.s32.totalorder %s14, 1
    %p158 = scmp.ne.s32.totalorder %s153, %s155
    %p159 = scmp.eq.s32.totalorder %s14, 0
    %p160 = por %p158, %p159
    %p161 = scmp.ne.s32.totalorder %s153, %s155
    %p162 = scmp.eq.s32.totalorder %s19, 1
    %p163 = por %p161, %p162
    %p164 = scmp.ne.s32.totalorder %s155, %s156
    %p165 = scmp.eq.s32.totalorder %s19, 0
    %p166 = por %p164, %p165
    %p167 = scmp.ne.s32.totalorder %s155, %s156
    %p168 = scmp.eq.s32.totalorder %s20, 1
    %p169 = por %p167, %p168
    %p171 = scmp.ne.s32.totalorder %s156, %s170
    %p172 = scmp.eq.s32.totalorder %s20, 0
    %p173 = por %p171, %p172
    %s175 = sadd.s32 %s174, 1
    %p178 = scmp.eq.s32.totalorder %s14, 1
    %p179 = scmp.ne.s32.totalorder %s174, %s176
    %p180 = scmp.eq.s32.totalorder %s14, 0
    %p181 = por %p179, %p180
    %p182 = scmp.ne.s32.totalorder %s174, %s176
    %p183 = scmp.eq.s32.totalorder %s19, 1
    %p184 = por %p182, %p183
    %p185 = scmp.ne.s32.totalorder %s176, %s177
    %p186 = scmp.eq.s32.totalorder %s19, 0
    %p187 = por %p185, %p186
    %p188 = scmp.ne.s32.totalorder %s176, %s177
    %p189 = scmp.eq.s32.totalorder %s20, 1
    %p190 = por %p188, %p189
    %p192 = scmp.ne.s32.totalorder %s177, %s191
    %p193 = scmp.eq.s32.totalorder %s20, 0
    %p194 = por %p192, %p193
    %s196 = sadd.s32 %s195, 1
    %p199 = scmp.eq.s32.totalorder %s14, 1
    %p200 = scmp.ne.s32.totalorder %s195, %s197
    %p201 = scmp.eq.s32.totalorder %s14, 0
    %p202 = por %p200, %p201
    %p203 = scmp.ne.s32.totalorder %s195, %s197
    %p204 = scmp.eq.s32.totalorder %s19, 1
    %p205 = por %p203, %p204
    %p206 = scmp.ne.s32.totalorder %s197, %s198
    %p207 = scmp.eq.s32.totalorder %s19, 0
    %p208 = por %p206, %p207
    %p209 = scmp.ne.s32.totalorder %s197, %s198
    %p210 = scmp.eq.s32.totalorder %s20, 1
    %p211 = por %p209, %p210
    %p213 = scmp.ne.s32.totalorder %s198, %s212
    %p214 = scmp.eq.s32.totalorder %s20, 0
    %p215 = por %p213, %p214
    %s216 = ssub.s32 %s21, %s33
    %s217 = ssub.s32 %s22, %s29
    %s218 = sor.u32 %s216, %s217
    %p219 = scmp.eq.s32.totalorder %s218, 0
    %s221 = sadd.s32 %s220, 1
    %s222 = scalar_select %p219, %s220, %s221
    %p225 = pneg %p219
    %p226 = scmp.eq.s32.totalorder %s14, 1
    %p227 = por %p225, %p226
    %p228 = scmp.ne.s32.totalorder %s220, %s223
    %p229 = scmp.eq.s32.totalorder %s14, 0
    %p230 = por %p228, %p229
    %p231 = scmp.ne.s32.totalorder %s220, %s223
    %p232 = scmp.eq.s32.totalorder %s19, 1
    %p233 = por %p231, %p232
    %p234 = scmp.ne.s32.totalorder %s223, %s224
    %p235 = scmp.eq.s32.totalorder %s19, 0
    %p236 = por %p234, %p235
    %p237 = scmp.ne.s32.totalorder %s223, %s224
    %p238 = scmp.eq.s32.totalorder %s20, 1
    %p239 = por %p237, %p238
    %p241 = scmp.ne.s32.totalorder %s224, %s240
    %p242 = scmp.eq.s32.totalorder %s20, 0
    %p243 = por %p241, %p242
    %p244 = scmp.le.s32.totalorder 1, %s14
    %p245 = scmp.lt.s32.totalorder %s14, 3
    %p246 = pnand %p244, %p245
    %p247 = pneg %p246
    // Predicated region
    $region9: #{bottleneck_forward.1} parent=5 // pred_check
      _
    $region10: #{bottleneck_forward.1} parent=5 // pred_check_branch
      %249 = sbr.rel (%p246) target = $region12
    $region11: #{bottleneck_forward.1} parent=5 // pred_region
      %s250 = ssub.s32 %s14, 1
      // Predicated region
      $region13: #{bottleneck_forward.1} parent=11 // pred_check
        %p251 = pneg %p103
      $region14: #{bottleneck_forward.1} parent=11 // pred_check_branch
        %253 = sbr.rel (%p251) target = $region16
      $region15: #{bottleneck_forward.1} parent=11 // pred_region
        _
      $region16: #{bottleneck_forward.1} parent=11 // pred_fallthru
        _
      // Predicated region
      $region17: #{bottleneck_forward.1} parent=11 // pred_check
        %p254 = pneg %p124
      $region18: #{bottleneck_forward.1} parent=11 // pred_check_branch
        %256 = sbr.rel (%p254) target = $region20
      $region19: #{bottleneck_forward.1} parent=11 // pred_region
        _
      $region20: #{bottleneck_forward.1} parent=11 // pred_fallthru
        _
      // Predicated region
      $region21: #{bottleneck_forward.1} parent=11 // pred_check
        %p257 = pneg %p145
      $region22: #{bottleneck_forward.1} parent=11 // pred_check_branch
        %259 = sbr.rel (%p257) target = $region24
      $region23: #{bottleneck_forward.1} parent=11 // pred_region
        _
      $region24: #{bottleneck_forward.1} parent=11 // pred_fallthru
        _
      // Predicated region
      $region25: #{bottleneck_forward.1} parent=11 // pred_check
        %p260 = pneg %p166
      $region26: #{bottleneck_forward.1} parent=11 // pred_check_branch
        %262 = sbr.rel (%p260) target = $region28
      $region27: #{bottleneck_forward.1} parent=11 // pred_region
        _
      $region28: #{bottleneck_forward.1} parent=11 // pred_fallthru
        _
      // Predicated region
      $region29: #{bottleneck_forward.1} parent=11 // pred_check
        %p263 = pneg %p187
      $region30: #{bottleneck_forward.1} parent=11 // pred_check_branch
        %265 = sbr.rel (%p263) target = $region32
      $region31: #{bottleneck_forward.1} parent=11 // pred_region
        _
      $region32: #{bottleneck_forward.1} parent=11 // pred_fallthru
        _
      // Predicated region
      $region33: #{bottleneck_forward.1} parent=11 // pred_check
        %p266 = pneg %p208
      $region34: #{bottleneck_forward.1} parent=11 // pred_check_branch
        %268 = sbr.rel (%p266) target = $region36
      $region35: #{bottleneck_forward.1} parent=11 // pred_region
        _
      $region36: #{bottleneck_forward.1} parent=11 // pred_fallthru
        _
    $region12: #{bottleneck_forward.1} parent=5 // pred_fallthru
      _
    %p269 = scmp.lt.s32.totalorder %s14, 2
    // Predicated region
    $region37: #{bottleneck_forward.1} parent=5 // pred_check
      %p270 = pneg %p269
    $region38: #{bottleneck_forward.1} parent=5 // pred_check_branch
      %272 = sbr.rel (%p270) target = $region40
    $region39: #{bottleneck_forward.1} parent=5 // pred_region
      // Predicated region
      $region41: #{bottleneck_forward.1} parent=39 // pred_check
        %p273 = pneg %p48
      $region42: #{bottleneck_forward.1} parent=39 // pred_check_branch
        %275 = sbr.rel (%p273) target = $region44
      $region43: #{bottleneck_forward.1} parent=39 // pred_region
        %s276 = smul.u32 16, %s22
        %p277 = scmp.lt.s32.totalorder %s21, 1
        %s278 = scalar_select %p277, %s21, 1
        %p279 = scmp.lt.s32.totalorder %s276, 15
        %s280 = scalar_select %p279, %s276, 15
        %s281 = smul.addr %s280, 2
        %s282 = smul.addr %s278, 32
        %s283 = sadd.s32 %s281, %s282
        %s284 = smul.addr %s283, 8
        %s285 = scalar_lea.vmem %s0, %s284
        %s286 = smul.u32 16, %s22
      $region44: #{bottleneck_forward.1} parent=39 // pred_fallthru
        _
      // Predicated region
      $region45: #{bottleneck_forward.1} parent=39 // pred_check
        %p287 = pneg %p76
      $region46: #{bottleneck_forward.1} parent=39 // pred_check_branch
        %289 = sbr.rel (%p287) target = $region48
      $region47: #{bottleneck_forward.1} parent=39 // pred_region
        %s290 = sadd.s32 %s21, %s22
        %p291 = scmp.lt.s32.totalorder %s290, 1
        %s292 = scalar_select %p291, %s290, 1
        %s293 = smul.addr %s292, 4
        %s294 = smul.addr %s293, 8
        %s295 = scalar_lea.vmem %s1, %s294
        %s296 = sadd.s32 %s21, %s22
      $region48: #{bottleneck_forward.1} parent=39 // pred_fallthru
        _
    $region40: #{bottleneck_forward.1} parent=5 // pred_fallthru
      _
    %p297 = scmp.le.s32.totalorder 1, %s14
    %p298 = scmp.lt.s32.totalorder %s14, 3
    %p299 = pnand %p297, %p298
    %p300 = pneg %p299
    // Predicated region
    $region49: #{bottleneck_forward.1} parent=5 // pred_check
      _
    $region50: #{bottleneck_forward.1} parent=5 // pred_check_branch
      %302 = sbr.rel (%p299) target = $region52
    $region51: #{bottleneck_forward.1} parent=5 // pred_region
      %s303 = ssub.s32 %s14, 1
      %s304 = smul.u32 16, %s24
      %p305 = scmp.lt.s32.totalorder %s23, 1
      %s306 = scalar_select %p305, %s23, 1
      %p307 = scmp.lt.s32.totalorder %s304, 15
      %s308 = scalar_select %p307, %s304, 15
      %s309 = smul.addr %s308, 2
      %s310 = smul.addr %s306, 32
      %s311 = sadd.s32 %s309, %s310
      %s312 = smul.addr %s311, 8
      %s313 = scalar_lea.vmem %s0, %s312
      %p314 = pneg %p54
      %p315 = pneg %p51
      %s316 = sadd.s32 %s23, %s24
      %p317 = scmp.lt.s32.totalorder %s316, 1
      %s318 = scalar_select %p317, %s316, 1
      %s319 = smul.addr %s318, 4
      %s320 = smul.addr %s319, 8
      %s321 = scalar_lea.vmem %s1, %s320
      %p322 = pneg %p82
      %p323 = pneg %p79
      %p324 = pneg %p103
      %p325 = pneg %p100
      %p326 = pneg %p124
      %p327 = pneg %p121
      %p328 = pneg %p145
      %p329 = pneg %p142
      %p330 = pneg %p166
      %p331 = pneg %p163
      %p332 = pneg %p187
      %p333 = pneg %p184
      %p334 = pneg %p208
      %p335 = pneg %p205
      %p336 = pneg %p236
      %p337 = pneg %p233
      %s338 = smul.u32 32, %s24
      %p339 = scmp.lt.s32.totalorder %s23, 1
      %s340 = scalar_select %p339, %s23, 1
      %p341 = scmp.lt.s32.totalorder %s338, 31
      %s342 = scalar_select %p341, %s338, 31
      %s343 = smul.addr %s340, 32
      %s344 = sadd.s32 %s342, %s343
      %s345 = smul.addr %s344, 8
      %s346 = scalar_lea.vmem %s8, %s345
      %s347 = smul.u32 16, %s24
      %p348 = scmp.lt.s32.totalorder %s23, 1
      %s349 = scalar_select %p348, %s23, 1
      %p350 = scmp.lt.s32.totalorder %s347, 15
      %s351 = scalar_select %p350, %s347, 15
      %s352 = smul.addr %s351, 2
      %s353 = smul.addr %s349, 32
      %s354 = sadd.s32 %s352, %s353
      %s355 = smul.addr %s354, 8
      %s356 = scalar_lea.vmem %s0, %s355
      %s357 = smul.u32 16, %s24
      %s358 = sadd.s32 %s23, %s24
      %p359 = scmp.lt.s32.totalorder %s358, 1
      %s360 = scalar_select %p359, %s358, 1
      %s361 = smul.addr %s360, 4
      %s362 = smul.addr %s361, 8
      %s363 = scalar_lea.vmem %s1, %s362
      %s364 = sadd.s32 %s23, %s24
      %s365 = smul.u32 32, %s24
      %p366 = scmp.lt.s32.totalorder %s23, 1
      %s367 = scalar_select %p366, %s23, 1
      %p368 = scmp.lt.s32.totalorder %s365, 31
      %s369 = scalar_select %p368, %s365, 31
      %s370 = smul.addr %s367, 32
      %s371 = sadd.s32 %s369, %s370
      %s372 = smul.addr %s371, 8
      %s373 = scalar_lea.vmem %s8, %s372
      %s374 = smul.u32 32, %s24
      %v376 = vld [vmem:[%s2] sm:$0xf]
      %v377 = vld [vmem:[%s2 + $0x4] sm:$0xf]
      %v378 = vld [vmem:[%s3] sm:$0x1]
      %vm379 = vcmask 27648
      %380 = vst.msk [vmem:[#allocation2] sm:$0xf] %vm379, 0
      %381 = vst.msk [vmem:[#allocation2 + $0x4] sm:$0xf] %vm379, 0
      %382 = vst.msk [vmem:[#allocation2 + $0x8] sm:$0xf] %vm379, 0
      %383 = vst.msk [vmem:[#allocation2 + $0xc] sm:$0xf] %vm379, 0
      %384 = vst.msk [vmem:[#allocation2 + $0x10] sm:$0xf] %vm379, 0
      %385 = vst.msk [vmem:[#allocation2 + $0x14] sm:$0xf] %vm379, 0
      %386 = vst.msk [vmem:[#allocation2 + $0x18] sm:$0xf] %vm379, 0
      %387 = vst.msk [vmem:[#allocation2 + $0x1c] sm:$0xf] %vm379, 0
      %388 = vst.msk [vmem:[#allocation2 + $0x20] sm:$0xf] %vm379, 0
      %389 = vst.msk [vmem:[#allocation2 + $0x24] sm:$0xf] %vm379, 0
      %390 = vst.msk [vmem:[#allocation2 + $0x28] sm:$0xf] %vm379, 0
      %391 = vst.msk [vmem:[#allocation2 + $0x2c] sm:$0xf] %vm379, 0
      %392 = vst.msk [vmem:[#allocation2 + $0x30] sm:$0xf] %vm379, 0
      %393 = vst.msk [vmem:[#allocation2 + $0x34] sm:$0xf] %vm379, 0
      %394 = vst.msk [vmem:[#allocation2 + $0x38] sm:$0xf] %vm379, 0
      %395 = vst.msk [vmem:[#allocation2 + $0x3c] sm:$0xf] %vm379, 0
      %396 = vst.msk [vmem:[#allocation2 + $0x40] sm:$0xf] %vm379, 0
      %397 = vst.msk [vmem:[#allocation2 + $0x44] sm:$0xf] %vm379, 0
      %398 = vst.msk [vmem:[#allocation2 + $0x48] sm:$0xf] %vm379, 0
      %399 = vst.msk [vmem:[#allocation2 + $0x4c] sm:$0xf] %vm379, 0
      %400 = vst.msk [vmem:[#allocation2 + $0x50] sm:$0xf] %vm379, 0
      %401 = vst.msk [vmem:[#allocation2 + $0x54] sm:$0xf] %vm379, 0
      %402 = vst.msk [vmem:[#allocation2 + $0x58] sm:$0xf] %vm379, 0
      %403 = vst.msk [vmem:[#allocation2 + $0x5c] sm:$0xf] %vm379, 0
      %404 = vst.msk [vmem:[#allocation2 + $0x60] sm:$0xf] %vm379, 0
      %405 = vst.msk [vmem:[#allocation2 + $0x64] sm:$0xf] %vm379, 0
      %406 = vst.msk [vmem:[#allocation2 + $0x68] sm:$0xf] %vm379, 0
      %407 = vst.msk [vmem:[#allocation2 + $0x6c] sm:$0xf] %vm379, 0
      %408 = vst.msk [vmem:[#allocation2 + $0x70] sm:$0xf] %vm379, 0
      %409 = vst.msk [vmem:[#allocation2 + $0x74] sm:$0xf] %vm379, 0
      %410 = vst.msk [vmem:[#allocation2 + $0x78] sm:$0xf] %vm379, 0
      %411 = vst.msk [vmem:[#allocation2 + $0x7c] sm:$0xf] %vm379, 0
      %412 = vst.msk [vmem:[#allocation2 + $0x80] sm:$0xf] %vm379, 0
      %413 = vst.msk [vmem:[#allocation2 + $0x84] sm:$0xf] %vm379, 0
      %414 = vst.msk [vmem:[#allocation2 + $0x88] sm:$0xf] %vm379, 0
      %415 = vst.msk [vmem:[#allocation2 + $0x8c] sm:$0xf] %vm379, 0
      %416 = vst.msk [vmem:[#allocation2 + $0x90] sm:$0xf] %vm379, 0
      %417 = vst.msk [vmem:[#allocation2 + $0x94] sm:$0xf] %vm379, 0
      %418 = vst.msk [vmem:[#allocation2 + $0x98] sm:$0xf] %vm379, 0
      %419 = vst.msk [vmem:[#allocation2 + $0x9c] sm:$0xf] %vm379, 0
      %420 = vst.msk [vmem:[#allocation2 + $0xa0] sm:$0xf] %vm379, 0
      %421 = vst.msk [vmem:[#allocation2 + $0xa4] sm:$0xf] %vm379, 0
      %422 = vst.msk [vmem:[#allocation2 + $0xa8] sm:$0xf] %vm379, 0
      %423 = vst.msk [vmem:[#allocation2 + $0xac] sm:$0xf] %vm379, 0
      %424 = vst.msk [vmem:[#allocation2 + $0xb0] sm:$0xf] %vm379, 0
      %425 = vst.msk [vmem:[#allocation2 + $0xb4] sm:$0xf] %vm379, 0
      %426 = vst.msk [vmem:[#allocation2 + $0xb8] sm:$0xf] %vm379, 0
      %427 = vst.msk [vmem:[#allocation2 + $0xbc] sm:$0xf] %vm379, 0
      %428 = vst.msk [vmem:[#allocation2 + $0xc0] sm:$0xf] %vm379, 0
      %429 = vst.msk [vmem:[#allocation2 + $0xc4] sm:$0xf] %vm379, 0
      %430 = vst.msk [vmem:[#allocation2 + $0xc8] sm:$0xf] %vm379, 0
      %431 = vst.msk [vmem:[#allocation2 + $0xcc] sm:$0xf] %vm379, 0
      %432 = vst.msk [vmem:[#allocation2 + $0xd0] sm:$0xf] %vm379, 0
      %433 = vst.msk [vmem:[#allocation2 + $0xd4] sm:$0xf] %vm379, 0
      %v434 = vld [vmem:[%s356] sm:$0xff]
      %v435 = vld [vmem:[%s356 + $0x8] sm:$0xff]
      %v436 = vld [vmem:[%s356 + $0x10] sm:$0xff]
      %v437 = vld [vmem:[%s356 + $0x18] sm:$0xff]
      %v438 = vld [vmem:[%s356 + $0x20] sm:$0xff]
      %v439 = vld [vmem:[%s356 + $0x28] sm:$0xff]
      %v440 = vld [vmem:[%s356 + $0x30] sm:$0xff]
      %v441 = vld [vmem:[%s356 + $0x38] sm:$0xff]
      %v442 = vld [vmem:[%s356 + $0x40] sm:$0xff]
      %v443 = vld [vmem:[%s356 + $0x48] sm:$0xff]
      %v444 = vld [vmem:[%s356 + $0x50] sm:$0xff]
      %v445 = vld [vmem:[%s356 + $0x58] sm:$0xff]
      %v446 = vld [vmem:[%s356 + $0x60] sm:$0xff]
      %v447 = vld [vmem:[%s356 + $0x68] sm:$0xff]
      %v448 = vld [vmem:[%s356 + $0x70] sm:$0xff]
      %v449 = vld [vmem:[%s356 + $0x78] sm:$0xff]
      %v450 = vld [vmem:[%s356 + $0x80] sm:$0xff]
      %v451 = vld [vmem:[%s356 + $0x88] sm:$0xff]
      %v452 = vld [vmem:[%s356 + $0x90] sm:$0xff]
      %v453 = vld [vmem:[%s356 + $0x98] sm:$0xff]
      %v454 = vld [vmem:[%s356 + $0xa0] sm:$0xff]
      %v455 = vld [vmem:[%s356 + $0xa8] sm:$0xff]
      %v456 = vld [vmem:[%s356 + $0xb0] sm:$0xff]
      %v457 = vld [vmem:[%s356 + $0xb8] sm:$0xff]
      %v458 = vld [vmem:[%s356 + $0xc0] sm:$0xff]
      %v459 = vld [vmem:[%s356 + $0xc8] sm:$0xff]
      %v460 = vld [vmem:[%s356 + $0xd0] sm:$0xff]
      %v461 = vld [vmem:[%s356 + $0xd8] sm:$0xff]
      %v462 = vld [vmem:[%s356 + $0xe0] sm:$0xff]
      %v463 = vld [vmem:[%s356 + $0xe8] sm:$0xff]
      %v464 = vld [vmem:[%s356 + $0xf0] sm:$0xff]
      %v465 = vld [vmem:[%s356 + $0xf8] sm:$0xff]
      %v466 = vpack.c.bf16 %v435, %v434
      %v467 = vpack.c.bf16 %v437, %v436
      %v468 = vpack.c.bf16 %v439, %v438
      %v469 = vpack.c.bf16 %v441, %v440
      %v470 = vpack.c.bf16 %v443, %v442
      %v471 = vpack.c.bf16 %v445, %v444
      %v472 = vpack.c.bf16 %v447, %v446
      %v473 = vpack.c.bf16 %v449, %v448
      %v474 = vpack.c.bf16 %v451, %v450
      %v475 = vpack.c.bf16 %v453, %v452
      %v476 = vpack.c.bf16 %v455, %v454
      %v477 = vpack.c.bf16 %v457, %v456
      %v478 = vpack.c.bf16 %v459, %v458
      %v479 = vpack.c.bf16 %v461, %v460
      %v480 = vpack.c.bf16 %v463, %v462
      %v481 = vpack.c.bf16 %v465, %v464
      %v483 = vlaneseq
      %v484 = vshrl.u32 %v483, 7
      %v485 = vsub.s32 0, %v484
      %v486 = vrot.slane %v378, %v485
      %v490 = vunpack.c.l.b16 %v376
      %v491 = vunpack.c.l.b16 %v377
      %v492 = vpack.c.b16 %v491, %v490
      %vm494 = vcmask 130048
      %v496 = vsel %vm494, %v466, 0
      %v499 = vsel %vm494, %v467, 0
      %v502 = vsel %vm494, %v468, 0
      %v505 = vsel %vm494, %v469, 0
      %v508 = vsel %vm494, %v470, 0
      %v511 = vsel %vm494, %v471, 0
      %v514 = vsel %vm494, %v472, 0
      %v517 = vsel %vm494, %v473, 0
      %v520 = vsel %vm494, %v474, 0
      %v523 = vsel %vm494, %v475, 0
      %v526 = vsel %vm494, %v476, 0
      %v529 = vsel %vm494, %v477, 0
      %v532 = vsel %vm494, %v478, 0
      %v535 = vsel %vm494, %v479, 0
      %v538 = vsel %vm494, %v480, 0
      %v541 = vsel %vm494, %v481, 0
      %543 = vmatprep.subr.bf16.mxu0 0
      %544 = vmatpush1.bf16.msra.mxu0 0
      %545 = vmatprep.subr.bf16.mxu0 0
      %546 = vmatpush1.bf16.msra.mxu0 0
      %547 = vmatprep.subr.bf16.mxu0 0
      %548 = vmatpush1.bf16.msra.mxu0 0
      %549 = vmatprep.subr.bf16.mxu0 0
      %550 = vmatpush1.bf16.msra.mxu0 0
      %551 = vmatprep.subr.bf16.mxu0 0
      %552 = vmatpush1.bf16.msra.mxu0 0
      %553 = vmatprep.subr.bf16.mxu0 0
      %554 = vmatpush1.bf16.msra.mxu0 0
      %555 = vmatprep.subr.bf16.mxu0 0
      %556 = vmatpush1.bf16.msra.mxu0 0
      %557 = vmatprep.subr.bf16.mxu0 0
      %558 = vmatpush1.bf16.msra.mxu0 %v492
      %559 = vmatprep.subr.bf16.mxu0 0
      %560 = vmatpush2.bf16.msra.mxu0 0
      %561 = vmatprep.subr.bf16.mxu0 0
      %562 = vmatpush2.bf16.msra.mxu0 0
      %563 = vmatprep.subr.bf16.mxu0 0
      %564 = vmatpush2.bf16.msra.mxu0 0
      %565 = vmatprep.subr.bf16.mxu0 0
      %566 = vmatpush2.bf16.msra.mxu0 0
      %567 = vmatprep.subr.bf16.mxu0 0
      %568 = vmatpush2.bf16.msra.mxu0 0
      %569 = vmatprep.subr.bf16.mxu0 0
      %570 = vmatpush2.bf16.msra.mxu0 0
      %571 = vmatprep.subr.bf16.mxu0 0
      %572 = vmatpush2.bf16.msra.mxu0 0
      %573 = vmatprep.subr.bf16.mxu0 0
      %574 = vmatpush2.bf16.msra.mxu0 0
      %575 = vmatprep.mubr.bf16.mxu0 0
      %576 = vmatmul.mubr.bf16.gmra.mxu0 %v496
      %v577 = vpop.f32.mrf.mxu0
      %v578 = vadd.f32 %v486, %v577
      %v579 = vpop.f32.mrf.mxu0
      %v580 = vpop.f32.mrf.mxu0
      %v581 = vadd.f32 %v486, %v580
      %v582 = vpop.f32.mrf.mxu0
      %583 = vmatprep.mubr.bf16.mxu0 0
      %584 = vmatmul.mubr.bf16.gmra.mxu0 %v499
      %v585 = vpop.f32.mrf.mxu0
      %v586 = vadd.f32 %v486, %v585
      %v587 = vpop.f32.mrf.mxu0
      %v588 = vpop.f32.mrf.mxu0
      %v589 = vadd.f32 %v486, %v588
      %v590 = vpop.f32.mrf.mxu0
      %591 = vmatprep.mubr.bf16.mxu0 0
      %592 = vmatmul.mubr.bf16.gmra.mxu0 %v502
      %v593 = vpop.f32.mrf.mxu0
      %v594 = vadd.f32 %v486, %v593
      %v595 = vpop.f32.mrf.mxu0
      %v596 = vpop.f32.mrf.mxu0
      %v597 = vadd.f32 %v486, %v596
      %v598 = vpop.f32.mrf.mxu0
      %599 = vmatprep.mubr.bf16.mxu0 0
      %600 = vmatmul.mubr.bf16.gmra.mxu0 %v505
      %v601 = vpop.f32.mrf.mxu0
      %v602 = vadd.f32 %v486, %v601
      %v603 = vpop.f32.mrf.mxu0
      %v604 = vpop.f32.mrf.mxu0
      %v605 = vadd.f32 %v486, %v604
      %v606 = vpop.f32.mrf.mxu0
      %607 = vmatprep.mubr.bf16.mxu0 0
      %608 = vmatmul.mubr.bf16.gmra.mxu0 %v508
      %v609 = vpop.f32.mrf.mxu0
      %v610 = vadd.f32 %v486, %v609
      %v611 = vpop.f32.mrf.mxu0
      %v612 = vpop.f32.mrf.mxu0
      %v613 = vadd.f32 %v486, %v612
      %v614 = vpop.f32.mrf.mxu0
      %615 = vmatprep.mubr.bf16.mxu0 0
      %616 = vmatmul.mubr.bf16.gmra.mxu0 %v511
      %v617 = vpop.f32.mrf.mxu0
      %v618 = vadd.f32 %v486, %v617
      %v619 = vpop.f32.mrf.mxu0
      %v620 = vpop.f32.mrf.mxu0
      %v621 = vadd.f32 %v486, %v620
      %v622 = vpop.f32.mrf.mxu0
      %623 = vmatprep.mubr.bf16.mxu0 0
      %624 = vmatmul.mubr.bf16.gmra.mxu0 %v514
      %v625 = vpop.f32.mrf.mxu0
      %v626 = vadd.f32 %v486, %v625
      %v627 = vpop.f32.mrf.mxu0
      %v628 = vpop.f32.mrf.mxu0
      %v629 = vadd.f32 %v486, %v628
      %v630 = vpop.f32.mrf.mxu0
      %631 = vmatprep.mubr.bf16.mxu0 0
      %632 = vmatmul.mubr.bf16.gmra.mxu0 %v517
      %v633 = vpop.f32.mrf.mxu0
      %v634 = vadd.f32 %v486, %v633
      %v635 = vpop.f32.mrf.mxu0
      %v636 = vpop.f32.mrf.mxu0
      %v637 = vadd.f32 %v486, %v636
      %v638 = vpop.f32.mrf.mxu0
      %639 = vmatprep.mubr.bf16.mxu0 0
      %640 = vmatmul.mubr.bf16.gmra.mxu0 %v520
      %v641 = vpop.f32.mrf.mxu0
      %v642 = vadd.f32 %v486, %v641
      %v643 = vpop.f32.mrf.mxu0
      %v644 = vpop.f32.mrf.mxu0
      %v645 = vadd.f32 %v486, %v644
      %v646 = vpop.f32.mrf.mxu0
      %647 = vmatprep.mubr.bf16.mxu0 0
      %648 = vmatmul.mubr.bf16.gmra.mxu0 %v523
      %v649 = vpop.f32.mrf.mxu0
      %v650 = vadd.f32 %v486, %v649
      %v651 = vpop.f32.mrf.mxu0
      %v652 = vpop.f32.mrf.mxu0
      %v653 = vadd.f32 %v486, %v652
      %v654 = vpop.f32.mrf.mxu0
      %655 = vmatprep.mubr.bf16.mxu0 0
      %656 = vmatmul.mubr.bf16.gmra.mxu0 %v526
      %v657 = vpop.f32.mrf.mxu0
      %v658 = vadd.f32 %v486, %v657
      %v659 = vpop.f32.mrf.mxu0
      %v660 = vpop.f32.mrf.mxu0
      %v661 = vadd.f32 %v486, %v660
      %v662 = vpop.f32.mrf.mxu0
      %663 = vmatprep.mubr.bf16.mxu0 0
      %664 = vmatmul.mubr.bf16.gmra.mxu0 %v529
      %v665 = vpop.f32.mrf.mxu0
      %v666 = vadd.f32 %v486, %v665
      %v667 = vpop.f32.mrf.mxu0
      %v668 = vpop.f32.mrf.mxu0
      %v669 = vadd.f32 %v486, %v668
      %v670 = vpop.f32.mrf.mxu0
      %671 = vmatprep.mubr.bf16.mxu0 0
      %672 = vmatmul.mubr.bf16.gmra.mxu0 %v532
      %v673 = vpop.f32.mrf.mxu0
      %v674 = vadd.f32 %v486, %v673
      %v675 = vpop.f32.mrf.mxu0
      %v676 = vpop.f32.mrf.mxu0
      %v677 = vadd.f32 %v486, %v676
      %v678 = vpop.f32.mrf.mxu0
      %679 = vmatprep.mubr.bf16.mxu0 0
      %680 = vmatmul.mubr.bf16.gmra.mxu0 %v535
      %v681 = vpop.f32.mrf.mxu0
      %v682 = vadd.f32 %v486, %v681
      %v683 = vpop.f32.mrf.mxu0
      %v684 = vpop.f32.mrf.mxu0
      %v685 = vadd.f32 %v486, %v684
      %v686 = vpop.f32.mrf.mxu0
      %687 = vmatprep.mubr.bf16.mxu0 0
      %688 = vmatmul.mubr.bf16.gmra.mxu0 %v538
      %v689 = vpop.f32.mrf.mxu0
      %v690 = vadd.f32 %v486, %v689
      %v691 = vpop.f32.mrf.mxu0
      %v692 = vpop.f32.mrf.mxu0
      %v693 = vadd.f32 %v486, %v692
      %v694 = vpop.f32.mrf.mxu0
      %695 = vmatprep.mubr.bf16.mxu0 0
      %696 = vmatmul.mubr.bf16.gmra.mxu0 %v541
      %v697 = vpop.f32.mrf.mxu0
      %v698 = vadd.f32 %v486, %v697
      %v699 = vpop.f32.mrf.mxu0
      %v700 = vpop.f32.mrf.mxu0
      %v701 = vadd.f32 %v486, %v700
      %v702 = vpop.f32.mrf.mxu0
      %703 = vdwg.mxu0
      %v704 = vmax.f32 %v578, 0.0
      %v705 = vmax.f32 %v581, 0.0
      %v706 = vmax.f32 %v586, 0.0
      %v707 = vmax.f32 %v589, 0.0
      %v708 = vmax.f32 %v594, 0.0
      %v709 = vmax.f32 %v597, 0.0
      %v710 = vmax.f32 %v602, 0.0
      %v711 = vmax.f32 %v605, 0.0
      %v712 = vmax.f32 %v610, 0.0
      %v713 = vmax.f32 %v613, 0.0
      %v714 = vmax.f32 %v618, 0.0
      %v715 = vmax.f32 %v621, 0.0
      %v716 = vmax.f32 %v626, 0.0
      %v717 = vmax.f32 %v629, 0.0
      %v718 = vmax.f32 %v634, 0.0
      %v719 = vmax.f32 %v637, 0.0
      %v720 = vmax.f32 %v642, 0.0
      %v721 = vmax.f32 %v645, 0.0
      %v722 = vmax.f32 %v650, 0.0
      %v723 = vmax.f32 %v653, 0.0
      %v724 = vmax.f32 %v658, 0.0
      %v725 = vmax.f32 %v661, 0.0
      %v726 = vmax.f32 %v666, 0.0
      %v727 = vmax.f32 %v669, 0.0
      %v728 = vmax.f32 %v674, 0.0
      %v729 = vmax.f32 %v677, 0.0
      %v730 = vmax.f32 %v682, 0.0
      %v731 = vmax.f32 %v685, 0.0
      %v732 = vmax.f32 %v690, 0.0
      %v733 = vmax.f32 %v693, 0.0
      %v734 = vmax.f32 %v698, 0.0
      %v735 = vmax.f32 %v701, 0.0
      %v736 = vpack.c.bf16 %v705, %v704
      %v737 = vpack.c.bf16 %v707, %v706
      %v738 = vpack.c.bf16 %v709, %v708
      %v739 = vpack.c.bf16 %v711, %v710
      %v740 = vpack.c.bf16 %v713, %v712
      %v741 = vpack.c.bf16 %v715, %v714
      %v742 = vpack.c.bf16 %v717, %v716
      %v743 = vpack.c.bf16 %v719, %v718
      %v744 = vpack.c.bf16 %v721, %v720
      %v745 = vpack.c.bf16 %v723, %v722
      %v746 = vpack.c.bf16 %v725, %v724
      %v747 = vpack.c.bf16 %v727, %v726
      %v748 = vpack.c.bf16 %v729, %v728
      %v749 = vpack.c.bf16 %v731, %v730
      %v750 = vpack.c.bf16 %v733, %v732
      %v751 = vpack.c.bf16 %v735, %v734
      %v768 = vunpack.c.l.b16 %v736
      %v769 = vunpack.c.h.b16 %v736
      %v770 = vunpack.c.l.b16 %v737
      %v771 = vunpack.c.h.b16 %v737
      %v772 = vunpack.c.l.b16 %v738
      %v773 = vunpack.c.h.b16 %v738
      %v774 = vunpack.c.l.b16 %v739
      %v775 = vunpack.c.h.b16 %v739
      %v776 = vunpack.c.l.b16 %v740
      %v777 = vunpack.c.h.b16 %v740
      %v778 = vunpack.c.l.b16 %v741
      %v779 = vunpack.c.h.b16 %v741
      %v780 = vunpack.c.l.b16 %v742
      %v781 = vunpack.c.h.b16 %v742
      %v782 = vunpack.c.l.b16 %v743
      %v783 = vunpack.c.h.b16 %v743
      %v784 = vunpack.c.l.b16 %v744
      %v785 = vunpack.c.h.b16 %v744
      %v786 = vunpack.c.l.b16 %v745
      %v787 = vunpack.c.h.b16 %v745
      %v788 = vunpack.c.l.b16 %v746
      %v789 = vunpack.c.h.b16 %v746
      %v790 = vunpack.c.l.b16 %v747
      %v791 = vunpack.c.h.b16 %v747
      %v792 = vunpack.c.l.b16 %v748
      %v793 = vunpack.c.h.b16 %v748
      %v794 = vunpack.c.l.b16 %v749
      %v795 = vunpack.c.h.b16 %v749
      %v796 = vunpack.c.l.b16 %v750
      %v797 = vunpack.c.h.b16 %v750
      %v798 = vunpack.c.l.b16 %v751
      %v799 = vunpack.c.h.b16 %v751
      %v800 = vpack.c.b16 %v768, %v768
      %v801 = vpack.c.b16 %v769, %v769
      %v802 = vpack.c.b16 %v770, %v770
      %v803 = vpack.c.b16 %v771, %v771
      %v804 = vpack.c.b16 %v772, %v772
      %v805 = vpack.c.b16 %v773, %v773
      %v806 = vpack.c.b16 %v774, %v774
      %v807 = vpack.c.b16 %v775, %v775
      %v808 = vpack.c.b16 %v776, %v776
      %v809 = vpack.c.b16 %v777, %v777
      %v810 = vpack.c.b16 %v778, %v778
      %v811 = vpack.c.b16 %v779, %v779
      %v812 = vpack.c.b16 %v780, %v780
      %v813 = vpack.c.b16 %v781, %v781
      %v814 = vpack.c.b16 %v782, %v782
      %v815 = vpack.c.b16 %v783, %v783
      %v816 = vpack.c.b16 %v784, %v784
      %v817 = vpack.c.b16 %v785, %v785
      %v818 = vpack.c.b16 %v786, %v786
      %v819 = vpack.c.b16 %v787, %v787
      %v820 = vpack.c.b16 %v788, %v788
      %v821 = vpack.c.b16 %v789, %v789
      %v822 = vpack.c.b16 %v790, %v790
      %v823 = vpack.c.b16 %v791, %v791
      %v824 = vpack.c.b16 %v792, %v792
      %v825 = vpack.c.b16 %v793, %v793
      %v826 = vpack.c.b16 %v794, %v794
      %v827 = vpack.c.b16 %v795, %v795
      %v828 = vpack.c.b16 %v796, %v796
      %v829 = vpack.c.b16 %v797, %v797
      %v830 = vpack.c.b16 %v798, %v798
      %v831 = vpack.c.b16 %v799, %v799
      %vm832 = vsmask.f32 256
      %vm833 = vsmask.f32 4368
      %vm834 = vmor %vm832, %vm833
      %v836 = vshrl.u32 %v800, 16
      %v838 = vrot.slane %v836, 7
      %v839 = vshll.u32 %v800, 16
      %v841 = vor.u32 %v838, %v839
      %v842 = vrot.slane %v838, 4
      %v844 = vshrl.u32 %v801, 16
      %v846 = vrot.slane %v844, 7
      %v847 = vshll.u32 %v801, 16
      %v849 = vor.u32 %v846, %v847
      %v850 = vsel %vm834, %v842, %v849
      %v851 = vrot.slane %v846, 4
      %v853 = vshrl.u32 %v802, 16
      %v855 = vrot.slane %v853, 7
      %v856 = vshll.u32 %v802, 16
      %v858 = vor.u32 %v855, %v856
      %v859 = vrot.slane %v855, 4
      %v861 = vshrl.u32 %v803, 16
      %v863 = vrot.slane %v861, 7
      %v864 = vshll.u32 %v803, 16
      %v866 = vor.u32 %v863, %v864
      %v867 = vsel %vm834, %v859, %v866
      %v868 = vrot.slane %v863, 4
      %v870 = vshrl.u32 %v804, 16
      %v872 = vrot.slane %v870, 7
      %v873 = vshll.u32 %v804, 16
      %v875 = vor.u32 %v872, %v873
      %v876 = vrot.slane %v872, 4
      %v878 = vshrl.u32 %v805, 16
      %v880 = vrot.slane %v878, 7
      %v881 = vshll.u32 %v805, 16
      %v883 = vor.u32 %v880, %v881
      %v884 = vsel %vm834, %v876, %v883
      %v885 = vrot.slane %v880, 4
      %v887 = vshrl.u32 %v806, 16
      %v889 = vrot.slane %v887, 7
      %v890 = vshll.u32 %v806, 16
      %v892 = vor.u32 %v889, %v890
      %v893 = vrot.slane %v889, 4
      %v895 = vshrl.u32 %v807, 16
      %v897 = vrot.slane %v895, 7
      %v898 = vshll.u32 %v807, 16
      %v900 = vor.u32 %v897, %v898
      %v901 = vsel %vm834, %v893, %v900
      %v902 = vrot.slane %v897, 4
      %v904 = vshrl.u32 %v808, 16
      %v906 = vrot.slane %v904, 7
      %v907 = vshll.u32 %v808, 16
      %v909 = vor.u32 %v906, %v907
      %v910 = vrot.slane %v906, 4
      %v912 = vshrl.u32 %v809, 16
      %v914 = vrot.slane %v912, 7
      %v915 = vshll.u32 %v809, 16
      %v917 = vor.u32 %v914, %v915
      %v918 = vsel %vm834, %v910, %v917
      %v919 = vrot.slane %v914, 4
      %v921 = vshrl.u32 %v810, 16
      %v923 = vrot.slane %v921, 7
      %v924 = vshll.u32 %v810, 16
      %v926 = vor.u32 %v923, %v924
      %v927 = vrot.slane %v923, 4
      %v929 = vshrl.u32 %v811, 16
      %v931 = vrot.slane %v929, 7
      %v932 = vshll.u32 %v811, 16
      %v934 = vor.u32 %v931, %v932
      %v935 = vsel %vm834, %v927, %v934
      %v936 = vrot.slane %v931, 4
      %v938 = vshrl.u32 %v812, 16
      %v940 = vrot.slane %v938, 7
      %v941 = vshll.u32 %v812, 16
      %v943 = vor.u32 %v940, %v941
      %v944 = vrot.slane %v940, 4
      %v946 = vshrl.u32 %v813, 16
      %v948 = vrot.slane %v946, 7
      %v949 = vshll.u32 %v813, 16
      %v951 = vor.u32 %v948, %v949
      %v952 = vsel %vm834, %v944, %v951
      %v953 = vrot.slane %v948, 4
      %v955 = vshrl.u32 %v814, 16
      %v957 = vrot.slane %v955, 7
      %v958 = vshll.u32 %v814, 16
      %v960 = vor.u32 %v957, %v958
      %v961 = vrot.slane %v957, 4
      %v963 = vshrl.u32 %v815, 16
      %v965 = vrot.slane %v963, 7
      %v966 = vshll.u32 %v815, 16
      %v968 = vor.u32 %v965, %v966
      %v969 = vsel %vm834, %v961, %v968
      %v970 = vrot.slane %v965, 4
      %v972 = vshrl.u32 %v816, 16
      %v974 = vrot.slane %v972, 7
      %v975 = vshll.u32 %v816, 16
      %v977 = vor.u32 %v974, %v975
      %v978 = vrot.slane %v974, 4
      %v980 = vshrl.u32 %v817, 16
      %v982 = vrot.slane %v980, 7
      %v983 = vshll.u32 %v817, 16
      %v985 = vor.u32 %v982, %v983
      %v986 = vsel %vm834, %v978, %v985
      %v987 = vrot.slane %v982, 4
      %v989 = vshrl.u32 %v818, 16
      %v991 = vrot.slane %v989, 7
      %v992 = vshll.u32 %v818, 16
      %v994 = vor.u32 %v991, %v992
      %v995 = vrot.slane %v991, 4
      %v997 = vshrl.u32 %v819, 16
      %v999 = vrot.slane %v997, 7
      %v1000 = vshll.u32 %v819, 16
      %v1002 = vor.u32 %v999, %v1000
      %v1003 = vsel %vm834, %v995, %v1002
      %v1004 = vrot.slane %v999, 4
      %v1006 = vshrl.u32 %v820, 16
      %v1008 = vrot.slane %v1006, 7
      %v1009 = vshll.u32 %v820, 16
      %v1011 = vor.u32 %v1008, %v1009
      %v1012 = vrot.slane %v1008, 4
      %v1014 = vshrl.u32 %v821, 16
      %v1016 = vrot.slane %v1014, 7
      %v1017 = vshll.u32 %v821, 16
      %v1019 = vor.u32 %v1016, %v1017
      %v1020 = vsel %vm834, %v1012, %v1019
      %v1021 = vrot.slane %v1016, 4
      %v1023 = vshrl.u32 %v822, 16
      %v1025 = vrot.slane %v1023, 7
      %v1026 = vshll.u32 %v822, 16
      %v1028 = vor.u32 %v1025, %v1026
      %v1029 = vrot.slane %v1025, 4
      %v1031 = vshrl.u32 %v823, 16
      %v1033 = vrot.slane %v1031, 7
      %v1034 = vshll.u32 %v823, 16
      %v1036 = vor.u32 %v1033, %v1034
      %v1037 = vsel %vm834, %v1029, %v1036
      %v1038 = vrot.slane %v1033, 4
      %v1040 = vshrl.u32 %v824, 16
      %v1042 = vrot.slane %v1040, 7
      %v1043 = vshll.u32 %v824, 16
      %v1045 = vor.u32 %v1042, %v1043
      %v1046 = vrot.slane %v1042, 4
      %v1048 = vshrl.u32 %v825, 16
      %v1050 = vrot.slane %v1048, 7
      %v1051 = vshll.u32 %v825, 16
      %v1053 = vor.u32 %v1050, %v1051
      %v1054 = vsel %vm834, %v1046, %v1053
      %v1055 = vrot.slane %v1050, 4
      %v1057 = vshrl.u32 %v826, 16
      %v1059 = vrot.slane %v1057, 7
      %v1060 = vshll.u32 %v826, 16
      %v1062 = vor.u32 %v1059, %v1060
      %v1063 = vrot.slane %v1059, 4
      %v1065 = vshrl.u32 %v827, 16
      %v1067 = vrot.slane %v1065, 7
      %v1068 = vshll.u32 %v827, 16
      %v1070 = vor.u32 %v1067, %v1068
      %v1071 = vsel %vm834, %v1063, %v1070
      %v1072 = vrot.slane %v1067, 4
      %v1074 = vshrl.u32 %v828, 16
      %v1076 = vrot.slane %v1074, 7
      %v1077 = vshll.u32 %v828, 16
      %v1079 = vor.u32 %v1076, %v1077
      %v1080 = vrot.slane %v1076, 4
      %v1082 = vshrl.u32 %v829, 16
      %v1084 = vrot.slane %v1082, 7
      %v1085 = vshll.u32 %v829, 16
      %v1087 = vor.u32 %v1084, %v1085
      %v1088 = vsel %vm834, %v1080, %v1087
      %v1089 = vrot.slane %v1084, 4
      %v1091 = vshrl.u32 %v830, 16
      %v1093 = vrot.slane %v1091, 7
      %v1094 = vshll.u32 %v830, 16
      %v1096 = vor.u32 %v1093, %v1094
      %v1097 = vrot.slane %v1093, 4
      %v1099 = vshrl.u32 %v831, 16
      %v1101 = vrot.slane %v1099, 7
      %v1102 = vshll.u32 %v831, 16
      %v1104 = vor.u32 %v1101, %v1102
      %v1105 = vsel %vm834, %v1097, %v1104
      %v1106 = vrot.slane %v1101, 4
      %s1155 = scalar_lea.vmem [#allocation2], 12
      %vm1156 = vcmask 27648
      %vm1157 = vsmask.f32 7938
      %vm1158 = vmand %vm1156, %vm1157
      %v1159 = vld [vmem:[%s1155] sm:$0xf]
      %v1160 = vsel %vm1158, %v841, %v1159
      %1161 = vst [vmem:[%s1155] sm:$0xf] %v1160
      %1162 = vst.msk [vmem:[%s1155 + $0x4] sm:$0xf] %vm379, %v850
      %vm1163 = vcmask 24576
      %vm1164 = vmand %vm1163, %vm832
      %v1165 = vld [vmem:[%s1155 + $0x8] sm:$0x1]
      %v1166 = vsel %vm1164, %v851, %v1165
      %1167 = vst [vmem:[%s1155 + $0x8] sm:$0x1] %v1166
      %v1168 = vld [vmem:[%s1155 + $0xc] sm:$0xf]
      %v1169 = vsel %vm1158, %v858, %v1168
      %1170 = vst [vmem:[%s1155 + $0xc] sm:$0xf] %v1169
      %1171 = vst.msk [vmem:[%s1155 + $0x10] sm:$0xf] %vm379, %v867
      %v1172 = vld [vmem:[%s1155 + $0x14] sm:$0x1]
      %v1173 = vsel %vm1164, %v868, %v1172
      %1174 = vst [vmem:[%s1155 + $0x14] sm:$0x1] %v1173
      %v1175 = vld [vmem:[%s1155 + $0x18] sm:$0xf]
      %v1176 = vsel %vm1158, %v875, %v1175
      %1177 = vst [vmem:[%s1155 + $0x18] sm:$0xf] %v1176
      %1178 = vst.msk [vmem:[%s1155 + $0x1c] sm:$0xf] %vm379, %v884
      %v1179 = vld [vmem:[%s1155 + $0x20] sm:$0x1]
      %v1180 = vsel %vm1164, %v885, %v1179
      %1181 = vst [vmem:[%s1155 + $0x20] sm:$0x1] %v1180
      %v1182 = vld [vmem:[%s1155 + $0x24] sm:$0xf]
      %v1183 = vsel %vm1158, %v892, %v1182
      %1184 = vst [vmem:[%s1155 + $0x24] sm:$0xf] %v1183
      %1185 = vst.msk [vmem:[%s1155 + $0x28] sm:$0xf] %vm379, %v901
      %v1186 = vld [vmem:[%s1155 + $0x2c] sm:$0x1]
      %v1187 = vsel %vm1164, %v902, %v1186
      %1188 = vst [vmem:[%s1155 + $0x2c] sm:$0x1] %v1187
      %v1189 = vld [vmem:[%s1155 + $0x30] sm:$0xf]
      %v1190 = vsel %vm1158, %v909, %v1189
      %1191 = vst [vmem:[%s1155 + $0x30] sm:$0xf] %v1190
      %1192 = vst.msk [vmem:[%s1155 + $0x34] sm:$0xf] %vm379, %v918
      %v1193 = vld [vmem:[%s1155 + $0x38] sm:$0x1]
      %v1194 = vsel %vm1164, %v919, %v1193
      %1195 = vst [vmem:[%s1155 + $0x38] sm:$0x1] %v1194
      %v1196 = vld [vmem:[%s1155 + $0x3c] sm:$0xf]
      %v1197 = vsel %vm1158, %v926, %v1196
      %1198 = vst [vmem:[%s1155 + $0x3c] sm:$0xf] %v1197
      %1199 = vst.msk [vmem:[%s1155 + $0x40] sm:$0xf] %vm379, %v935
      %v1200 = vld [vmem:[%s1155 + $0x44] sm:$0x1]
      %v1201 = vsel %vm1164, %v936, %v1200
      %1202 = vst [vmem:[%s1155 + $0x44] sm:$0x1] %v1201
      %v1203 = vld [vmem:[%s1155 + $0x48] sm:$0xf]
      %v1204 = vsel %vm1158, %v943, %v1203
      %1205 = vst [vmem:[%s1155 + $0x48] sm:$0xf] %v1204
      %1206 = vst.msk [vmem:[%s1155 + $0x4c] sm:$0xf] %vm379, %v952
      %v1207 = vld [vmem:[%s1155 + $0x50] sm:$0x1]
      %v1208 = vsel %vm1164, %v953, %v1207
      %1209 = vst [vmem:[%s1155 + $0x50] sm:$0x1] %v1208
      %v1210 = vld [vmem:[%s1155 + $0x54] sm:$0xf]
      %v1211 = vsel %vm1158, %v960, %v1210
      %1212 = vst [vmem:[%s1155 + $0x54] sm:$0xf] %v1211
      %1213 = vst.msk [vmem:[%s1155 + $0x58] sm:$0xf] %vm379, %v969
      %v1214 = vld [vmem:[%s1155 + $0x5c] sm:$0x1]
      %v1215 = vsel %vm1164, %v970, %v1214
      %1216 = vst [vmem:[%s1155 + $0x5c] sm:$0x1] %v1215
      %v1217 = vld [vmem:[%s1155 + $0x60] sm:$0xf]
      %v1218 = vsel %vm1158, %v977, %v1217
      %1219 = vst [vmem:[%s1155 + $0x60] sm:$0xf] %v1218
      %1220 = vst.msk [vmem:[%s1155 + $0x64] sm:$0xf] %vm379, %v986
      %v1221 = vld [vmem:[%s1155 + $0x68] sm:$0x1]
      %v1222 = vsel %vm1164, %v987, %v1221
      %1223 = vst [vmem:[%s1155 + $0x68] sm:$0x1] %v1222
      %v1224 = vld [vmem:[%s1155 + $0x6c] sm:$0xf]
      %v1225 = vsel %vm1158, %v994, %v1224
      %1226 = vst [vmem:[%s1155 + $0x6c] sm:$0xf] %v1225
      %1227 = vst.msk [vmem:[%s1155 + $0x70] sm:$0xf] %vm379, %v1003
      %v1228 = vld [vmem:[%s1155 + $0x74] sm:$0x1]
      %v1229 = vsel %vm1164, %v1004, %v1228
      %1230 = vst [vmem:[%s1155 + $0x74] sm:$0x1] %v1229
      %v1231 = vld [vmem:[%s1155 + $0x78] sm:$0xf]
      %v1232 = vsel %vm1158, %v1011, %v1231
      %1233 = vst [vmem:[%s1155 + $0x78] sm:$0xf] %v1232
      %1234 = vst.msk [vmem:[%s1155 + $0x7c] sm:$0xf] %vm379, %v1020
      %v1235 = vld [vmem:[%s1155 + $0x80] sm:$0x1]
      %v1236 = vsel %vm1164, %v1021, %v1235
      %1237 = vst [vmem:[%s1155 + $0x80] sm:$0x1] %v1236
      %v1238 = vld [vmem:[%s1155 + $0x84] sm:$0xf]
      %v1239 = vsel %vm1158, %v1028, %v1238
      %1240 = vst [vmem:[%s1155 + $0x84] sm:$0xf] %v1239
      %1241 = vst.msk [vmem:[%s1155 + $0x88] sm:$0xf] %vm379, %v1037
      %v1242 = vld [vmem:[%s1155 + $0x8c] sm:$0x1]
      %v1243 = vsel %vm1164, %v1038, %v1242
      %1244 = vst [vmem:[%s1155 + $0x8c] sm:$0x1] %v1243
      %v1245 = vld [vmem:[%s1155 + $0x90] sm:$0xf]
      %v1246 = vsel %vm1158, %v1045, %v1245
      %1247 = vst [vmem:[%s1155 + $0x90] sm:$0xf] %v1246
      %1248 = vst.msk [vmem:[%s1155 + $0x94] sm:$0xf] %vm379, %v1054
      %v1249 = vld [vmem:[%s1155 + $0x98] sm:$0x1]
      %v1250 = vsel %vm1164, %v1055, %v1249
      %1251 = vst [vmem:[%s1155 + $0x98] sm:$0x1] %v1250
      %v1252 = vld [vmem:[%s1155 + $0x9c] sm:$0xf]
      %v1253 = vsel %vm1158, %v1062, %v1252
      %1254 = vst [vmem:[%s1155 + $0x9c] sm:$0xf] %v1253
      %1255 = vst.msk [vmem:[%s1155 + $0xa0] sm:$0xf] %vm379, %v1071
      %v1256 = vld [vmem:[%s1155 + $0xa4] sm:$0x1]
      %v1257 = vsel %vm1164, %v1072, %v1256
      %1258 = vst [vmem:[%s1155 + $0xa4] sm:$0x1] %v1257
      %v1259 = vld [vmem:[%s1155 + $0xa8] sm:$0xf]
      %v1260 = vsel %vm1158, %v1079, %v1259
      %1261 = vst [vmem:[%s1155 + $0xa8] sm:$0xf] %v1260
      %1262 = vst.msk [vmem:[%s1155 + $0xac] sm:$0xf] %vm379, %v1088
      %v1263 = vld [vmem:[%s1155 + $0xb0] sm:$0x1]
      %v1264 = vsel %vm1164, %v1089, %v1263
      %1265 = vst [vmem:[%s1155 + $0xb0] sm:$0x1] %v1264
      %v1266 = vld [vmem:[%s1155 + $0xb4] sm:$0xf]
      %v1267 = vsel %vm1158, %v1096, %v1266
      %1268 = vst [vmem:[%s1155 + $0xb4] sm:$0xf] %v1267
      %1269 = vst.msk [vmem:[%s1155 + $0xb8] sm:$0xf] %vm379, %v1105
      %v1270 = vld [vmem:[%s1155 + $0xbc] sm:$0x1]
      %v1271 = vsel %vm1164, %v1106, %v1270
      %1272 = vst [vmem:[%s1155 + $0xbc] sm:$0x1] %v1271
      %v1273 = vld [vmem:[%s363] sm:$0xff]
      %v1274 = vld [vmem:[%s363 + $0x8] sm:$0xff]
      %v1275 = vld [vmem:[%s363 + $0x10] sm:$0xff]
      %v1276 = vld [vmem:[%s363 + $0x18] sm:$0xff]
      %v1277 = vpack.c.bf16 %v1274, %v1273
      %v1278 = vpack.c.bf16 %v1276, %v1275
      %v1280 = vsel %vm494, %v1277, 0
      %v1283 = vsel %vm494, %v1278, 0
      %1285 = vmatprep.subr.bf16.mxu0 0
      %1286 = vmatpush1.bf16.msra.mxu0 0
      %1287 = vmatprep.subr.bf16.mxu0 0
      %1288 = vmatpush1.bf16.msra.mxu0 0
      %1289 = vmatprep.subr.bf16.mxu0 0
      %1290 = vmatpush1.bf16.msra.mxu0 0
      %1291 = vmatprep.subr.bf16.mxu0 0
      %1292 = vmatpush1.bf16.msra.mxu0 0
      %1293 = vmatprep.subr.bf16.mxu0 0
      %1294 = vmatpush1.bf16.msra.mxu0 0
      %1295 = vmatprep.subr.bf16.mxu0 0
      %1296 = vmatpush1.bf16.msra.mxu0 0
      %1297 = vmatprep.subr.bf16.mxu0 0
      %1298 = vmatpush1.bf16.msra.mxu0 0
      %1299 = vmatprep.subr.bf16.mxu0 0
      %1300 = vmatpush1.bf16.msra.mxu0 %v492
      %1301 = vmatprep.subr.bf16.mxu0 0
      %1302 = vmatpush2.bf16.msra.mxu0 0
      %1303 = vmatprep.subr.bf16.mxu0 0
      %1304 = vmatpush2.bf16.msra.mxu0 0
      %1305 = vmatprep.subr.bf16.mxu0 0
      %1306 = vmatpush2.bf16.msra.mxu0 0
      %1307 = vmatprep.subr.bf16.mxu0 0
      %1308 = vmatpush2.bf16.msra.mxu0 0
      %1309 = vmatprep.subr.bf16.mxu0 0
      %1310 = vmatpush2.bf16.msra.mxu0 0
      %1311 = vmatprep.subr.bf16.mxu0 0
      %1312 = vmatpush2.bf16.msra.mxu0 0
      %1313 = vmatprep.subr.bf16.mxu0 0
      %1314 = vmatpush2.bf16.msra.mxu0 0
      %1315 = vmatprep.subr.bf16.mxu0 0
      %1316 = vmatpush2.bf16.msra.mxu0 0
      %1317 = vmatprep.mubr.bf16.mxu0 0
      %1318 = vmatmul.mubr.bf16.gmra.mxu0 %v1280
      %v1319 = vpop.f32.mrf.mxu0
      %v1320 = vadd.f32 %v486, %v1319
      %v1321 = vpop.f32.mrf.mxu0
      %v1322 = vpop.f32.mrf.mxu0
      %v1323 = vadd.f32 %v486, %v1322
      %v1324 = vpop.f32.mrf.mxu0
      %1325 = vmatprep.mubr.bf16.mxu0 0
      %1326 = vmatmul.mubr.bf16.gmra.mxu0 %v1283
      %v1327 = vpop.f32.mrf.mxu0
      %v1328 = vadd.f32 %v486, %v1327
      %v1329 = vpop.f32.mrf.mxu0
      %v1330 = vpop.f32.mrf.mxu0
      %v1331 = vadd.f32 %v486, %v1330
      %v1332 = vpop.f32.mrf.mxu0
      %1333 = vdwg.mxu0
      %v1334 = vmax.f32 %v1320, 0.0
      %v1335 = vmax.f32 %v1323, 0.0
      %v1336 = vmax.f32 %v1328, 0.0
      %v1337 = vmax.f32 %v1331, 0.0
      %p1338 = scmp.gt.s32.totalorder %s24, 0
      %s1339 = scalar_select %p1338, 1, 0
      %s1340 = scvt.s32.f32 %s1339
      %p1341 = scmp.lt.s32.totalorder %s24, 0
      %s1342 = scalar_select %p1341, 1, 0
      %s1343 = scvt.s32.f32 %s1342
      %v1344 = vstv %s1340
      %v1345 = vmul.f32 %v1334, %v1344
      %v1346 = vmul.f32 %v1335, %v1344
      %v1347 = vpack.c.bf16 %v1346, %v1345
      %v1349 = vunpack.c.l.b16 %v1347
      %v1350 = vunpack.c.h.b16 %v1347
      %v1351 = vpack.c.b16 %v1349, %v1349
      %v1352 = vpack.c.b16 %v1350, %v1350
      %v1354 = vshrl.u32 %v1351, 16
      %v1356 = vrot.slane %v1354, 7
      %v1357 = vshll.u32 %v1351, 16
      %v1359 = vor.u32 %v1356, %v1357
      %v1360 = vrot.slane %v1356, 4
      %v1362 = vshrl.u32 %v1352, 16
      %v1364 = vrot.slane %v1362, 7
      %v1365 = vshll.u32 %v1352, 16
      %v1367 = vor.u32 %v1364, %v1365
      %v1368 = vsel %vm834, %v1360, %v1367
      %v1369 = vrot.slane %v1364, 4
      %v1373 = vld [vmem:[#allocation2] sm:$0xf]
      %v1374 = vsel %vm1158, %v1359, %v1373
      %1375 = vst [vmem:[#allocation2] sm:$0xf] %v1374
      %1376 = vst.msk [vmem:[#allocation2 + $0x4] sm:$0xf] %vm379, %v1368
      %v1377 = vld [vmem:[#allocation2 + $0x8] sm:$0x1]
      %v1378 = vsel %vm1164, %v1369, %v1377
      %1379 = vst [vmem:[#allocation2 + $0x8] sm:$0x1] %v1378
      %v1380 = vstv %s1343
      %v1381 = vmul.f32 %v1336, %v1380
      %v1382 = vmul.f32 %v1337, %v1380
      %v1383 = vpack.c.bf16 %v1382, %v1381
      %v1385 = vunpack.c.l.b16 %v1383
      %v1386 = vunpack.c.h.b16 %v1383
      %v1387 = vpack.c.b16 %v1385, %v1385
      %v1388 = vpack.c.b16 %v1386, %v1386
      %v1390 = vshrl.u32 %v1387, 16
      %v1392 = vrot.slane %v1390, 7
      %v1393 = vshll.u32 %v1387, 16
      %v1395 = vor.u32 %v1392, %v1393
      %v1396 = vrot.slane %v1392, 4
      %v1398 = vshrl.u32 %v1388, 16
      %v1400 = vrot.slane %v1398, 7
      %v1401 = vshll.u32 %v1388, 16
      %v1403 = vor.u32 %v1400, %v1401
      %v1404 = vsel %vm834, %v1396, %v1403
      %v1405 = vrot.slane %v1400, 4
      %s1409 = scalar_lea.vmem [#allocation2], 204
      %v1410 = vld [vmem:[%s1409] sm:$0xf]
      %v1411 = vsel %vm1158, %v1395, %v1410
      %1412 = vst [vmem:[%s1409] sm:$0xf] %v1411
      %1413 = vst.msk [vmem:[%s1409 + $0x4] sm:$0xf] %vm379, %v1404
      %v1414 = vld [vmem:[%s1409 + $0x8] sm:$0x1]
      %v1415 = vsel %vm1164, %v1405, %v1414
      %1416 = vst [vmem:[%s1409 + $0x8] sm:$0x1] %v1415
      %v1417 = vld [vmem:[#allocation2] sm:$0xf]
      %v1418 = vld [vmem:[#allocation2 + $0x4] sm:$0xf]
      %v1419 = vld [vmem:[#allocation2 + $0x8] sm:$0xf]
      %v1420 = vld [vmem:[#allocation2 + $0xc] sm:$0xf]
      %v1421 = vld [vmem:[#allocation2 + $0x10] sm:$0xf]
      %v1422 = vld [vmem:[#allocation2 + $0x14] sm:$0xf]
      %v1423 = vld [vmem:[#allocation2 + $0x18] sm:$0xf]
      %v1424 = vld [vmem:[#allocation2 + $0x1c] sm:$0xf]
      %v1425 = vld [vmem:[#allocation2 + $0x20] sm:$0xf]
      %v1426 = vld [vmem:[#allocation2 + $0x24] sm:$0xf]
      %v1427 = vld [vmem:[#allocation2 + $0x28] sm:$0xf]
      %v1428 = vld [vmem:[#allocation2 + $0x2c] sm:$0xf]
      %v1429 = vld [vmem:[#allocation2 + $0x30] sm:$0xf]
      %v1430 = vld [vmem:[#allocation2 + $0x34] sm:$0xf]
      %v1431 = vld [vmem:[#allocation2 + $0x38] sm:$0xf]
      %v1432 = vld [vmem:[#allocation2 + $0x3c] sm:$0xf]
      %v1433 = vld [vmem:[#allocation2 + $0x40] sm:$0xf]
      %v1434 = vld [vmem:[#allocation2 + $0x44] sm:$0xf]
      %v1435 = vld [vmem:[#allocation2 + $0x48] sm:$0xf]
      %v1436 = vld [vmem:[#allocation2 + $0x4c] sm:$0xf]
      %v1437 = vld [vmem:[#allocation2 + $0x50] sm:$0xf]
      %v1438 = vld [vmem:[#allocation2 + $0x54] sm:$0xf]
      %v1439 = vld [vmem:[#allocation2 + $0x58] sm:$0xf]
      %v1440 = vld [vmem:[#allocation2 + $0x5c] sm:$0xf]
      %v1441 = vld [vmem:[#allocation2 + $0x60] sm:$0xf]
      %v1442 = vld [vmem:[#allocation2 + $0x64] sm:$0xf]
      %v1443 = vld [vmem:[#allocation2 + $0x68] sm:$0xf]
      %v1444 = vld [vmem:[#allocation2 + $0x6c] sm:$0xf]
      %v1445 = vld [vmem:[#allocation2 + $0x70] sm:$0xf]
      %v1446 = vld [vmem:[#allocation2 + $0x74] sm:$0xf]
      %v1447 = vld [vmem:[#allocation2 + $0x78] sm:$0xf]
      %v1448 = vld [vmem:[#allocation2 + $0x7c] sm:$0xf]
      %v1449 = vld [vmem:[#allocation2 + $0x80] sm:$0xf]
      %v1450 = vld [vmem:[#allocation2 + $0x84] sm:$0xf]
      %v1451 = vld [vmem:[#allocation2 + $0x88] sm:$0xf]
      %v1452 = vld [vmem:[#allocation2 + $0x8c] sm:$0xf]
      %v1453 = vld [vmem:[#allocation2 + $0x90] sm:$0xf]
      %v1454 = vld [vmem:[#allocation2 + $0x94] sm:$0xf]
      %v1455 = vld [vmem:[#allocation2 + $0x98] sm:$0xf]
      %v1456 = vld [vmem:[#allocation2 + $0x9c] sm:$0xf]
      %v1457 = vld [vmem:[#allocation2 + $0xa0] sm:$0xf]
      %v1458 = vld [vmem:[#allocation2 + $0xa4] sm:$0xf]
      %v1459 = vld [vmem:[#allocation2 + $0xa8] sm:$0xf]
      %v1460 = vld [vmem:[#allocation2 + $0xac] sm:$0xf]
      %v1461 = vld [vmem:[#allocation2 + $0xb0] sm:$0xf]
      %v1462 = vld [vmem:[#allocation2 + $0xb4] sm:$0xf]
      %v1463 = vld [vmem:[#allocation2 + $0xb8] sm:$0xf]
      %v1464 = vld [vmem:[#allocation2 + $0xbc] sm:$0xf]
      %v1465 = vld [vmem:[%s4] sm:$0x3]
      %s1466 = scalar_lea.vmem %s4, 2
      %v1467 = vld [vmem:[%s1466] sm:$0x3]
      %s1468 = scalar_lea.vmem %s4, 4
      %v1469 = vld [vmem:[%s1468] sm:$0x3]
      %v1470 = vld [vmem:[%s1155] sm:$0xf]
      %v1471 = vld [vmem:[%s1155 + $0x4] sm:$0xf]
      %v1472 = vld [vmem:[%s1155 + $0x8] sm:$0xf]
      %v1473 = vld [vmem:[%s1155 + $0xc] sm:$0xf]
      %v1474 = vld [vmem:[%s1155 + $0x10] sm:$0xf]
      %v1475 = vld [vmem:[%s1155 + $0x14] sm:$0xf]
      %v1476 = vld [vmem:[%s1155 + $0x18] sm:$0xf]
      %v1477 = vld [vmem:[%s1155 + $0x1c] sm:$0xf]
      %v1478 = vld [vmem:[%s1155 + $0x20] sm:$0xf]
      %v1479 = vld [vmem:[%s1155 + $0x24] sm:$0xf]
      %v1480 = vld [vmem:[%s1155 + $0x28] sm:$0xf]
      %v1481 = vld [vmem:[%s1155 + $0x2c] sm:$0xf]
      %v1482 = vld [vmem:[%s1155 + $0x30] sm:$0xf]
      %v1483 = vld [vmem:[%s1155 + $0x34] sm:$0xf]
      %v1484 = vld [vmem:[%s1155 + $0x38] sm:$0xf]
      %v1485 = vld [vmem:[%s1155 + $0x3c] sm:$0xf]
      %v1486 = vld [vmem:[%s1155 + $0x40] sm:$0xf]
      %v1487 = vld [vmem:[%s1155 + $0x44] sm:$0xf]
      %v1488 = vld [vmem:[%s1155 + $0x48] sm:$0xf]
      %v1489 = vld [vmem:[%s1155 + $0x4c] sm:$0xf]
      %v1490 = vld [vmem:[%s1155 + $0x50] sm:$0xf]
      %v1491 = vld [vmem:[%s1155 + $0x54] sm:$0xf]
      %v1492 = vld [vmem:[%s1155 + $0x58] sm:$0xf]
      %v1493 = vld [vmem:[%s1155 + $0x5c] sm:$0xf]
      %v1494 = vld [vmem:[%s1155 + $0x60] sm:$0xf]
      %v1495 = vld [vmem:[%s1155 + $0x64] sm:$0xf]
      %v1496 = vld [vmem:[%s1155 + $0x68] sm:$0xf]
      %v1497 = vld [vmem:[%s1155 + $0x6c] sm:$0xf]
      %v1498 = vld [vmem:[%s1155 + $0x70] sm:$0xf]
      %v1499 = vld [vmem:[%s1155 + $0x74] sm:$0xf]
      %v1500 = vld [vmem:[%s1155 + $0x78] sm:$0xf]
      %v1501 = vld [vmem:[%s1155 + $0x7c] sm:$0xf]
      %v1502 = vld [vmem:[%s1155 + $0x80] sm:$0xf]
      %v1503 = vld [vmem:[%s1155 + $0x84] sm:$0xf]
      %v1504 = vld [vmem:[%s1155 + $0x88] sm:$0xf]
      %v1505 = vld [vmem:[%s1155 + $0x8c] sm:$0xf]
      %v1506 = vld [vmem:[%s1155 + $0x90] sm:$0xf]
      %v1507 = vld [vmem:[%s1155 + $0x94] sm:$0xf]
      %v1508 = vld [vmem:[%s1155 + $0x98] sm:$0xf]
      %v1509 = vld [vmem:[%s1155 + $0x9c] sm:$0xf]
      %v1510 = vld [vmem:[%s1155 + $0xa0] sm:$0xf]
      %v1511 = vld [vmem:[%s1155 + $0xa4] sm:$0xf]
      %v1512 = vld [vmem:[%s1155 + $0xa8] sm:$0xf]
      %v1513 = vld [vmem:[%s1155 + $0xac] sm:$0xf]
      %v1514 = vld [vmem:[%s1155 + $0xb0] sm:$0xf]
      %v1515 = vld [vmem:[%s1155 + $0xb4] sm:$0xf]
      %v1516 = vld [vmem:[%s1155 + $0xb8] sm:$0xf]
      %v1517 = vld [vmem:[%s1155 + $0xbc] sm:$0xf]
      %s1518 = scalar_lea.vmem %s4, 6
      %v1519 = vld [vmem:[%s1518] sm:$0x3]
      %v1568 = vunpack.c.l.b16 %v1470
      %v1569 = vunpack.c.l.b16 %v1471
      %v1570 = vunpack.c.l.b16 %v1472
      %v1571 = vunpack.c.l.b16 %v1473
      %v1572 = vunpack.c.l.b16 %v1474
      %v1573 = vunpack.c.l.b16 %v1475
      %v1574 = vunpack.c.l.b16 %v1476
      %v1575 = vunpack.c.l.b16 %v1477
      %v1576 = vunpack.c.l.b16 %v1478
      %v1577 = vunpack.c.l.b16 %v1479
      %v1578 = vunpack.c.l.b16 %v1480
      %v1579 = vunpack.c.l.b16 %v1481
      %v1580 = vunpack.c.l.b16 %v1482
      %v1581 = vunpack.c.l.b16 %v1483
      %v1582 = vunpack.c.l.b16 %v1484
      %v1583 = vunpack.c.l.b16 %v1485
      %v1584 = vunpack.c.l.b16 %v1486
      %v1585 = vunpack.c.l.b16 %v1487
      %v1586 = vunpack.c.l.b16 %v1488
      %v1587 = vunpack.c.l.b16 %v1489
      %v1588 = vunpack.c.l.b16 %v1490
      %v1589 = vunpack.c.l.b16 %v1491
      %v1590 = vunpack.c.l.b16 %v1492
      %v1591 = vunpack.c.l.b16 %v1493
      %v1592 = vunpack.c.l.b16 %v1494
      %v1593 = vunpack.c.l.b16 %v1495
      %v1594 = vunpack.c.l.b16 %v1496
      %v1595 = vunpack.c.l.b16 %v1497
      %v1596 = vunpack.c.l.b16 %v1498
      %v1597 = vunpack.c.l.b16 %v1499
      %v1598 = vunpack.c.l.b16 %v1500
      %v1599 = vunpack.c.l.b16 %v1501
      %v1600 = vunpack.c.l.b16 %v1502
      %v1601 = vunpack.c.l.b16 %v1503
      %v1602 = vunpack.c.l.b16 %v1504
      %v1603 = vunpack.c.l.b16 %v1505
      %v1604 = vunpack.c.l.b16 %v1506
      %v1605 = vunpack.c.l.b16 %v1507
      %v1606 = vunpack.c.l.b16 %v1508
      %v1607 = vunpack.c.l.b16 %v1509
      %v1608 = vunpack.c.l.b16 %v1510
      %v1609 = vunpack.c.l.b16 %v1511
      %v1610 = vunpack.c.l.b16 %v1512
      %v1611 = vunpack.c.l.b16 %v1513
      %v1612 = vunpack.c.l.b16 %v1514
      %v1613 = vunpack.c.l.b16 %v1515
      %v1614 = vunpack.c.l.b16 %v1516
      %v1615 = vunpack.c.l.b16 %v1517
      %v1616 = vpack.c.b16 %v1569, %v1568
      %v1617 = vpack.c.b16 %v1571, %v1570
      %v1618 = vpack.c.b16 %v1573, %v1572
      %v1619 = vpack.c.b16 %v1575, %v1574
      %v1620 = vpack.c.b16 %v1577, %v1576
      %v1621 = vpack.c.b16 %v1579, %v1578
      %v1622 = vpack.c.b16 %v1581, %v1580
      %v1623 = vpack.c.b16 %v1583, %v1582
      %v1624 = vpack.c.b16 %v1585, %v1584
      %v1625 = vpack.c.b16 %v1587, %v1586
      %v1626 = vpack.c.b16 %v1589, %v1588
      %v1627 = vpack.c.b16 %v1591, %v1590
      %v1628 = vpack.c.b16 %v1593, %v1592
      %v1629 = vpack.c.b16 %v1595, %v1594
      %v1630 = vpack.c.b16 %v1597, %v1596
      %v1631 = vpack.c.b16 %v1599, %v1598
      %v1632 = vpack.c.b16 %v1601, %v1600
      %v1633 = vpack.c.b16 %v1603, %v1602
      %v1634 = vpack.c.b16 %v1605, %v1604
      %v1635 = vpack.c.b16 %v1607, %v1606
      %v1636 = vpack.c.b16 %v1609, %v1608
      %v1637 = vpack.c.b16 %v1611, %v1610
      %v1638 = vpack.c.b16 %v1613, %v1612
      %v1639 = vpack.c.b16 %v1615, %v1614
      %vm1640 = vcmask 31744
      %v1642 = vsel %vm1640, %v1616, 0
      %v1645 = vsel %vm1640, %v1617, 0
      %v1648 = vsel %vm1640, %v1618, 0
      %v1651 = vsel %vm1640, %v1619, 0
      %v1654 = vsel %vm1640, %v1620, 0
      %v1657 = vsel %vm1640, %v1621, 0
      %v1660 = vsel %vm1640, %v1622, 0
      %v1663 = vsel %vm1640, %v1623, 0
      %v1666 = vsel %vm1640, %v1624, 0
      %v1669 = vsel %vm1640, %v1625, 0
      %v1672 = vsel %vm1640, %v1626, 0
      %v1675 = vsel %vm1640, %v1627, 0
      %v1678 = vsel %vm1640, %v1628, 0
      %v1681 = vsel %vm1640, %v1629, 0
      %v1684 = vsel %vm1640, %v1630, 0
      %v1687 = vsel %vm1640, %v1631, 0
      %v1690 = vsel %vm1640, %v1632, 0
      %v1693 = vsel %vm1640, %v1633, 0
      %v1696 = vsel %vm1640, %v1634, 0
      %v1699 = vsel %vm1640, %v1635, 0
      %v1702 = vsel %vm1640, %v1636, 0
      %v1705 = vsel %vm1640, %v1637, 0
      %v1708 = vsel %vm1640, %v1638, 0
      %v1711 = vsel %vm1640, %v1639, 0
      %vm1713 = vcmask 1041408
      %v1715 = vsel %vm1713, %v1519, 0
      %1717 = vmatprep.subr.bf16.mxu0 0
      %1718 = vmatpush1.bf16.msra.mxu0 0
      %1719 = vmatprep.subr.bf16.mxu0 0
      %1720 = vmatpush1.bf16.msra.mxu0 0
      %1721 = vmatprep.subr.bf16.mxu0 0
      %1722 = vmatpush1.bf16.msra.mxu0 0
      %1723 = vmatprep.subr.bf16.mxu0 0
      %1724 = vmatpush1.bf16.msra.mxu0 0
      %1725 = vmatprep.subr.bf16.mxu0 0
      %1726 = vmatpush1.bf16.msra.mxu0 0
      %1727 = vmatprep.subr.bf16.mxu0 0
      %1728 = vmatpush1.bf16.msra.mxu0 0
      %1729 = vmatprep.subr.bf16.mxu0 0
      %1730 = vmatpush1.bf16.msra.mxu0 0
      %1731 = vmatprep.subr.bf16.mxu0 0
      %1732 = vmatpush1.bf16.msra.mxu0 %v1715
      %1733 = vmatprep.subr.bf16.mxu0 0
      %1734 = vmatpush2.bf16.msra.mxu0 0
      %1735 = vmatprep.subr.bf16.mxu0 0
      %1736 = vmatpush2.bf16.msra.mxu0 0
      %1737 = vmatprep.subr.bf16.mxu0 0
      %1738 = vmatpush2.bf16.msra.mxu0 0
      %1739 = vmatprep.subr.bf16.mxu0 0
      %1740 = vmatpush2.bf16.msra.mxu0 0
      %1741 = vmatprep.subr.bf16.mxu0 0
      %1742 = vmatpush2.bf16.msra.mxu0 0
      %1743 = vmatprep.subr.bf16.mxu0 0
      %1744 = vmatpush2.bf16.msra.mxu0 0
      %1745 = vmatprep.subr.bf16.mxu0 0
      %1746 = vmatpush2.bf16.msra.mxu0 0
      %1747 = vmatprep.subr.bf16.mxu0 0
      %1748 = vmatpush2.bf16.msra.mxu0 0
      %1749 = vmatprep.mubr.bf16.mxu0 0
      %1750 = vmatmul.mubr.bf16.gmra.mxu0 %v1642
      %v1751 = vpop.f32.mrf.mxu0
      %v1752 = vadd.f32 0.0, %v1751
      %v1753 = vpop.f32.mrf.mxu0
      %v1754 = vpop.f32.mrf.mxu0
      %v1755 = vadd.f32 0.0, %v1754
      %v1756 = vpop.f32.mrf.mxu0
      %1757 = vmatprep.mubr.bf16.mxu0 0
      %1758 = vmatmul.mubr.bf16.gmra.mxu0 %v1645
      %v1759 = vpop.f32.mrf.mxu0
      %v1760 = vpop.f32.mrf.mxu0
      %v1761 = vpop.f32.mrf.mxu0
      %v1762 = vadd.f32 0.0, %v1761
      %v1763 = vpop.f32.mrf.mxu0
      %1764 = vmatprep.mubr.bf16.mxu0 0
      %1765 = vmatmul.mubr.bf16.gmra.mxu0 %v1648
      %v1766 = vpop.f32.mrf.mxu0
      %v1767 = vadd.f32 0.0, %v1766
      %v1768 = vpop.f32.mrf.mxu0
      %v1769 = vpop.f32.mrf.mxu0
      %v1770 = vpop.f32.mrf.mxu0
      %1771 = vmatprep.mubr.bf16.mxu0 0
      %1772 = vmatmul.mubr.bf16.gmra.mxu0 %v1651
      %v1773 = vpop.f32.mrf.mxu0
      %v1774 = vadd.f32 0.0, %v1773
      %v1775 = vpop.f32.mrf.mxu0
      %v1776 = vpop.f32.mrf.mxu0
      %v1777 = vadd.f32 0.0, %v1776
      %v1778 = vpop.f32.mrf.mxu0
      %1779 = vmatprep.mubr.bf16.mxu0 0
      %1780 = vmatmul.mubr.bf16.gmra.mxu0 %v1654
      %v1781 = vpop.f32.mrf.mxu0
      %v1782 = vpop.f32.mrf.mxu0
      %v1783 = vpop.f32.mrf.mxu0
      %v1784 = vadd.f32 0.0, %v1783
      %v1785 = vpop.f32.mrf.mxu0
      %1786 = vmatprep.mubr.bf16.mxu0 0
      %1787 = vmatmul.mubr.bf16.gmra.mxu0 %v1657
      %v1788 = vpop.f32.mrf.mxu0
      %v1789 = vadd.f32 0.0, %v1788
      %v1790 = vpop.f32.mrf.mxu0
      %v1791 = vpop.f32.mrf.mxu0
      %v1792 = vpop.f32.mrf.mxu0
      %1793 = vmatprep.mubr.bf16.mxu0 0
      %1794 = vmatmul.mubr.bf16.gmra.mxu0 %v1660
      %v1795 = vpop.f32.mrf.mxu0
      %v1796 = vadd.f32 0.0, %v1795
      %v1797 = vpop.f32.mrf.mxu0
      %v1798 = vpop.f32.mrf.mxu0
      %v1799 = vadd.f32 0.0, %v1798
      %v1800 = vpop.f32.mrf.mxu0
      %1801 = vmatprep.mubr.bf16.mxu0 0
      %1802 = vmatmul.mubr.bf16.gmra.mxu0 %v1663
      %v1803 = vpop.f32.mrf.mxu0
      %v1804 = vpop.f32.mrf.mxu0
      %v1805 = vpop.f32.mrf.mxu0
      %v1806 = vadd.f32 0.0, %v1805
      %v1807 = vpop.f32.mrf.mxu0
      %1808 = vmatprep.mubr.bf16.mxu0 0
      %1809 = vmatmul.mubr.bf16.gmra.mxu0 %v1666
      %v1810 = vpop.f32.mrf.mxu0
      %v1811 = vadd.f32 0.0, %v1810
      %v1812 = vpop.f32.mrf.mxu0
      %v1813 = vpop.f32.mrf.mxu0
      %v1814 = vpop.f32.mrf.mxu0
      %1815 = vmatprep.mubr.bf16.mxu0 0
      %1816 = vmatmul.mubr.bf16.gmra.mxu0 %v1669
      %v1817 = vpop.f32.mrf.mxu0
      %v1818 = vadd.f32 0.0, %v1817
      %v1819 = vpop.f32.mrf.mxu0
      %v1820 = vpop.f32.mrf.mxu0
      %v1821 = vadd.f32 0.0, %v1820
      %v1822 = vpop.f32.mrf.mxu0
      %1823 = vmatprep.mubr.bf16.mxu0 0
      %1824 = vmatmul.mubr.bf16.gmra.mxu0 %v1672
      %v1825 = vpop.f32.mrf.mxu0
      %v1826 = vpop.f32.mrf.mxu0
      %v1827 = vpop.f32.mrf.mxu0
      %v1828 = vadd.f32 0.0, %v1827
      %v1829 = vpop.f32.mrf.mxu0
      %1830 = vmatprep.mubr.bf16.mxu0 0
      %1831 = vmatmul.mubr.bf16.gmra.mxu0 %v1675
      %v1832 = vpop.f32.mrf.mxu0
      %v1833 = vadd.f32 0.0, %v1832
      %v1834 = vpop.f32.mrf.mxu0
      %v1835 = vpop.f32.mrf.mxu0
      %v1836 = vpop.f32.mrf.mxu0
      %1837 = vmatprep.mubr.bf16.mxu0 0
      %1838 = vmatmul.mubr.bf16.gmra.mxu0 %v1678
      %v1839 = vpop.f32.mrf.mxu0
      %v1840 = vadd.f32 0.0, %v1839
      %v1841 = vpop.f32.mrf.mxu0
      %v1842 = vpop.f32.mrf.mxu0
      %v1843 = vadd.f32 0.0, %v1842
      %v1844 = vpop.f32.mrf.mxu0
      %1845 = vmatprep.mubr.bf16.mxu0 0
      %1846 = vmatmul.mubr.bf16.gmra.mxu0 %v1681
      %v1847 = vpop.f32.mrf.mxu0
      %v1848 = vpop.f32.mrf.mxu0
      %v1849 = vpop.f32.mrf.mxu0
      %v1850 = vadd.f32 0.0, %v1849
      %v1851 = vpop.f32.mrf.mxu0
      %1852 = vmatprep.mubr.bf16.mxu0 0
      %1853 = vmatmul.mubr.bf16.gmra.mxu0 %v1684
      %v1854 = vpop.f32.mrf.mxu0
      %v1855 = vadd.f32 0.0, %v1854
      %v1856 = vpop.f32.mrf.mxu0
      %v1857 = vpop.f32.mrf.mxu0
      %v1858 = vpop.f32.mrf.mxu0
      %1859 = vmatprep.mubr.bf16.mxu0 0
      %1860 = vmatmul.mubr.bf16.gmra.mxu0 %v1687
      %v1861 = vpop.f32.mrf.mxu0
      %v1862 = vadd.f32 0.0, %v1861
      %v1863 = vpop.f32.mrf.mxu0
      %v1864 = vpop.f32.mrf.mxu0
      %v1865 = vadd.f32 0.0, %v1864
      %v1866 = vpop.f32.mrf.mxu0
      %1867 = vmatprep.mubr.bf16.mxu0 0
      %1868 = vmatmul.mubr.bf16.gmra.mxu0 %v1690
      %v1869 = vpop.f32.mrf.mxu0
      %v1870 = vpop.f32.mrf.mxu0
      %v1871 = vpop.f32.mrf.mxu0
      %v1872 = vadd.f32 0.0, %v1871
      %v1873 = vpop.f32.mrf.mxu0
      %1874 = vmatprep.mubr.bf16.mxu0 0
      %1875 = vmatmul.mubr.bf16.gmra.mxu0 %v1693
      %v1876 = vpop.f32.mrf.mxu0
      %v1877 = vadd.f32 0.0, %v1876
      %v1878 = vpop.f32.mrf.mxu0
      %v1879 = vpop.f32.mrf.mxu0
      %v1880 = vpop.f32.mrf.mxu0
      %1881 = vmatprep.mubr.bf16.mxu0 0
      %1882 = vmatmul.mubr.bf16.gmra.mxu0 %v1696
      %v1883 = vpop.f32.mrf.mxu0
      %v1884 = vadd.f32 0.0, %v1883
      %v1885 = vpop.f32.mrf.mxu0
      %v1886 = vpop.f32.mrf.mxu0
      %v1887 = vadd.f32 0.0, %v1886
      %v1888 = vpop.f32.mrf.mxu0
      %1889 = vmatprep.mubr.bf16.mxu0 0
      %1890 = vmatmul.mubr.bf16.gmra.mxu0 %v1699
      %v1891 = vpop.f32.mrf.mxu0
      %v1892 = vpop.f32.mrf.mxu0
      %v1893 = vpop.f32.mrf.mxu0
      %v1894 = vadd.f32 0.0, %v1893
      %v1895 = vpop.f32.mrf.mxu0
      %1896 = vmatprep.mubr.bf16.mxu0 0
      %1897 = vmatmul.mubr.bf16.gmra.mxu0 %v1702
      %v1898 = vpop.f32.mrf.mxu0
      %v1899 = vadd.f32 0.0, %v1898
      %v1900 = vpop.f32.mrf.mxu0
      %v1901 = vpop.f32.mrf.mxu0
      %v1902 = vpop.f32.mrf.mxu0
      %1903 = vmatprep.mubr.bf16.mxu0 0
      %1904 = vmatmul.mubr.bf16.gmra.mxu0 %v1705
      %v1905 = vpop.f32.mrf.mxu0
      %v1906 = vadd.f32 0.0, %v1905
      %v1907 = vpop.f32.mrf.mxu0
      %v1908 = vpop.f32.mrf.mxu0
      %v1909 = vadd.f32 0.0, %v1908
      %v1910 = vpop.f32.mrf.mxu0
      %1911 = vmatprep.mubr.bf16.mxu0 0
      %1912 = vmatmul.mubr.bf16.gmra.mxu0 %v1708
      %v1913 = vpop.f32.mrf.mxu0
      %v1914 = vpop.f32.mrf.mxu0
      %v1915 = vpop.f32.mrf.mxu0
      %v1916 = vadd.f32 0.0, %v1915
      %v1917 = vpop.f32.mrf.mxu0
      %1918 = vmatprep.mubr.bf16.mxu0 0
      %1919 = vmatmul.mubr.bf16.gmra.mxu0 %v1711
      %v1920 = vpop.f32.mrf.mxu0
      %v1921 = vadd.f32 0.0, %v1920
      %v1922 = vpop.f32.mrf.mxu0
      %v1923 = vpop.f32.mrf.mxu0
      %v1924 = vpop.f32.mrf.mxu0
      %1925 = vdwg.mxu0
      %v1974 = vunpack.c.l.b16 %v1417
      %v1975 = vunpack.c.l.b16 %v1418
      %v1976 = vunpack.c.l.b16 %v1419
      %v1977 = vunpack.c.l.b16 %v1420
      %v1978 = vunpack.c.l.b16 %v1421
      %v1979 = vunpack.c.l.b16 %v1422
      %v1980 = vunpack.c.l.b16 %v1423
      %v1981 = vunpack.c.l.b16 %v1424
      %v1982 = vunpack.c.l.b16 %v1425
      %v1983 = vunpack.c.l.b16 %v1426
      %v1984 = vunpack.c.l.b16 %v1427
      %v1985 = vunpack.c.l.b16 %v1428
      %v1986 = vunpack.c.l.b16 %v1429
      %v1987 = vunpack.c.l.b16 %v1430
      %v1988 = vunpack.c.l.b16 %v1431
      %v1989 = vunpack.c.l.b16 %v1432
      %v1990 = vunpack.c.l.b16 %v1433
      %v1991 = vunpack.c.l.b16 %v1434
      %v1992 = vunpack.c.l.b16 %v1435
      %v1993 = vunpack.c.l.b16 %v1436
      %v1994 = vunpack.c.l.b16 %v1437
      %v1995 = vunpack.c.l.b16 %v1438
      %v1996 = vunpack.c.l.b16 %v1439
      %v1997 = vunpack.c.l.b16 %v1440
      %v1998 = vunpack.c.l.b16 %v1441
      %v1999 = vunpack.c.l.b16 %v1442
      %v2000 = vunpack.c.l.b16 %v1443
      %v2001 = vunpack.c.l.b16 %v1444
      %v2002 = vunpack.c.l.b16 %v1445
      %v2003 = vunpack.c.l.b16 %v1446
      %v2004 = vunpack.c.l.b16 %v1447
      %v2005 = vunpack.c.l.b16 %v1448
      %v2006 = vunpack.c.l.b16 %v1449
      %v2007 = vunpack.c.l.b16 %v1450
      %v2008 = vunpack.c.l.b16 %v1451
      %v2009 = vunpack.c.l.b16 %v1452
      %v2010 = vunpack.c.l.b16 %v1453
      %v2011 = vunpack.c.l.b16 %v1454
      %v2012 = vunpack.c.l.b16 %v1455
      %v2013 = vunpack.c.l.b16 %v1456
      %v2014 = vunpack.c.l.b16 %v1457
      %v2015 = vunpack.c.l.b16 %v1458
      %v2016 = vunpack.c.l.b16 %v1459
      %v2017 = vunpack.c.l.b16 %v1460
      %v2018 = vunpack.c.l.b16 %v1461
      %v2019 = vunpack.c.l.b16 %v1462
      %v2020 = vunpack.c.l.b16 %v1463
      %v2021 = vunpack.c.l.b16 %v1464
      %v2022 = vpack.c.b16 %v1975, %v1974
      %v2023 = vpack.c.b16 %v1977, %v1976
      %v2024 = vpack.c.b16 %v1979, %v1978
      %v2025 = vpack.c.b16 %v1981, %v1980
      %v2026 = vpack.c.b16 %v1983, %v1982
      %v2027 = vpack.c.b16 %v1985, %v1984
      %v2028 = vpack.c.b16 %v1987, %v1986
      %v2029 = vpack.c.b16 %v1989, %v1988
      %v2030 = vpack.c.b16 %v1991, %v1990
      %v2031 = vpack.c.b16 %v1993, %v1992
      %v2032 = vpack.c.b16 %v1995, %v1994
      %v2033 = vpack.c.b16 %v1997, %v1996
      %v2034 = vpack.c.b16 %v1999, %v1998
      %v2035 = vpack.c.b16 %v2001, %v2000
      %v2036 = vpack.c.b16 %v2003, %v2002
      %v2037 = vpack.c.b16 %v2005, %v2004
      %v2038 = vpack.c.b16 %v2007, %v2006
      %v2039 = vpack.c.b16 %v2009, %v2008
      %v2040 = vpack.c.b16 %v2011, %v2010
      %v2041 = vpack.c.b16 %v2013, %v2012
      %v2042 = vpack.c.b16 %v2015, %v2014
      %v2043 = vpack.c.b16 %v2017, %v2016
      %v2044 = vpack.c.b16 %v2019, %v2018
      %v2045 = vpack.c.b16 %v2021, %v2020
      %v2047 = vsel %vm1640, %v2022, 0
      %v2050 = vsel %vm1640, %v2023, 0
      %v2053 = vsel %vm1640, %v2024, 0
      %v2056 = vsel %vm1640, %v2025, 0
      %v2059 = vsel %vm1640, %v2026, 0
      %v2062 = vsel %vm1640, %v2027, 0
      %v2065 = vsel %vm1640, %v2028, 0
      %v2068 = vsel %vm1640, %v2029, 0
      %v2071 = vsel %vm1640, %v2030, 0
      %v2074 = vsel %vm1640, %v2031, 0
      %v2077 = vsel %vm1640, %v2032, 0
      %v2080 = vsel %vm1640, %v2033, 0
      %v2083 = vsel %vm1640, %v2034, 0
      %v2086 = vsel %vm1640, %v2035, 0
      %v2089 = vsel %vm1640, %v2036, 0
      %v2092 = vsel %vm1640, %v2037, 0
      %v2095 = vsel %vm1640, %v2038, 0
      %v2098 = vsel %vm1640, %v2039, 0
      %v2101 = vsel %vm1640, %v2040, 0
      %v2104 = vsel %vm1640, %v2041, 0
      %v2107 = vsel %vm1640, %v2042, 0
      %v2110 = vsel %vm1640, %v2043, 0
      %v2113 = vsel %vm1640, %v2044, 0
      %v2116 = vsel %vm1640, %v2045, 0
      %v2119 = vsel %vm1713, %v1465, 0
      %2121 = vmatprep.subr.bf16.mxu0 0
      %2122 = vmatpush1.bf16.msra.mxu0 0
      %2123 = vmatprep.subr.bf16.mxu0 0
      %2124 = vmatpush1.bf16.msra.mxu0 0
      %2125 = vmatprep.subr.bf16.mxu0 0
      %2126 = vmatpush1.bf16.msra.mxu0 0
      %2127 = vmatprep.subr.bf16.mxu0 0
      %2128 = vmatpush1.bf16.msra.mxu0 0
      %2129 = vmatprep.subr.bf16.mxu0 0
      %2130 = vmatpush1.bf16.msra.mxu0 0
      %2131 = vmatprep.subr.bf16.mxu0 0
      %2132 = vmatpush1.bf16.msra.mxu0 0
      %2133 = vmatprep.subr.bf16.mxu0 0
      %2134 = vmatpush1.bf16.msra.mxu0 0
      %2135 = vmatprep.subr.bf16.mxu0 0
      %2136 = vmatpush1.bf16.msra.mxu0 %v2119
      %2137 = vmatprep.subr.bf16.mxu0 0
      %2138 = vmatpush2.bf16.msra.mxu0 0
      %2139 = vmatprep.subr.bf16.mxu0 0
      %2140 = vmatpush2.bf16.msra.mxu0 0
      %2141 = vmatprep.subr.bf16.mxu0 0
      %2142 = vmatpush2.bf16.msra.mxu0 0
      %2143 = vmatprep.subr.bf16.mxu0 0
      %2144 = vmatpush2.bf16.msra.mxu0 0
      %2145 = vmatprep.subr.bf16.mxu0 0
      %2146 = vmatpush2.bf16.msra.mxu0 0
      %2147 = vmatprep.subr.bf16.mxu0 0
      %2148 = vmatpush2.bf16.msra.mxu0 0
      %2149 = vmatprep.subr.bf16.mxu0 0
      %2150 = vmatpush2.bf16.msra.mxu0 0
      %2151 = vmatprep.subr.bf16.mxu0 0
      %2152 = vmatpush2.bf16.msra.mxu0 0
      %2153 = vmatprep.mubr.bf16.mxu0 0
      %2154 = vmatmul.mubr.bf16.gmra.mxu0 %v2047
      %v2155 = vpop.f32.mrf.mxu0
      %v2156 = vadd.f32 %v1752, %v2155
      %v2157 = vpop.f32.mrf.mxu0
      %v2158 = vpop.f32.mrf.mxu0
      %v2159 = vadd.f32 %v1755, %v2158
      %v2160 = vpop.f32.mrf.mxu0
      %2161 = vmatprep.mubr.bf16.mxu0 0
      %2162 = vmatmul.mubr.bf16.gmra.mxu0 %v2050
      %v2163 = vpop.f32.mrf.mxu0
      %v2164 = vpop.f32.mrf.mxu0
      %v2165 = vpop.f32.mrf.mxu0
      %v2166 = vadd.f32 %v1762, %v2165
      %v2167 = vpop.f32.mrf.mxu0
      %2168 = vmatprep.mubr.bf16.mxu0 0
      %2169 = vmatmul.mubr.bf16.gmra.mxu0 %v2053
      %v2170 = vpop.f32.mrf.mxu0
      %v2171 = vadd.f32 %v1767, %v2170
      %v2172 = vpop.f32.mrf.mxu0
      %v2173 = vpop.f32.mrf.mxu0
      %v2174 = vpop.f32.mrf.mxu0
      %2175 = vmatprep.mubr.bf16.mxu0 0
      %2176 = vmatmul.mubr.bf16.gmra.mxu0 %v2056
      %v2177 = vpop.f32.mrf.mxu0
      %v2178 = vadd.f32 %v1774, %v2177
      %v2179 = vpop.f32.mrf.mxu0
      %v2180 = vpop.f32.mrf.mxu0
      %v2181 = vadd.f32 %v1777, %v2180
      %v2182 = vpop.f32.mrf.mxu0
      %2183 = vmatprep.mubr.bf16.mxu0 0
      %2184 = vmatmul.mubr.bf16.gmra.mxu0 %v2059
      %v2185 = vpop.f32.mrf.mxu0
      %v2186 = vpop.f32.mrf.mxu0
      %v2187 = vpop.f32.mrf.mxu0
      %v2188 = vadd.f32 %v1784, %v2187
      %v2189 = vpop.f32.mrf.mxu0
      %2190 = vmatprep.mubr.bf16.mxu0 0
      %2191 = vmatmul.mubr.bf16.gmra.mxu0 %v2062
      %v2192 = vpop.f32.mrf.mxu0
      %v2193 = vadd.f32 %v1789, %v2192
      %v2194 = vpop.f32.mrf.mxu0
      %v2195 = vpop.f32.mrf.mxu0
      %v2196 = vpop.f32.mrf.mxu0
      %2197 = vmatprep.mubr.bf16.mxu0 0
      %2198 = vmatmul.mubr.bf16.gmra.mxu0 %v2065
      %v2199 = vpop.f32.mrf.mxu0
      %v2200 = vadd.f32 %v1796, %v2199
      %v2201 = vpop.f32.mrf.mxu0
      %v2202 = vpop.f32.mrf.mxu0
      %v2203 = vadd.f32 %v1799, %v2202
      %v2204 = vpop.f32.mrf.mxu0
      %2205 = vmatprep.mubr.bf16.mxu0 0
      %2206 = vmatmul.mubr.bf16.gmra.mxu0 %v2068
      %v2207 = vpop.f32.mrf.mxu0
      %v2208 = vpop.f32.mrf.mxu0
      %v2209 = vpop.f32.mrf.mxu0
      %v2210 = vadd.f32 %v1806, %v2209
      %v2211 = vpop.f32.mrf.mxu0
      %2212 = vmatprep.mubr.bf16.mxu0 0
      %2213 = vmatmul.mubr.bf16.gmra.mxu0 %v2071
      %v2214 = vpop.f32.mrf.mxu0
      %v2215 = vadd.f32 %v1811, %v2214
      %v2216 = vpop.f32.mrf.mxu0
      %v2217 = vpop.f32.mrf.mxu0
      %v2218 = vpop.f32.mrf.mxu0
      %2219 = vmatprep.mubr.bf16.mxu0 0
      %2220 = vmatmul.mubr.bf16.gmra.mxu0 %v2074
      %v2221 = vpop.f32.mrf.mxu0
      %v2222 = vadd.f32 %v1818, %v2221
      %v2223 = vpop.f32.mrf.mxu0
      %v2224 = vpop.f32.mrf.mxu0
      %v2225 = vadd.f32 %v1821, %v2224
      %v2226 = vpop.f32.mrf.mxu0
      %2227 = vmatprep.mubr.bf16.mxu0 0
      %2228 = vmatmul.mubr.bf16.gmra.mxu0 %v2077
      %v2229 = vpop.f32.mrf.mxu0
      %v2230 = vpop.f32.mrf.mxu0
      %v2231 = vpop.f32.mrf.mxu0
      %v2232 = vadd.f32 %v1828, %v2231
      %v2233 = vpop.f32.mrf.mxu0
      %2234 = vmatprep.mubr.bf16.mxu0 0
      %2235 = vmatmul.mubr.bf16.gmra.mxu0 %v2080
      %v2236 = vpop.f32.mrf.mxu0
      %v2237 = vadd.f32 %v1833, %v2236
      %v2238 = vpop.f32.mrf.mxu0
      %v2239 = vpop.f32.mrf.mxu0
      %v2240 = vpop.f32.mrf.mxu0
      %2241 = vmatprep.mubr.bf16.mxu0 0
      %2242 = vmatmul.mubr.bf16.gmra.mxu0 %v2083
      %v2243 = vpop.f32.mrf.mxu0
      %v2244 = vadd.f32 %v1840, %v2243
      %v2245 = vpop.f32.mrf.mxu0
      %v2246 = vpop.f32.mrf.mxu0
      %v2247 = vadd.f32 %v1843, %v2246
      %v2248 = vpop.f32.mrf.mxu0
      %2249 = vmatprep.mubr.bf16.mxu0 0
      %2250 = vmatmul.mubr.bf16.gmra.mxu0 %v2086
      %v2251 = vpop.f32.mrf.mxu0
      %v2252 = vpop.f32.mrf.mxu0
      %v2253 = vpop.f32.mrf.mxu0
      %v2254 = vadd.f32 %v1850, %v2253
      %v2255 = vpop.f32.mrf.mxu0
      %2256 = vmatprep.mubr.bf16.mxu0 0
      %2257 = vmatmul.mubr.bf16.gmra.mxu0 %v2089
      %v2258 = vpop.f32.mrf.mxu0
      %v2259 = vadd.f32 %v1855, %v2258
      %v2260 = vpop.f32.mrf.mxu0
      %v2261 = vpop.f32.mrf.mxu0
      %v2262 = vpop.f32.mrf.mxu0
      %2263 = vmatprep.mubr.bf16.mxu0 0
      %2264 = vmatmul.mubr.bf16.gmra.mxu0 %v2092
      %v2265 = vpop.f32.mrf.mxu0
      %v2266 = vadd.f32 %v1862, %v2265
      %v2267 = vpop.f32.mrf.mxu0
      %v2268 = vpop.f32.mrf.mxu0
      %v2269 = vadd.f32 %v1865, %v2268
      %v2270 = vpop.f32.mrf.mxu0
      %2271 = vmatprep.mubr.bf16.mxu0 0
      %2272 = vmatmul.mubr.bf16.gmra.mxu0 %v2095
      %v2273 = vpop.f32.mrf.mxu0
      %v2274 = vpop.f32.mrf.mxu0
      %v2275 = vpop.f32.mrf.mxu0
      %v2276 = vadd.f32 %v1872, %v2275
      %v2277 = vpop.f32.mrf.mxu0
      %2278 = vmatprep.mubr.bf16.mxu0 0
      %2279 = vmatmul.mubr.bf16.gmra.mxu0 %v2098
      %v2280 = vpop.f32.mrf.mxu0
      %v2281 = vadd.f32 %v1877, %v2280
      %v2282 = vpop.f32.mrf.mxu0
      %v2283 = vpop.f32.mrf.mxu0
      %v2284 = vpop.f32.mrf.mxu0
      %2285 = vmatprep.mubr.bf16.mxu0 0
      %2286 = vmatmul.mubr.bf16.gmra.mxu0 %v2101
      %v2287 = vpop.f32.mrf.mxu0
      %v2288 = vadd.f32 %v1884, %v2287
      %v2289 = vpop.f32.mrf.mxu0
      %v2290 = vpop.f32.mrf.mxu0
      %v2291 = vadd.f32 %v1887, %v2290
      %v2292 = vpop.f32.mrf.mxu0
      %2293 = vmatprep.mubr.bf16.mxu0 0
      %2294 = vmatmul.mubr.bf16.gmra.mxu0 %v2104
      %v2295 = vpop.f32.mrf.mxu0
      %v2296 = vpop.f32.mrf.mxu0
      %v2297 = vpop.f32.mrf.mxu0
      %v2298 = vadd.f32 %v1894, %v2297
      %v2299 = vpop.f32.mrf.mxu0
      %2300 = vmatprep.mubr.bf16.mxu0 0
      %2301 = vmatmul.mubr.bf16.gmra.mxu0 %v2107
      %v2302 = vpop.f32.mrf.mxu0
      %v2303 = vadd.f32 %v1899, %v2302
      %v2304 = vpop.f32.mrf.mxu0
      %v2305 = vpop.f32.mrf.mxu0
      %v2306 = vpop.f32.mrf.mxu0
      %2307 = vmatprep.mubr.bf16.mxu0 0
      %2308 = vmatmul.mubr.bf16.gmra.mxu0 %v2110
      %v2309 = vpop.f32.mrf.mxu0
      %v2310 = vadd.f32 %v1906, %v2309
      %v2311 = vpop.f32.mrf.mxu0
      %v2312 = vpop.f32.mrf.mxu0
      %v2313 = vadd.f32 %v1909, %v2312
      %v2314 = vpop.f32.mrf.mxu0
      %2315 = vmatprep.mubr.bf16.mxu0 0
      %2316 = vmatmul.mubr.bf16.gmra.mxu0 %v2113
      %v2317 = vpop.f32.mrf.mxu0
      %v2318 = vpop.f32.mrf.mxu0
      %v2319 = vpop.f32.mrf.mxu0
      %v2320 = vadd.f32 %v1916, %v2319
      %v2321 = vpop.f32.mrf.mxu0
      %2322 = vmatprep.mubr.bf16.mxu0 0
      %2323 = vmatmul.mubr.bf16.gmra.mxu0 %v2116
      %v2324 = vpop.f32.mrf.mxu0
      %v2325 = vadd.f32 %v1921, %v2324
      %v2326 = vpop.f32.mrf.mxu0
      %v2327 = vpop.f32.mrf.mxu0
      %v2328 = vpop.f32.mrf.mxu0
      %2329 = vdwg.mxu0
      %s2330 = scalar_lea.vmem %s4, 8
      %v2331 = vld [vmem:[%s2330] sm:$0x3]
      %v2333 = vsel %vm1713, %v2331, 0
      %2335 = vmatprep.subr.bf16.mxu0 0
      %2336 = vmatpush1.bf16.msra.mxu0 0
      %2337 = vmatprep.subr.bf16.mxu0 0
      %2338 = vmatpush1.bf16.msra.mxu0 0
      %2339 = vmatprep.subr.bf16.mxu0 0
      %2340 = vmatpush1.bf16.msra.mxu0 0
      %2341 = vmatprep.subr.bf16.mxu0 0
      %2342 = vmatpush1.bf16.msra.mxu0 0
      %2343 = vmatprep.subr.bf16.mxu0 0
      %2344 = vmatpush1.bf16.msra.mxu0 0
      %2345 = vmatprep.subr.bf16.mxu0 0
      %2346 = vmatpush1.bf16.msra.mxu0 0
      %2347 = vmatprep.subr.bf16.mxu0 0
      %2348 = vmatpush1.bf16.msra.mxu0 0
      %2349 = vmatprep.subr.bf16.mxu0 0
      %2350 = vmatpush1.bf16.msra.mxu0 %v2333
      %2351 = vmatprep.subr.bf16.mxu0 0
      %2352 = vmatpush2.bf16.msra.mxu0 0
      %2353 = vmatprep.subr.bf16.mxu0 0
      %2354 = vmatpush2.bf16.msra.mxu0 0
      %2355 = vmatprep.subr.bf16.mxu0 0
      %2356 = vmatpush2.bf16.msra.mxu0 0
      %2357 = vmatprep.subr.bf16.mxu0 0
      %2358 = vmatpush2.bf16.msra.mxu0 0
      %2359 = vmatprep.subr.bf16.mxu0 0
      %2360 = vmatpush2.bf16.msra.mxu0 0
      %2361 = vmatprep.subr.bf16.mxu0 0
      %2362 = vmatpush2.bf16.msra.mxu0 0
      %2363 = vmatprep.subr.bf16.mxu0 0
      %2364 = vmatpush2.bf16.msra.mxu0 0
      %2365 = vmatprep.subr.bf16.mxu0 0
      %2366 = vmatpush2.bf16.msra.mxu0 0
      %2367 = vmatprep.mubr.bf16.mxu0 0
      %2368 = vmatmul.mubr.bf16.gmra.mxu0 %v1642
      %v2369 = vpop.f32.mrf.mxu0
      %v2370 = vadd.f32 0.0, %v2369
      %v2371 = vpop.f32.mrf.mxu0
      %v2372 = vpop.f32.mrf.mxu0
      %v2373 = vadd.f32 0.0, %v2372
      %v2374 = vpop.f32.mrf.mxu0
      %2375 = vmatprep.mubr.bf16.mxu0 0
      %2376 = vmatmul.mubr.bf16.gmra.mxu0 %v1645
      %v2377 = vpop.f32.mrf.mxu0
      %v2378 = vadd.f32 0.0, %v2377
      %v2379 = vpop.f32.mrf.mxu0
      %v2380 = vpop.f32.mrf.mxu0
      %v2381 = vadd.f32 0.0, %v2380
      %v2382 = vpop.f32.mrf.mxu0
      %2383 = vmatprep.mubr.bf16.mxu0 0
      %2384 = vmatmul.mubr.bf16.gmra.mxu0 %v1648
      %v2385 = vpop.f32.mrf.mxu0
      %v2386 = vadd.f32 0.0, %v2385
      %v2387 = vpop.f32.mrf.mxu0
      %v2388 = vpop.f32.mrf.mxu0
      %v2389 = vadd.f32 0.0, %v2388
      %v2390 = vpop.f32.mrf.mxu0
      %2391 = vmatprep.mubr.bf16.mxu0 0
      %2392 = vmatmul.mubr.bf16.gmra.mxu0 %v1651
      %v2393 = vpop.f32.mrf.mxu0
      %v2394 = vadd.f32 0.0, %v2393
      %v2395 = vpop.f32.mrf.mxu0
      %v2396 = vpop.f32.mrf.mxu0
      %v2397 = vadd.f32 0.0, %v2396
      %v2398 = vpop.f32.mrf.mxu0
      %2399 = vmatprep.mubr.bf16.mxu0 0
      %2400 = vmatmul.mubr.bf16.gmra.mxu0 %v1654
      %v2401 = vpop.f32.mrf.mxu0
      %v2402 = vadd.f32 0.0, %v2401
      %v2403 = vpop.f32.mrf.mxu0
      %v2404 = vpop.f32.mrf.mxu0
      %v2405 = vadd.f32 0.0, %v2404
      %v2406 = vpop.f32.mrf.mxu0
      %2407 = vmatprep.mubr.bf16.mxu0 0
      %2408 = vmatmul.mubr.bf16.gmra.mxu0 %v1657
      %v2409 = vpop.f32.mrf.mxu0
      %v2410 = vadd.f32 0.0, %v2409
      %v2411 = vpop.f32.mrf.mxu0
      %v2412 = vpop.f32.mrf.mxu0
      %v2413 = vadd.f32 0.0, %v2412
      %v2414 = vpop.f32.mrf.mxu0
      %2415 = vmatprep.mubr.bf16.mxu0 0
      %2416 = vmatmul.mubr.bf16.gmra.mxu0 %v1660
      %v2417 = vpop.f32.mrf.mxu0
      %v2418 = vadd.f32 0.0, %v2417
      %v2419 = vpop.f32.mrf.mxu0
      %v2420 = vpop.f32.mrf.mxu0
      %v2421 = vadd.f32 0.0, %v2420
      %v2422 = vpop.f32.mrf.mxu0
      %2423 = vmatprep.mubr.bf16.mxu0 0
      %2424 = vmatmul.mubr.bf16.gmra.mxu0 %v1663
      %v2425 = vpop.f32.mrf.mxu0
      %v2426 = vadd.f32 0.0, %v2425
      %v2427 = vpop.f32.mrf.mxu0
      %v2428 = vpop.f32.mrf.mxu0
      %v2429 = vadd.f32 0.0, %v2428
      %v2430 = vpop.f32.mrf.mxu0
      %2431 = vmatprep.mubr.bf16.mxu0 0
      %2432 = vmatmul.mubr.bf16.gmra.mxu0 %v1666
      %v2433 = vpop.f32.mrf.mxu0
      %v2434 = vadd.f32 0.0, %v2433
      %v2435 = vpop.f32.mrf.mxu0
      %v2436 = vpop.f32.mrf.mxu0
      %v2437 = vadd.f32 0.0, %v2436
      %v2438 = vpop.f32.mrf.mxu0
      %2439 = vmatprep.mubr.bf16.mxu0 0
      %2440 = vmatmul.mubr.bf16.gmra.mxu0 %v1669
      %v2441 = vpop.f32.mrf.mxu0
      %v2442 = vadd.f32 0.0, %v2441
      %v2443 = vpop.f32.mrf.mxu0
      %v2444 = vpop.f32.mrf.mxu0
      %v2445 = vadd.f32 0.0, %v2444
      %v2446 = vpop.f32.mrf.mxu0
      %2447 = vmatprep.mubr.bf16.mxu0 0
      %2448 = vmatmul.mubr.bf16.gmra.mxu0 %v1672
      %v2449 = vpop.f32.mrf.mxu0
      %v2450 = vadd.f32 0.0, %v2449
      %v2451 = vpop.f32.mrf.mxu0
      %v2452 = vpop.f32.mrf.mxu0
      %v2453 = vadd.f32 0.0, %v2452
      %v2454 = vpop.f32.mrf.mxu0
      %2455 = vmatprep.mubr.bf16.mxu0 0
      %2456 = vmatmul.mubr.bf16.gmra.mxu0 %v1675
      %v2457 = vpop.f32.mrf.mxu0
      %v2458 = vadd.f32 0.0, %v2457
      %v2459 = vpop.f32.mrf.mxu0
      %v2460 = vpop.f32.mrf.mxu0
      %v2461 = vadd.f32 0.0, %v2460
      %v2462 = vpop.f32.mrf.mxu0
      %2463 = vmatprep.mubr.bf16.mxu0 0
      %2464 = vmatmul.mubr.bf16.gmra.mxu0 %v1678
      %v2465 = vpop.f32.mrf.mxu0
      %v2466 = vadd.f32 0.0, %v2465
      %v2467 = vpop.f32.mrf.mxu0
      %v2468 = vpop.f32.mrf.mxu0
      %v2469 = vadd.f32 0.0, %v2468
      %v2470 = vpop.f32.mrf.mxu0
      %2471 = vmatprep.mubr.bf16.mxu0 0
      %2472 = vmatmul.mubr.bf16.gmra.mxu0 %v1681
      %v2473 = vpop.f32.mrf.mxu0
      %v2474 = vadd.f32 0.0, %v2473
      %v2475 = vpop.f32.mrf.mxu0
      %v2476 = vpop.f32.mrf.mxu0
      %v2477 = vadd.f32 0.0, %v2476
      %v2478 = vpop.f32.mrf.mxu0
      %2479 = vmatprep.mubr.bf16.mxu0 0
      %2480 = vmatmul.mubr.bf16.gmra.mxu0 %v1684
      %v2481 = vpop.f32.mrf.mxu0
      %v2482 = vadd.f32 0.0, %v2481
      %v2483 = vpop.f32.mrf.mxu0
      %v2484 = vpop.f32.mrf.mxu0
      %v2485 = vadd.f32 0.0, %v2484
      %v2486 = vpop.f32.mrf.mxu0
      %2487 = vmatprep.mubr.bf16.mxu0 0
      %2488 = vmatmul.mubr.bf16.gmra.mxu0 %v1687
      %v2489 = vpop.f32.mrf.mxu0
      %v2490 = vadd.f32 0.0, %v2489
      %v2491 = vpop.f32.mrf.mxu0
      %v2492 = vpop.f32.mrf.mxu0
      %v2493 = vadd.f32 0.0, %v2492
      %v2494 = vpop.f32.mrf.mxu0
      %2495 = vmatprep.mubr.bf16.mxu0 0
      %2496 = vmatmul.mubr.bf16.gmra.mxu0 %v1690
      %v2497 = vpop.f32.mrf.mxu0
      %v2498 = vadd.f32 0.0, %v2497
      %v2499 = vpop.f32.mrf.mxu0
      %v2500 = vpop.f32.mrf.mxu0
      %v2501 = vadd.f32 0.0, %v2500
      %v2502 = vpop.f32.mrf.mxu0
      %2503 = vmatprep.mubr.bf16.mxu0 0
      %2504 = vmatmul.mubr.bf16.gmra.mxu0 %v1693
      %v2505 = vpop.f32.mrf.mxu0
      %v2506 = vadd.f32 0.0, %v2505
      %v2507 = vpop.f32.mrf.mxu0
      %v2508 = vpop.f32.mrf.mxu0
      %v2509 = vadd.f32 0.0, %v2508
      %v2510 = vpop.f32.mrf.mxu0
      %2511 = vmatprep.mubr.bf16.mxu0 0
      %2512 = vmatmul.mubr.bf16.gmra.mxu0 %v1696
      %v2513 = vpop.f32.mrf.mxu0
      %v2514 = vadd.f32 0.0, %v2513
      %v2515 = vpop.f32.mrf.mxu0
      %v2516 = vpop.f32.mrf.mxu0
      %v2517 = vadd.f32 0.0, %v2516
      %v2518 = vpop.f32.mrf.mxu0
      %2519 = vmatprep.mubr.bf16.mxu0 0
      %2520 = vmatmul.mubr.bf16.gmra.mxu0 %v1699
      %v2521 = vpop.f32.mrf.mxu0
      %v2522 = vadd.f32 0.0, %v2521
      %v2523 = vpop.f32.mrf.mxu0
      %v2524 = vpop.f32.mrf.mxu0
      %v2525 = vadd.f32 0.0, %v2524
      %v2526 = vpop.f32.mrf.mxu0
      %2527 = vmatprep.mubr.bf16.mxu0 0
      %2528 = vmatmul.mubr.bf16.gmra.mxu0 %v1702
      %v2529 = vpop.f32.mrf.mxu0
      %v2530 = vadd.f32 0.0, %v2529
      %v2531 = vpop.f32.mrf.mxu0
      %v2532 = vpop.f32.mrf.mxu0
      %v2533 = vadd.f32 0.0, %v2532
      %v2534 = vpop.f32.mrf.mxu0
      %2535 = vmatprep.mubr.bf16.mxu0 0
      %2536 = vmatmul.mubr.bf16.gmra.mxu0 %v1705
      %v2537 = vpop.f32.mrf.mxu0
      %v2538 = vadd.f32 0.0, %v2537
      %v2539 = vpop.f32.mrf.mxu0
      %v2540 = vpop.f32.mrf.mxu0
      %v2541 = vadd.f32 0.0, %v2540
      %v2542 = vpop.f32.mrf.mxu0
      %2543 = vmatprep.mubr.bf16.mxu0 0
      %2544 = vmatmul.mubr.bf16.gmra.mxu0 %v1708
      %v2545 = vpop.f32.mrf.mxu0
      %v2546 = vadd.f32 0.0, %v2545
      %v2547 = vpop.f32.mrf.mxu0
      %v2548 = vpop.f32.mrf.mxu0
      %v2549 = vadd.f32 0.0, %v2548
      %v2550 = vpop.f32.mrf.mxu0
      %2551 = vmatprep.mubr.bf16.mxu0 0
      %2552 = vmatmul.mubr.bf16.gmra.mxu0 %v1711
      %v2553 = vpop.f32.mrf.mxu0
      %v2554 = vadd.f32 0.0, %v2553
      %v2555 = vpop.f32.mrf.mxu0
      %v2556 = vpop.f32.mrf.mxu0
      %v2557 = vadd.f32 0.0, %v2556
      %v2558 = vpop.f32.mrf.mxu0
      %2559 = vdwg.mxu0
      %v2561 = vsel %vm1713, %v1467, 0
      %2563 = vmatprep.subr.bf16.mxu0 0
      %2564 = vmatpush1.bf16.msra.mxu0 0
      %2565 = vmatprep.subr.bf16.mxu0 0
      %2566 = vmatpush1.bf16.msra.mxu0 0
      %2567 = vmatprep.subr.bf16.mxu0 0
      %2568 = vmatpush1.bf16.msra.mxu0 0
      %2569 = vmatprep.subr.bf16.mxu0 0
      %2570 = vmatpush1.bf16.msra.mxu0 0
      %2571 = vmatprep.subr.bf16.mxu0 0
      %2572 = vmatpush1.bf16.msra.mxu0 0
      %2573 = vmatprep.subr.bf16.mxu0 0
      %2574 = vmatpush1.bf16.msra.mxu0 0
      %2575 = vmatprep.subr.bf16.mxu0 0
      %2576 = vmatpush1.bf16.msra.mxu0 0
      %2577 = vmatprep.subr.bf16.mxu0 0
      %2578 = vmatpush1.bf16.msra.mxu0 %v2561
      %2579 = vmatprep.subr.bf16.mxu0 0
      %2580 = vmatpush2.bf16.msra.mxu0 0
      %2581 = vmatprep.subr.bf16.mxu0 0
      %2582 = vmatpush2.bf16.msra.mxu0 0
      %2583 = vmatprep.subr.bf16.mxu0 0
      %2584 = vmatpush2.bf16.msra.mxu0 0
      %2585 = vmatprep.subr.bf16.mxu0 0
      %2586 = vmatpush2.bf16.msra.mxu0 0
      %2587 = vmatprep.subr.bf16.mxu0 0
      %2588 = vmatpush2.bf16.msra.mxu0 0
      %2589 = vmatprep.subr.bf16.mxu0 0
      %2590 = vmatpush2.bf16.msra.mxu0 0
      %2591 = vmatprep.subr.bf16.mxu0 0
      %2592 = vmatpush2.bf16.msra.mxu0 0
      %2593 = vmatprep.subr.bf16.mxu0 0
      %2594 = vmatpush2.bf16.msra.mxu0 0
      %2595 = vmatprep.mubr.bf16.mxu0 0
      %2596 = vmatmul.mubr.bf16.gmra.mxu0 %v2047
      %v2597 = vpop.f32.mrf.mxu0
      %v2598 = vadd.f32 %v2370, %v2597
      %v2599 = vpop.f32.mrf.mxu0
      %v2600 = vpop.f32.mrf.mxu0
      %v2601 = vadd.f32 %v2373, %v2600
      %v2602 = vpop.f32.mrf.mxu0
      %2603 = vmatprep.mubr.bf16.mxu0 0
      %2604 = vmatmul.mubr.bf16.gmra.mxu0 %v2050
      %v2605 = vpop.f32.mrf.mxu0
      %v2606 = vadd.f32 %v2378, %v2605
      %v2607 = vpop.f32.mrf.mxu0
      %v2608 = vpop.f32.mrf.mxu0
      %v2609 = vadd.f32 %v2381, %v2608
      %v2610 = vpop.f32.mrf.mxu0
      %2611 = vmatprep.mubr.bf16.mxu0 0
      %2612 = vmatmul.mubr.bf16.gmra.mxu0 %v2053
      %v2613 = vpop.f32.mrf.mxu0
      %v2614 = vadd.f32 %v2386, %v2613
      %v2615 = vpop.f32.mrf.mxu0
      %v2616 = vpop.f32.mrf.mxu0
      %v2617 = vadd.f32 %v2389, %v2616
      %v2618 = vpop.f32.mrf.mxu0
      %2619 = vmatprep.mubr.bf16.mxu0 0
      %2620 = vmatmul.mubr.bf16.gmra.mxu0 %v2056
      %v2621 = vpop.f32.mrf.mxu0
      %v2622 = vadd.f32 %v2394, %v2621
      %v2623 = vpop.f32.mrf.mxu0
      %v2624 = vpop.f32.mrf.mxu0
      %v2625 = vadd.f32 %v2397, %v2624
      %v2626 = vpop.f32.mrf.mxu0
      %2627 = vmatprep.mubr.bf16.mxu0 0
      %2628 = vmatmul.mubr.bf16.gmra.mxu0 %v2059
      %v2629 = vpop.f32.mrf.mxu0
      %v2630 = vadd.f32 %v2402, %v2629
      %v2631 = vpop.f32.mrf.mxu0
      %v2632 = vpop.f32.mrf.mxu0
      %v2633 = vadd.f32 %v2405, %v2632
      %v2634 = vpop.f32.mrf.mxu0
      %2635 = vmatprep.mubr.bf16.mxu0 0
      %2636 = vmatmul.mubr.bf16.gmra.mxu0 %v2062
      %v2637 = vpop.f32.mrf.mxu0
      %v2638 = vadd.f32 %v2410, %v2637
      %v2639 = vpop.f32.mrf.mxu0
      %v2640 = vpop.f32.mrf.mxu0
      %v2641 = vadd.f32 %v2413, %v2640
      %v2642 = vpop.f32.mrf.mxu0
      %2643 = vmatprep.mubr.bf16.mxu0 0
      %2644 = vmatmul.mubr.bf16.gmra.mxu0 %v2065
      %v2645 = vpop.f32.mrf.mxu0
      %v2646 = vadd.f32 %v2418, %v2645
      %v2647 = vpop.f32.mrf.mxu0
      %v2648 = vpop.f32.mrf.mxu0
      %v2649 = vadd.f32 %v2421, %v2648
      %v2650 = vpop.f32.mrf.mxu0
      %2651 = vmatprep.mubr.bf16.mxu0 0
      %2652 = vmatmul.mubr.bf16.gmra.mxu0 %v2068
      %v2653 = vpop.f32.mrf.mxu0
      %v2654 = vadd.f32 %v2426, %v2653
      %v2655 = vpop.f32.mrf.mxu0
      %v2656 = vpop.f32.mrf.mxu0
      %v2657 = vadd.f32 %v2429, %v2656
      %v2658 = vpop.f32.mrf.mxu0
      %2659 = vmatprep.mubr.bf16.mxu0 0
      %2660 = vmatmul.mubr.bf16.gmra.mxu0 %v2071
      %v2661 = vpop.f32.mrf.mxu0
      %v2662 = vadd.f32 %v2434, %v2661
      %v2663 = vpop.f32.mrf.mxu0
      %v2664 = vpop.f32.mrf.mxu0
      %v2665 = vadd.f32 %v2437, %v2664
      %v2666 = vpop.f32.mrf.mxu0
      %2667 = vmatprep.mubr.bf16.mxu0 0
      %2668 = vmatmul.mubr.bf16.gmra.mxu0 %v2074
      %v2669 = vpop.f32.mrf.mxu0
      %v2670 = vadd.f32 %v2442, %v2669
      %v2671 = vpop.f32.mrf.mxu0
      %v2672 = vpop.f32.mrf.mxu0
      %v2673 = vadd.f32 %v2445, %v2672
      %v2674 = vpop.f32.mrf.mxu0
      %2675 = vmatprep.mubr.bf16.mxu0 0
      %2676 = vmatmul.mubr.bf16.gmra.mxu0 %v2077
      %v2677 = vpop.f32.mrf.mxu0
      %v2678 = vadd.f32 %v2450, %v2677
      %v2679 = vpop.f32.mrf.mxu0
      %v2680 = vpop.f32.mrf.mxu0
      %v2681 = vadd.f32 %v2453, %v2680
      %v2682 = vpop.f32.mrf.mxu0
      %2683 = vmatprep.mubr.bf16.mxu0 0
      %2684 = vmatmul.mubr.bf16.gmra.mxu0 %v2080
      %v2685 = vpop.f32.mrf.mxu0
      %v2686 = vadd.f32 %v2458, %v2685
      %v2687 = vpop.f32.mrf.mxu0
      %v2688 = vpop.f32.mrf.mxu0
      %v2689 = vadd.f32 %v2461, %v2688
      %v2690 = vpop.f32.mrf.mxu0
      %2691 = vmatprep.mubr.bf16.mxu0 0
      %2692 = vmatmul.mubr.bf16.gmra.mxu0 %v2083
      %v2693 = vpop.f32.mrf.mxu0
      %v2694 = vadd.f32 %v2466, %v2693
      %v2695 = vpop.f32.mrf.mxu0
      %v2696 = vpop.f32.mrf.mxu0
      %v2697 = vadd.f32 %v2469, %v2696
      %v2698 = vpop.f32.mrf.mxu0
      %2699 = vmatprep.mubr.bf16.mxu0 0
      %2700 = vmatmul.mubr.bf16.gmra.mxu0 %v2086
      %v2701 = vpop.f32.mrf.mxu0
      %v2702 = vadd.f32 %v2474, %v2701
      %v2703 = vpop.f32.mrf.mxu0
      %v2704 = vpop.f32.mrf.mxu0
      %v2705 = vadd.f32 %v2477, %v2704
      %v2706 = vpop.f32.mrf.mxu0
      %2707 = vmatprep.mubr.bf16.mxu0 0
      %2708 = vmatmul.mubr.bf16.gmra.mxu0 %v2089
      %v2709 = vpop.f32.mrf.mxu0
      %v2710 = vadd.f32 %v2482, %v2709
      %v2711 = vpop.f32.mrf.mxu0
      %v2712 = vpop.f32.mrf.mxu0
      %v2713 = vadd.f32 %v2485, %v2712
      %v2714 = vpop.f32.mrf.mxu0
      %2715 = vmatprep.mubr.bf16.mxu0 0
      %2716 = vmatmul.mubr.bf16.gmra.mxu0 %v2092
      %v2717 = vpop.f32.mrf.mxu0
      %v2718 = vadd.f32 %v2490, %v2717
      %v2719 = vpop.f32.mrf.mxu0
      %v2720 = vpop.f32.mrf.mxu0
      %v2721 = vadd.f32 %v2493, %v2720
      %v2722 = vpop.f32.mrf.mxu0
      %2723 = vmatprep.mubr.bf16.mxu0 0
      %2724 = vmatmul.mubr.bf16.gmra.mxu0 %v2095
      %v2725 = vpop.f32.mrf.mxu0
      %v2726 = vadd.f32 %v2498, %v2725
      %v2727 = vpop.f32.mrf.mxu0
      %v2728 = vpop.f32.mrf.mxu0
      %v2729 = vadd.f32 %v2501, %v2728
      %v2730 = vpop.f32.mrf.mxu0
      %2731 = vmatprep.mubr.bf16.mxu0 0
      %2732 = vmatmul.mubr.bf16.gmra.mxu0 %v2098
      %v2733 = vpop.f32.mrf.mxu0
      %v2734 = vadd.f32 %v2506, %v2733
      %v2735 = vpop.f32.mrf.mxu0
      %v2736 = vpop.f32.mrf.mxu0
      %v2737 = vadd.f32 %v2509, %v2736
      %v2738 = vpop.f32.mrf.mxu0
      %2739 = vmatprep.mubr.bf16.mxu0 0
      %2740 = vmatmul.mubr.bf16.gmra.mxu0 %v2101
      %v2741 = vpop.f32.mrf.mxu0
      %v2742 = vadd.f32 %v2514, %v2741
      %v2743 = vpop.f32.mrf.mxu0
      %v2744 = vpop.f32.mrf.mxu0
      %v2745 = vadd.f32 %v2517, %v2744
      %v2746 = vpop.f32.mrf.mxu0
      %2747 = vmatprep.mubr.bf16.mxu0 0
      %2748 = vmatmul.mubr.bf16.gmra.mxu0 %v2104
      %v2749 = vpop.f32.mrf.mxu0
      %v2750 = vadd.f32 %v2522, %v2749
      %v2751 = vpop.f32.mrf.mxu0
      %v2752 = vpop.f32.mrf.mxu0
      %v2753 = vadd.f32 %v2525, %v2752
      %v2754 = vpop.f32.mrf.mxu0
      %2755 = vmatprep.mubr.bf16.mxu0 0
      %2756 = vmatmul.mubr.bf16.gmra.mxu0 %v2107
      %v2757 = vpop.f32.mrf.mxu0
      %v2758 = vadd.f32 %v2530, %v2757
      %v2759 = vpop.f32.mrf.mxu0
      %v2760 = vpop.f32.mrf.mxu0
      %v2761 = vadd.f32 %v2533, %v2760
      %v2762 = vpop.f32.mrf.mxu0
      %2763 = vmatprep.mubr.bf16.mxu0 0
      %2764 = vmatmul.mubr.bf16.gmra.mxu0 %v2110
      %v2765 = vpop.f32.mrf.mxu0
      %v2766 = vadd.f32 %v2538, %v2765
      %v2767 = vpop.f32.mrf.mxu0
      %v2768 = vpop.f32.mrf.mxu0
      %v2769 = vadd.f32 %v2541, %v2768
      %v2770 = vpop.f32.mrf.mxu0
      %2771 = vmatprep.mubr.bf16.mxu0 0
      %2772 = vmatmul.mubr.bf16.gmra.mxu0 %v2113
      %v2773 = vpop.f32.mrf.mxu0
      %v2774 = vadd.f32 %v2546, %v2773
      %v2775 = vpop.f32.mrf.mxu0
      %v2776 = vpop.f32.mrf.mxu0
      %v2777 = vadd.f32 %v2549, %v2776
      %v2778 = vpop.f32.mrf.mxu0
      %2779 = vmatprep.mubr.bf16.mxu0 0
      %2780 = vmatmul.mubr.bf16.gmra.mxu0 %v2116
      %v2781 = vpop.f32.mrf.mxu0
      %v2782 = vadd.f32 %v2554, %v2781
      %v2783 = vpop.f32.mrf.mxu0
      %v2784 = vpop.f32.mrf.mxu0
      %v2785 = vadd.f32 %v2557, %v2784
      %v2786 = vpop.f32.mrf.mxu0
      %2787 = vdwg.mxu0
      %s2788 = scalar_lea.vmem %s4, 10
      %v2789 = vld [vmem:[%s2788] sm:$0x3]
      %v2791 = vsel %vm1713, %v2789, 0
      %2793 = vmatprep.subr.bf16.mxu0 0
      %2794 = vmatpush1.bf16.msra.mxu0 0
      %2795 = vmatprep.subr.bf16.mxu0 0
      %2796 = vmatpush1.bf16.msra.mxu0 0
      %2797 = vmatprep.subr.bf16.mxu0 0
      %2798 = vmatpush1.bf16.msra.mxu0 0
      %2799 = vmatprep.subr.bf16.mxu0 0
      %2800 = vmatpush1.bf16.msra.mxu0 0
      %2801 = vmatprep.subr.bf16.mxu0 0
      %2802 = vmatpush1.bf16.msra.mxu0 0
      %2803 = vmatprep.subr.bf16.mxu0 0
      %2804 = vmatpush1.bf16.msra.mxu0 0
      %2805 = vmatprep.subr.bf16.mxu0 0
      %2806 = vmatpush1.bf16.msra.mxu0 0
      %2807 = vmatprep.subr.bf16.mxu0 0
      %2808 = vmatpush1.bf16.msra.mxu0 %v2791
      %2809 = vmatprep.subr.bf16.mxu0 0
      %2810 = vmatpush2.bf16.msra.mxu0 0
      %2811 = vmatprep.subr.bf16.mxu0 0
      %2812 = vmatpush2.bf16.msra.mxu0 0
      %2813 = vmatprep.subr.bf16.mxu0 0
      %2814 = vmatpush2.bf16.msra.mxu0 0
      %2815 = vmatprep.subr.bf16.mxu0 0
      %2816 = vmatpush2.bf16.msra.mxu0 0
      %2817 = vmatprep.subr.bf16.mxu0 0
      %2818 = vmatpush2.bf16.msra.mxu0 0
      %2819 = vmatprep.subr.bf16.mxu0 0
      %2820 = vmatpush2.bf16.msra.mxu0 0
      %2821 = vmatprep.subr.bf16.mxu0 0
      %2822 = vmatpush2.bf16.msra.mxu0 0
      %2823 = vmatprep.subr.bf16.mxu0 0
      %2824 = vmatpush2.bf16.msra.mxu0 0
      %2825 = vmatprep.mubr.bf16.mxu0 0
      %2826 = vmatmul.mubr.bf16.gmra.mxu0 %v1642
      %v2827 = vpop.f32.mrf.mxu0
      %v2828 = vadd.f32 0.0, %v2827
      %v2829 = vpop.f32.mrf.mxu0
      %v2830 = vpop.f32.mrf.mxu0
      %v2831 = vadd.f32 0.0, %v2830
      %v2832 = vpop.f32.mrf.mxu0
      %2833 = vmatprep.mubr.bf16.mxu0 0
      %2834 = vmatmul.mubr.bf16.gmra.mxu0 %v1645
      %v2835 = vpop.f32.mrf.mxu0
      %v2836 = vadd.f32 0.0, %v2835
      %v2837 = vpop.f32.mrf.mxu0
      %v2838 = vpop.f32.mrf.mxu0
      %v2839 = vadd.f32 0.0, %v2838
      %v2840 = vpop.f32.mrf.mxu0
      %2841 = vmatprep.mubr.bf16.mxu0 0
      %2842 = vmatmul.mubr.bf16.gmra.mxu0 %v1648
      %v2843 = vpop.f32.mrf.mxu0
      %v2844 = vadd.f32 0.0, %v2843
      %v2845 = vpop.f32.mrf.mxu0
      %v2846 = vpop.f32.mrf.mxu0
      %v2847 = vadd.f32 0.0, %v2846
      %v2848 = vpop.f32.mrf.mxu0
      %2849 = vmatprep.mubr.bf16.mxu0 0
      %2850 = vmatmul.mubr.bf16.gmra.mxu0 %v1651
      %v2851 = vpop.f32.mrf.mxu0
      %v2852 = vadd.f32 0.0, %v2851
      %v2853 = vpop.f32.mrf.mxu0
      %v2854 = vpop.f32.mrf.mxu0
      %v2855 = vadd.f32 0.0, %v2854
      %v2856 = vpop.f32.mrf.mxu0
      %2857 = vmatprep.mubr.bf16.mxu0 0
      %2858 = vmatmul.mubr.bf16.gmra.mxu0 %v1654
      %v2859 = vpop.f32.mrf.mxu0
      %v2860 = vadd.f32 0.0, %v2859
      %v2861 = vpop.f32.mrf.mxu0
      %v2862 = vpop.f32.mrf.mxu0
      %v2863 = vadd.f32 0.0, %v2862
      %v2864 = vpop.f32.mrf.mxu0
      %2865 = vmatprep.mubr.bf16.mxu0 0
      %2866 = vmatmul.mubr.bf16.gmra.mxu0 %v1657
      %v2867 = vpop.f32.mrf.mxu0
      %v2868 = vadd.f32 0.0, %v2867
      %v2869 = vpop.f32.mrf.mxu0
      %v2870 = vpop.f32.mrf.mxu0
      %v2871 = vadd.f32 0.0, %v2870
      %v2872 = vpop.f32.mrf.mxu0
      %2873 = vmatprep.mubr.bf16.mxu0 0
      %2874 = vmatmul.mubr.bf16.gmra.mxu0 %v1660
      %v2875 = vpop.f32.mrf.mxu0
      %v2876 = vadd.f32 0.0, %v2875
      %v2877 = vpop.f32.mrf.mxu0
      %v2878 = vpop.f32.mrf.mxu0
      %v2879 = vadd.f32 0.0, %v2878
      %v2880 = vpop.f32.mrf.mxu0
      %2881 = vmatprep.mubr.bf16.mxu0 0
      %2882 = vmatmul.mubr.bf16.gmra.mxu0 %v1663
      %v2883 = vpop.f32.mrf.mxu0
      %v2884 = vadd.f32 0.0, %v2883
      %v2885 = vpop.f32.mrf.mxu0
      %v2886 = vpop.f32.mrf.mxu0
      %v2887 = vadd.f32 0.0, %v2886
      %v2888 = vpop.f32.mrf.mxu0
      %2889 = vmatprep.mubr.bf16.mxu0 0
      %2890 = vmatmul.mubr.bf16.gmra.mxu0 %v1666
      %v2891 = vpop.f32.mrf.mxu0
      %v2892 = vadd.f32 0.0, %v2891
      %v2893 = vpop.f32.mrf.mxu0
      %v2894 = vpop.f32.mrf.mxu0
      %v2895 = vadd.f32 0.0, %v2894
      %v2896 = vpop.f32.mrf.mxu0
      %2897 = vmatprep.mubr.bf16.mxu0 0
      %2898 = vmatmul.mubr.bf16.gmra.mxu0 %v1669
      %v2899 = vpop.f32.mrf.mxu0
      %v2900 = vadd.f32 0.0, %v2899
      %v2901 = vpop.f32.mrf.mxu0
      %v2902 = vpop.f32.mrf.mxu0
      %v2903 = vadd.f32 0.0, %v2902
      %v2904 = vpop.f32.mrf.mxu0
      %2905 = vmatprep.mubr.bf16.mxu0 0
      %2906 = vmatmul.mubr.bf16.gmra.mxu0 %v1672
      %v2907 = vpop.f32.mrf.mxu0
      %v2908 = vadd.f32 0.0, %v2907
      %v2909 = vpop.f32.mrf.mxu0
      %v2910 = vpop.f32.mrf.mxu0
      %v2911 = vadd.f32 0.0, %v2910
      %v2912 = vpop.f32.mrf.mxu0
      %2913 = vmatprep.mubr.bf16.mxu0 0
      %2914 = vmatmul.mubr.bf16.gmra.mxu0 %v1675
      %v2915 = vpop.f32.mrf.mxu0
      %v2916 = vadd.f32 0.0, %v2915
      %v2917 = vpop.f32.mrf.mxu0
      %v2918 = vpop.f32.mrf.mxu0
      %v2919 = vadd.f32 0.0, %v2918
      %v2920 = vpop.f32.mrf.mxu0
      %2921 = vmatprep.mubr.bf16.mxu0 0
      %2922 = vmatmul.mubr.bf16.gmra.mxu0 %v1678
      %v2923 = vpop.f32.mrf.mxu0
      %v2924 = vadd.f32 0.0, %v2923
      %v2925 = vpop.f32.mrf.mxu0
      %v2926 = vpop.f32.mrf.mxu0
      %v2927 = vadd.f32 0.0, %v2926
      %v2928 = vpop.f32.mrf.mxu0
      %2929 = vmatprep.mubr.bf16.mxu0 0
      %2930 = vmatmul.mubr.bf16.gmra.mxu0 %v1681
      %v2931 = vpop.f32.mrf.mxu0
      %v2932 = vadd.f32 0.0, %v2931
      %v2933 = vpop.f32.mrf.mxu0
      %v2934 = vpop.f32.mrf.mxu0
      %v2935 = vadd.f32 0.0, %v2934
      %v2936 = vpop.f32.mrf.mxu0
      %2937 = vmatprep.mubr.bf16.mxu0 0
      %2938 = vmatmul.mubr.bf16.gmra.mxu0 %v1684
      %v2939 = vpop.f32.mrf.mxu0
      %v2940 = vadd.f32 0.0, %v2939
      %v2941 = vpop.f32.mrf.mxu0
      %v2942 = vpop.f32.mrf.mxu0
      %v2943 = vadd.f32 0.0, %v2942
      %v2944 = vpop.f32.mrf.mxu0
      %2945 = vmatprep.mubr.bf16.mxu0 0
      %2946 = vmatmul.mubr.bf16.gmra.mxu0 %v1687
      %v2947 = vpop.f32.mrf.mxu0
      %v2948 = vadd.f32 0.0, %v2947
      %v2949 = vpop.f32.mrf.mxu0
      %v2950 = vpop.f32.mrf.mxu0
      %v2951 = vadd.f32 0.0, %v2950
      %v2952 = vpop.f32.mrf.mxu0
      %2953 = vmatprep.mubr.bf16.mxu0 0
      %2954 = vmatmul.mubr.bf16.gmra.mxu0 %v1690
      %v2955 = vpop.f32.mrf.mxu0
      %v2956 = vadd.f32 0.0, %v2955
      %v2957 = vpop.f32.mrf.mxu0
      %v2958 = vpop.f32.mrf.mxu0
      %v2959 = vadd.f32 0.0, %v2958
      %v2960 = vpop.f32.mrf.mxu0
      %2961 = vmatprep.mubr.bf16.mxu0 0
      %2962 = vmatmul.mubr.bf16.gmra.mxu0 %v1693
      %v2963 = vpop.f32.mrf.mxu0
      %v2964 = vadd.f32 0.0, %v2963
      %v2965 = vpop.f32.mrf.mxu0
      %v2966 = vpop.f32.mrf.mxu0
      %v2967 = vadd.f32 0.0, %v2966
      %v2968 = vpop.f32.mrf.mxu0
      %2969 = vmatprep.mubr.bf16.mxu0 0
      %2970 = vmatmul.mubr.bf16.gmra.mxu0 %v1696
      %v2971 = vpop.f32.mrf.mxu0
      %v2972 = vadd.f32 0.0, %v2971
      %v2973 = vpop.f32.mrf.mxu0
      %v2974 = vpop.f32.mrf.mxu0
      %v2975 = vadd.f32 0.0, %v2974
      %v2976 = vpop.f32.mrf.mxu0
      %2977 = vmatprep.mubr.bf16.mxu0 0
      %2978 = vmatmul.mubr.bf16.gmra.mxu0 %v1699
      %v2979 = vpop.f32.mrf.mxu0
      %v2980 = vadd.f32 0.0, %v2979
      %v2981 = vpop.f32.mrf.mxu0
      %v2982 = vpop.f32.mrf.mxu0
      %v2983 = vadd.f32 0.0, %v2982
      %v2984 = vpop.f32.mrf.mxu0
      %2985 = vmatprep.mubr.bf16.mxu0 0
      %2986 = vmatmul.mubr.bf16.gmra.mxu0 %v1702
      %v2987 = vpop.f32.mrf.mxu0
      %v2988 = vadd.f32 0.0, %v2987
      %v2989 = vpop.f32.mrf.mxu0
      %v2990 = vpop.f32.mrf.mxu0
      %v2991 = vadd.f32 0.0, %v2990
      %v2992 = vpop.f32.mrf.mxu0
      %2993 = vmatprep.mubr.bf16.mxu0 0
      %2994 = vmatmul.mubr.bf16.gmra.mxu0 %v1705
      %v2995 = vpop.f32.mrf.mxu0
      %v2996 = vadd.f32 0.0, %v2995
      %v2997 = vpop.f32.mrf.mxu0
      %v2998 = vpop.f32.mrf.mxu0
      %v2999 = vadd.f32 0.0, %v2998
      %v3000 = vpop.f32.mrf.mxu0
      %3001 = vmatprep.mubr.bf16.mxu0 0
      %3002 = vmatmul.mubr.bf16.gmra.mxu0 %v1708
      %v3003 = vpop.f32.mrf.mxu0
      %v3004 = vadd.f32 0.0, %v3003
      %v3005 = vpop.f32.mrf.mxu0
      %v3006 = vpop.f32.mrf.mxu0
      %v3007 = vadd.f32 0.0, %v3006
      %v3008 = vpop.f32.mrf.mxu0
      %3009 = vmatprep.mubr.bf16.mxu0 0
      %3010 = vmatmul.mubr.bf16.gmra.mxu0 %v1711
      %v3011 = vpop.f32.mrf.mxu0
      %v3012 = vadd.f32 0.0, %v3011
      %v3013 = vpop.f32.mrf.mxu0
      %v3014 = vpop.f32.mrf.mxu0
      %v3015 = vadd.f32 0.0, %v3014
      %v3016 = vpop.f32.mrf.mxu0
      %3017 = vdwg.mxu0
      %v3019 = vsel %vm1713, %v1469, 0
      %3021 = vmatprep.subr.bf16.mxu0 0
      %3022 = vmatpush1.bf16.msra.mxu0 0
      %3023 = vmatprep.subr.bf16.mxu0 0
      %3024 = vmatpush1.bf16.msra.mxu0 0
      %3025 = vmatprep.subr.bf16.mxu0 0
      %3026 = vmatpush1.bf16.msra.mxu0 0
      %3027 = vmatprep.subr.bf16.mxu0 0
      %3028 = vmatpush1.bf16.msra.mxu0 0
      %3029 = vmatprep.subr.bf16.mxu0 0
      %3030 = vmatpush1.bf16.msra.mxu0 0
      %3031 = vmatprep.subr.bf16.mxu0 0
      %3032 = vmatpush1.bf16.msra.mxu0 0
      %3033 = vmatprep.subr.bf16.mxu0 0
      %3034 = vmatpush1.bf16.msra.mxu0 0
      %3035 = vmatprep.subr.bf16.mxu0 0
      %3036 = vmatpush1.bf16.msra.mxu0 %v3019
      %3037 = vmatprep.subr.bf16.mxu0 0
      %3038 = vmatpush2.bf16.msra.mxu0 0
      %3039 = vmatprep.subr.bf16.mxu0 0
      %3040 = vmatpush2.bf16.msra.mxu0 0
      %3041 = vmatprep.subr.bf16.mxu0 0
      %3042 = vmatpush2.bf16.msra.mxu0 0
      %3043 = vmatprep.subr.bf16.mxu0 0
      %3044 = vmatpush2.bf16.msra.mxu0 0
      %3045 = vmatprep.subr.bf16.mxu0 0
      %3046 = vmatpush2.bf16.msra.mxu0 0
      %3047 = vmatprep.subr.bf16.mxu0 0
      %3048 = vmatpush2.bf16.msra.mxu0 0
      %3049 = vmatprep.subr.bf16.mxu0 0
      %3050 = vmatpush2.bf16.msra.mxu0 0
      %3051 = vmatprep.subr.bf16.mxu0 0
      %3052 = vmatpush2.bf16.msra.mxu0 0
      %3053 = vmatprep.mubr.bf16.mxu0 0
      %3054 = vmatmul.mubr.bf16.gmra.mxu0 %v2047
      %v3055 = vpop.f32.mrf.mxu0
      %v3056 = vadd.f32 %v2828, %v3055
      %v3057 = vpop.f32.mrf.mxu0
      %v3058 = vpop.f32.mrf.mxu0
      %v3059 = vadd.f32 %v2831, %v3058
      %v3060 = vpop.f32.mrf.mxu0
      %3061 = vmatprep.mubr.bf16.mxu0 0
      %3062 = vmatmul.mubr.bf16.gmra.mxu0 %v2050
      %v3063 = vpop.f32.mrf.mxu0
      %v3064 = vadd.f32 %v2836, %v3063
      %v3065 = vpop.f32.mrf.mxu0
      %v3066 = vpop.f32.mrf.mxu0
      %v3067 = vadd.f32 %v2839, %v3066
      %v3068 = vpop.f32.mrf.mxu0
      %3069 = vmatprep.mubr.bf16.mxu0 0
      %3070 = vmatmul.mubr.bf16.gmra.mxu0 %v2053
      %v3071 = vpop.f32.mrf.mxu0
      %v3072 = vadd.f32 %v2844, %v3071
      %v3073 = vpop.f32.mrf.mxu0
      %v3074 = vpop.f32.mrf.mxu0
      %v3075 = vadd.f32 %v2847, %v3074
      %v3076 = vpop.f32.mrf.mxu0
      %3077 = vmatprep.mubr.bf16.mxu0 0
      %3078 = vmatmul.mubr.bf16.gmra.mxu0 %v2056
      %v3079 = vpop.f32.mrf.mxu0
      %v3080 = vadd.f32 %v2852, %v3079
      %v3081 = vpop.f32.mrf.mxu0
      %v3082 = vpop.f32.mrf.mxu0
      %v3083 = vadd.f32 %v2855, %v3082
      %v3084 = vpop.f32.mrf.mxu0
      %3085 = vmatprep.mubr.bf16.mxu0 0
      %3086 = vmatmul.mubr.bf16.gmra.mxu0 %v2059
      %v3087 = vpop.f32.mrf.mxu0
      %v3088 = vadd.f32 %v2860, %v3087
      %v3089 = vpop.f32.mrf.mxu0
      %v3090 = vpop.f32.mrf.mxu0
      %v3091 = vadd.f32 %v2863, %v3090
      %v3092 = vpop.f32.mrf.mxu0
      %3093 = vmatprep.mubr.bf16.mxu0 0
      %3094 = vmatmul.mubr.bf16.gmra.mxu0 %v2062
      %v3095 = vpop.f32.mrf.mxu0
      %v3096 = vadd.f32 %v2868, %v3095
      %v3097 = vpop.f32.mrf.mxu0
      %v3098 = vpop.f32.mrf.mxu0
      %v3099 = vadd.f32 %v2871, %v3098
      %v3100 = vpop.f32.mrf.mxu0
      %3101 = vmatprep.mubr.bf16.mxu0 0
      %3102 = vmatmul.mubr.bf16.gmra.mxu0 %v2065
      %v3103 = vpop.f32.mrf.mxu0
      %v3104 = vadd.f32 %v2876, %v3103
      %v3105 = vpop.f32.mrf.mxu0
      %v3106 = vpop.f32.mrf.mxu0
      %v3107 = vadd.f32 %v2879, %v3106
      %v3108 = vpop.f32.mrf.mxu0
      %3109 = vmatprep.mubr.bf16.mxu0 0
      %3110 = vmatmul.mubr.bf16.gmra.mxu0 %v2068
      %v3111 = vpop.f32.mrf.mxu0
      %v3112 = vadd.f32 %v2884, %v3111
      %v3113 = vpop.f32.mrf.mxu0
      %v3114 = vpop.f32.mrf.mxu0
      %v3115 = vadd.f32 %v2887, %v3114
      %v3116 = vpop.f32.mrf.mxu0
      %3117 = vmatprep.mubr.bf16.mxu0 0
      %3118 = vmatmul.mubr.bf16.gmra.mxu0 %v2071
      %v3119 = vpop.f32.mrf.mxu0
      %v3120 = vadd.f32 %v2892, %v3119
      %v3121 = vpop.f32.mrf.mxu0
      %v3122 = vpop.f32.mrf.mxu0
      %v3123 = vadd.f32 %v2895, %v3122
      %v3124 = vpop.f32.mrf.mxu0
      %3125 = vmatprep.mubr.bf16.mxu0 0
      %3126 = vmatmul.mubr.bf16.gmra.mxu0 %v2074
      %v3127 = vpop.f32.mrf.mxu0
      %v3128 = vadd.f32 %v2900, %v3127
      %v3129 = vpop.f32.mrf.mxu0
      %v3130 = vpop.f32.mrf.mxu0
      %v3131 = vadd.f32 %v2903, %v3130
      %v3132 = vpop.f32.mrf.mxu0
      %3133 = vmatprep.mubr.bf16.mxu0 0
      %3134 = vmatmul.mubr.bf16.gmra.mxu0 %v2077
      %v3135 = vpop.f32.mrf.mxu0
      %v3136 = vadd.f32 %v2908, %v3135
      %v3137 = vpop.f32.mrf.mxu0
      %v3138 = vpop.f32.mrf.mxu0
      %v3139 = vadd.f32 %v2911, %v3138
      %v3140 = vpop.f32.mrf.mxu0
      %3141 = vmatprep.mubr.bf16.mxu0 0
      %3142 = vmatmul.mubr.bf16.gmra.mxu0 %v2080
      %v3143 = vpop.f32.mrf.mxu0
      %v3144 = vadd.f32 %v2916, %v3143
      %v3145 = vpop.f32.mrf.mxu0
      %v3146 = vpop.f32.mrf.mxu0
      %v3147 = vadd.f32 %v2919, %v3146
      %v3148 = vpop.f32.mrf.mxu0
      %3149 = vmatprep.mubr.bf16.mxu0 0
      %3150 = vmatmul.mubr.bf16.gmra.mxu0 %v2083
      %v3151 = vpop.f32.mrf.mxu0
      %v3152 = vadd.f32 %v2924, %v3151
      %v3153 = vpop.f32.mrf.mxu0
      %v3154 = vpop.f32.mrf.mxu0
      %v3155 = vadd.f32 %v2927, %v3154
      %v3156 = vpop.f32.mrf.mxu0
      %3157 = vmatprep.mubr.bf16.mxu0 0
      %3158 = vmatmul.mubr.bf16.gmra.mxu0 %v2086
      %v3159 = vpop.f32.mrf.mxu0
      %v3160 = vadd.f32 %v2932, %v3159
      %v3161 = vpop.f32.mrf.mxu0
      %v3162 = vpop.f32.mrf.mxu0
      %v3163 = vadd.f32 %v2935, %v3162
      %v3164 = vpop.f32.mrf.mxu0
      %3165 = vmatprep.mubr.bf16.mxu0 0
      %3166 = vmatmul.mubr.bf16.gmra.mxu0 %v2089
      %v3167 = vpop.f32.mrf.mxu0
      %v3168 = vadd.f32 %v2940, %v3167
      %v3169 = vpop.f32.mrf.mxu0
      %v3170 = vpop.f32.mrf.mxu0
      %v3171 = vadd.f32 %v2943, %v3170
      %v3172 = vpop.f32.mrf.mxu0
      %3173 = vmatprep.mubr.bf16.mxu0 0
      %3174 = vmatmul.mubr.bf16.gmra.mxu0 %v2092
      %v3175 = vpop.f32.mrf.mxu0
      %v3176 = vadd.f32 %v2948, %v3175
      %v3177 = vpop.f32.mrf.mxu0
      %v3178 = vpop.f32.mrf.mxu0
      %v3179 = vadd.f32 %v2951, %v3178
      %v3180 = vpop.f32.mrf.mxu0
      %3181 = vmatprep.mubr.bf16.mxu0 0
      %3182 = vmatmul.mubr.bf16.gmra.mxu0 %v2095
      %v3183 = vpop.f32.mrf.mxu0
      %v3184 = vadd.f32 %v2956, %v3183
      %v3185 = vpop.f32.mrf.mxu0
      %v3186 = vpop.f32.mrf.mxu0
      %v3187 = vadd.f32 %v2959, %v3186
      %v3188 = vpop.f32.mrf.mxu0
      %3189 = vmatprep.mubr.bf16.mxu0 0
      %3190 = vmatmul.mubr.bf16.gmra.mxu0 %v2098
      %v3191 = vpop.f32.mrf.mxu0
      %v3192 = vadd.f32 %v2964, %v3191
      %v3193 = vpop.f32.mrf.mxu0
      %v3194 = vpop.f32.mrf.mxu0
      %v3195 = vadd.f32 %v2967, %v3194
      %v3196 = vpop.f32.mrf.mxu0
      %3197 = vmatprep.mubr.bf16.mxu0 0
      %3198 = vmatmul.mubr.bf16.gmra.mxu0 %v2101
      %v3199 = vpop.f32.mrf.mxu0
      %v3200 = vadd.f32 %v2972, %v3199
      %v3201 = vpop.f32.mrf.mxu0
      %v3202 = vpop.f32.mrf.mxu0
      %v3203 = vadd.f32 %v2975, %v3202
      %v3204 = vpop.f32.mrf.mxu0
      %3205 = vmatprep.mubr.bf16.mxu0 0
      %3206 = vmatmul.mubr.bf16.gmra.mxu0 %v2104
      %v3207 = vpop.f32.mrf.mxu0
      %v3208 = vadd.f32 %v2980, %v3207
      %v3209 = vpop.f32.mrf.mxu0
      %v3210 = vpop.f32.mrf.mxu0
      %v3211 = vadd.f32 %v2983, %v3210
      %v3212 = vpop.f32.mrf.mxu0
      %3213 = vmatprep.mubr.bf16.mxu0 0
      %3214 = vmatmul.mubr.bf16.gmra.mxu0 %v2107
      %v3215 = vpop.f32.mrf.mxu0
      %v3216 = vadd.f32 %v2988, %v3215
      %v3217 = vpop.f32.mrf.mxu0
      %v3218 = vpop.f32.mrf.mxu0
      %v3219 = vadd.f32 %v2991, %v3218
      %v3220 = vpop.f32.mrf.mxu0
      %3221 = vmatprep.mubr.bf16.mxu0 0
      %3222 = vmatmul.mubr.bf16.gmra.mxu0 %v2110
      %v3223 = vpop.f32.mrf.mxu0
      %v3224 = vadd.f32 %v2996, %v3223
      %v3225 = vpop.f32.mrf.mxu0
      %v3226 = vpop.f32.mrf.mxu0
      %v3227 = vadd.f32 %v2999, %v3226
      %v3228 = vpop.f32.mrf.mxu0
      %3229 = vmatprep.mubr.bf16.mxu0 0
      %3230 = vmatmul.mubr.bf16.gmra.mxu0 %v2113
      %v3231 = vpop.f32.mrf.mxu0
      %v3232 = vadd.f32 %v3004, %v3231
      %v3233 = vpop.f32.mrf.mxu0
      %v3234 = vpop.f32.mrf.mxu0
      %v3235 = vadd.f32 %v3007, %v3234
      %v3236 = vpop.f32.mrf.mxu0
      %3237 = vmatprep.mubr.bf16.mxu0 0
      %3238 = vmatmul.mubr.bf16.gmra.mxu0 %v2116
      %v3239 = vpop.f32.mrf.mxu0
      %v3240 = vadd.f32 %v3012, %v3239
      %v3241 = vpop.f32.mrf.mxu0
      %v3242 = vpop.f32.mrf.mxu0
      %v3243 = vadd.f32 %v3015, %v3242
      %v3244 = vpop.f32.mrf.mxu0
      %3245 = vdwg.mxu0
      %s3246 = scalar_lea.vmem [#allocation2], 24
      %v3247 = vld [vmem:[%s3246] sm:$0xf]
      %v3248 = vld [vmem:[%s3246 + $0x4] sm:$0xf]
      %v3249 = vld [vmem:[%s3246 + $0x8] sm:$0xf]
      %v3250 = vld [vmem:[%s3246 + $0xc] sm:$0xf]
      %v3251 = vld [vmem:[%s3246 + $0x10] sm:$0xf]
      %v3252 = vld [vmem:[%s3246 + $0x14] sm:$0xf]
      %v3253 = vld [vmem:[%s3246 + $0x18] sm:$0xf]
      %v3254 = vld [vmem:[%s3246 + $0x1c] sm:$0xf]
      %v3255 = vld [vmem:[%s3246 + $0x20] sm:$0xf]
      %v3256 = vld [vmem:[%s3246 + $0x24] sm:$0xf]
      %v3257 = vld [vmem:[%s3246 + $0x28] sm:$0xf]
      %v3258 = vld [vmem:[%s3246 + $0x2c] sm:$0xf]
      %v3259 = vld [vmem:[%s3246 + $0x30] sm:$0xf]
      %v3260 = vld [vmem:[%s3246 + $0x34] sm:$0xf]
      %v3261 = vld [vmem:[%s3246 + $0x38] sm:$0xf]
      %v3262 = vld [vmem:[%s3246 + $0x3c] sm:$0xf]
      %v3263 = vld [vmem:[%s3246 + $0x40] sm:$0xf]
      %v3264 = vld [vmem:[%s3246 + $0x44] sm:$0xf]
      %v3265 = vld [vmem:[%s3246 + $0x48] sm:$0xf]
      %v3266 = vld [vmem:[%s3246 + $0x4c] sm:$0xf]
      %v3267 = vld [vmem:[%s3246 + $0x50] sm:$0xf]
      %v3268 = vld [vmem:[%s3246 + $0x54] sm:$0xf]
      %v3269 = vld [vmem:[%s3246 + $0x58] sm:$0xf]
      %v3270 = vld [vmem:[%s3246 + $0x5c] sm:$0xf]
      %v3271 = vld [vmem:[%s3246 + $0x60] sm:$0xf]
      %v3272 = vld [vmem:[%s3246 + $0x64] sm:$0xf]
      %v3273 = vld [vmem:[%s3246 + $0x68] sm:$0xf]
      %v3274 = vld [vmem:[%s3246 + $0x6c] sm:$0xf]
      %v3275 = vld [vmem:[%s3246 + $0x70] sm:$0xf]
      %v3276 = vld [vmem:[%s3246 + $0x74] sm:$0xf]
      %v3277 = vld [vmem:[%s3246 + $0x78] sm:$0xf]
      %v3278 = vld [vmem:[%s3246 + $0x7c] sm:$0xf]
      %v3279 = vld [vmem:[%s3246 + $0x80] sm:$0xf]
      %v3280 = vld [vmem:[%s3246 + $0x84] sm:$0xf]
      %v3281 = vld [vmem:[%s3246 + $0x88] sm:$0xf]
      %v3282 = vld [vmem:[%s3246 + $0x8c] sm:$0xf]
      %v3283 = vld [vmem:[%s3246 + $0x90] sm:$0xf]
      %v3284 = vld [vmem:[%s3246 + $0x94] sm:$0xf]
      %v3285 = vld [vmem:[%s3246 + $0x98] sm:$0xf]
      %v3286 = vld [vmem:[%s3246 + $0x9c] sm:$0xf]
      %v3287 = vld [vmem:[%s3246 + $0xa0] sm:$0xf]
      %v3288 = vld [vmem:[%s3246 + $0xa4] sm:$0xf]
      %v3289 = vld [vmem:[%s3246 + $0xa8] sm:$0xf]
      %v3290 = vld [vmem:[%s3246 + $0xac] sm:$0xf]
      %v3291 = vld [vmem:[%s3246 + $0xb0] sm:$0xf]
      %v3292 = vld [vmem:[%s3246 + $0xb4] sm:$0xf]
      %v3293 = vld [vmem:[%s3246 + $0xb8] sm:$0xf]
      %v3294 = vld [vmem:[%s3246 + $0xbc] sm:$0xf]
      %s3295 = scalar_lea.vmem %s4, 12
      %v3296 = vld [vmem:[%s3295] sm:$0x3]
      %v3345 = vunpack.c.l.b16 %v3247
      %v3346 = vunpack.c.l.b16 %v3248
      %v3347 = vunpack.c.l.b16 %v3249
      %v3348 = vunpack.c.l.b16 %v3250
      %v3349 = vunpack.c.l.b16 %v3251
      %v3350 = vunpack.c.l.b16 %v3252
      %v3351 = vunpack.c.l.b16 %v3253
      %v3352 = vunpack.c.l.b16 %v3254
      %v3353 = vunpack.c.l.b16 %v3255
      %v3354 = vunpack.c.l.b16 %v3256
      %v3355 = vunpack.c.l.b16 %v3257
      %v3356 = vunpack.c.l.b16 %v3258
      %v3357 = vunpack.c.l.b16 %v3259
      %v3358 = vunpack.c.l.b16 %v3260
      %v3359 = vunpack.c.l.b16 %v3261
      %v3360 = vunpack.c.l.b16 %v3262
      %v3361 = vunpack.c.l.b16 %v3263
      %v3362 = vunpack.c.l.b16 %v3264
      %v3363 = vunpack.c.l.b16 %v3265
      %v3364 = vunpack.c.l.b16 %v3266
      %v3365 = vunpack.c.l.b16 %v3267
      %v3366 = vunpack.c.l.b16 %v3268
      %v3367 = vunpack.c.l.b16 %v3269
      %v3368 = vunpack.c.l.b16 %v3270
      %v3369 = vunpack.c.l.b16 %v3271
      %v3370 = vunpack.c.l.b16 %v3272
      %v3371 = vunpack.c.l.b16 %v3273
      %v3372 = vunpack.c.l.b16 %v3274
      %v3373 = vunpack.c.l.b16 %v3275
      %v3374 = vunpack.c.l.b16 %v3276
      %v3375 = vunpack.c.l.b16 %v3277
      %v3376 = vunpack.c.l.b16 %v3278
      %v3377 = vunpack.c.l.b16 %v3279
      %v3378 = vunpack.c.l.b16 %v3280
      %v3379 = vunpack.c.l.b16 %v3281
      %v3380 = vunpack.c.l.b16 %v3282
      %v3381 = vunpack.c.l.b16 %v3283
      %v3382 = vunpack.c.l.b16 %v3284
      %v3383 = vunpack.c.l.b16 %v3285
      %v3384 = vunpack.c.l.b16 %v3286
      %v3385 = vunpack.c.l.b16 %v3287
      %v3386 = vunpack.c.l.b16 %v3288
      %v3387 = vunpack.c.l.b16 %v3289
      %v3388 = vunpack.c.l.b16 %v3290
      %v3389 = vunpack.c.l.b16 %v3291
      %v3390 = vunpack.c.l.b16 %v3292
      %v3391 = vunpack.c.l.b16 %v3293
      %v3392 = vunpack.c.l.b16 %v3294
      %v3393 = vpack.c.b16 %v3346, %v3345
      %v3394 = vpack.c.b16 %v3348, %v3347
      %v3395 = vpack.c.b16 %v3350, %v3349
      %v3396 = vpack.c.b16 %v3352, %v3351
      %v3397 = vpack.c.b16 %v3354, %v3353
      %v3398 = vpack.c.b16 %v3356, %v3355
      %v3399 = vpack.c.b16 %v3358, %v3357
      %v3400 = vpack.c.b16 %v3360, %v3359
      %v3401 = vpack.c.b16 %v3362, %v3361
      %v3402 = vpack.c.b16 %v3364, %v3363
      %v3403 = vpack.c.b16 %v3366, %v3365
      %v3404 = vpack.c.b16 %v3368, %v3367
      %v3405 = vpack.c.b16 %v3370, %v3369
      %v3406 = vpack.c.b16 %v3372, %v3371
      %v3407 = vpack.c.b16 %v3374, %v3373
      %v3408 = vpack.c.b16 %v3376, %v3375
      %v3409 = vpack.c.b16 %v3378, %v3377
      %v3410 = vpack.c.b16 %v3380, %v3379
      %v3411 = vpack.c.b16 %v3382, %v3381
      %v3412 = vpack.c.b16 %v3384, %v3383
      %v3413 = vpack.c.b16 %v3386, %v3385
      %v3414 = vpack.c.b16 %v3388, %v3387
      %v3415 = vpack.c.b16 %v3390, %v3389
      %v3416 = vpack.c.b16 %v3392, %v3391
      %v3418 = vsel %vm1640, %v3393, 0
      %v3421 = vsel %vm1640, %v3394, 0
      %v3424 = vsel %vm1640, %v3395, 0
      %v3427 = vsel %vm1640, %v3396, 0
      %v3430 = vsel %vm1640, %v3397, 0
      %v3433 = vsel %vm1640, %v3398, 0
      %v3436 = vsel %vm1640, %v3399, 0
      %v3439 = vsel %vm1640, %v3400, 0
      %v3442 = vsel %vm1640, %v3401, 0
      %v3445 = vsel %vm1640, %v3402, 0
      %v3448 = vsel %vm1640, %v3403, 0
      %v3451 = vsel %vm1640, %v3404, 0
      %v3454 = vsel %vm1640, %v3405, 0
      %v3457 = vsel %vm1640, %v3406, 0
      %v3460 = vsel %vm1640, %v3407, 0
      %v3463 = vsel %vm1640, %v3408, 0
      %v3466 = vsel %vm1640, %v3409, 0
      %v3469 = vsel %vm1640, %v3410, 0
      %v3472 = vsel %vm1640, %v3411, 0
      %v3475 = vsel %vm1640, %v3412, 0
      %v3478 = vsel %vm1640, %v3413, 0
      %v3481 = vsel %vm1640, %v3414, 0
      %v3484 = vsel %vm1640, %v3415, 0
      %v3487 = vsel %vm1640, %v3416, 0
      %v3490 = vsel %vm1713, %v3296, 0
      %3492 = vmatprep.subr.bf16.mxu0 0
      %3493 = vmatpush1.bf16.msra.mxu0 0
      %3494 = vmatprep.subr.bf16.mxu0 0
      %3495 = vmatpush1.bf16.msra.mxu0 0
      %3496 = vmatprep.subr.bf16.mxu0 0
      %3497 = vmatpush1.bf16.msra.mxu0 0
      %3498 = vmatprep.subr.bf16.mxu0 0
      %3499 = vmatpush1.bf16.msra.mxu0 0
      %3500 = vmatprep.subr.bf16.mxu0 0
      %3501 = vmatpush1.bf16.msra.mxu0 0
      %3502 = vmatprep.subr.bf16.mxu0 0
      %3503 = vmatpush1.bf16.msra.mxu0 0
      %3504 = vmatprep.subr.bf16.mxu0 0
      %3505 = vmatpush1.bf16.msra.mxu0 0
      %3506 = vmatprep.subr.bf16.mxu0 0
      %3507 = vmatpush1.bf16.msra.mxu0 %v3490
      %3508 = vmatprep.subr.bf16.mxu0 0
      %3509 = vmatpush2.bf16.msra.mxu0 0
      %3510 = vmatprep.subr.bf16.mxu0 0
      %3511 = vmatpush2.bf16.msra.mxu0 0
      %3512 = vmatprep.subr.bf16.mxu0 0
      %3513 = vmatpush2.bf16.msra.mxu0 0
      %3514 = vmatprep.subr.bf16.mxu0 0
      %3515 = vmatpush2.bf16.msra.mxu0 0
      %3516 = vmatprep.subr.bf16.mxu0 0
      %3517 = vmatpush2.bf16.msra.mxu0 0
      %3518 = vmatprep.subr.bf16.mxu0 0
      %3519 = vmatpush2.bf16.msra.mxu0 0
      %3520 = vmatprep.subr.bf16.mxu0 0
      %3521 = vmatpush2.bf16.msra.mxu0 0
      %3522 = vmatprep.subr.bf16.mxu0 0
      %3523 = vmatpush2.bf16.msra.mxu0 0
      %3524 = vmatprep.mubr.bf16.mxu0 0
      %3525 = vmatmul.mubr.bf16.gmra.mxu0 %v3418
      %v3526 = vpop.f32.mrf.mxu0
      %v3527 = vadd.f32 0.0, %v3526
      %v3528 = vpop.f32.mrf.mxu0
      %v3529 = vpop.f32.mrf.mxu0
      %v3530 = vadd.f32 0.0, %v3529
      %v3531 = vpop.f32.mrf.mxu0
      %3532 = vmatprep.mubr.bf16.mxu0 0
      %3533 = vmatmul.mubr.bf16.gmra.mxu0 %v3421
      %v3534 = vpop.f32.mrf.mxu0
      %v3535 = vpop.f32.mrf.mxu0
      %v3536 = vpop.f32.mrf.mxu0
      %v3537 = vadd.f32 0.0, %v3536
      %v3538 = vpop.f32.mrf.mxu0
      %3539 = vmatprep.mubr.bf16.mxu0 0
      %3540 = vmatmul.mubr.bf16.gmra.mxu0 %v3424
      %v3541 = vpop.f32.mrf.mxu0
      %v3542 = vadd.f32 0.0, %v3541
      %v3543 = vpop.f32.mrf.mxu0
      %v3544 = vpop.f32.mrf.mxu0
      %v3545 = vpop.f32.mrf.mxu0
      %3546 = vmatprep.mubr.bf16.mxu0 0
      %3547 = vmatmul.mubr.bf16.gmra.mxu0 %v3427
      %v3548 = vpop.f32.mrf.mxu0
      %v3549 = vadd.f32 0.0, %v3548
      %v3550 = vpop.f32.mrf.mxu0
      %v3551 = vpop.f32.mrf.mxu0
      %v3552 = vadd.f32 0.0, %v3551
      %v3553 = vpop.f32.mrf.mxu0
      %3554 = vmatprep.mubr.bf16.mxu0 0
      %3555 = vmatmul.mubr.bf16.gmra.mxu0 %v3430
      %v3556 = vpop.f32.mrf.mxu0
      %v3557 = vpop.f32.mrf.mxu0
      %v3558 = vpop.f32.mrf.mxu0
      %v3559 = vadd.f32 0.0, %v3558
      %v3560 = vpop.f32.mrf.mxu0
      %3561 = vmatprep.mubr.bf16.mxu0 0
      %3562 = vmatmul.mubr.bf16.gmra.mxu0 %v3433
      %v3563 = vpop.f32.mrf.mxu0
      %v3564 = vadd.f32 0.0, %v3563
      %v3565 = vpop.f32.mrf.mxu0
      %v3566 = vpop.f32.mrf.mxu0
      %v3567 = vpop.f32.mrf.mxu0
      %3568 = vmatprep.mubr.bf16.mxu0 0
      %3569 = vmatmul.mubr.bf16.gmra.mxu0 %v3436
      %v3570 = vpop.f32.mrf.mxu0
      %v3571 = vadd.f32 0.0, %v3570
      %v3572 = vpop.f32.mrf.mxu0
      %v3573 = vpop.f32.mrf.mxu0
      %v3574 = vadd.f32 0.0, %v3573
      %v3575 = vpop.f32.mrf.mxu0
      %3576 = vmatprep.mubr.bf16.mxu0 0
      %3577 = vmatmul.mubr.bf16.gmra.mxu0 %v3439
      %v3578 = vpop.f32.mrf.mxu0
      %v3579 = vpop.f32.mrf.mxu0
      %v3580 = vpop.f32.mrf.mxu0
      %v3581 = vadd.f32 0.0, %v3580
      %v3582 = vpop.f32.mrf.mxu0
      %3583 = vmatprep.mubr.bf16.mxu0 0
      %3584 = vmatmul.mubr.bf16.gmra.mxu0 %v3442
      %v3585 = vpop.f32.mrf.mxu0
      %v3586 = vadd.f32 0.0, %v3585
      %v3587 = vpop.f32.mrf.mxu0
      %v3588 = vpop.f32.mrf.mxu0
      %v3589 = vpop.f32.mrf.mxu0
      %3590 = vmatprep.mubr.bf16.mxu0 0
      %3591 = vmatmul.mubr.bf16.gmra.mxu0 %v3445
      %v3592 = vpop.f32.mrf.mxu0
      %v3593 = vadd.f32 0.0, %v3592
      %v3594 = vpop.f32.mrf.mxu0
      %v3595 = vpop.f32.mrf.mxu0
      %v3596 = vadd.f32 0.0, %v3595
      %v3597 = vpop.f32.mrf.mxu0
      %3598 = vmatprep.mubr.bf16.mxu0 0
      %3599 = vmatmul.mubr.bf16.gmra.mxu0 %v3448
      %v3600 = vpop.f32.mrf.mxu0
      %v3601 = vpop.f32.mrf.mxu0
      %v3602 = vpop.f32.mrf.mxu0
      %v3603 = vadd.f32 0.0, %v3602
      %v3604 = vpop.f32.mrf.mxu0
      %3605 = vmatprep.mubr.bf16.mxu0 0
      %3606 = vmatmul.mubr.bf16.gmra.mxu0 %v3451
      %v3607 = vpop.f32.mrf.mxu0
      %v3608 = vadd.f32 0.0, %v3607
      %v3609 = vpop.f32.mrf.mxu0
      %v3610 = vpop.f32.mrf.mxu0
      %v3611 = vpop.f32.mrf.mxu0
      %3612 = vmatprep.mubr.bf16.mxu0 0
      %3613 = vmatmul.mubr.bf16.gmra.mxu0 %v3454
      %v3614 = vpop.f32.mrf.mxu0
      %v3615 = vadd.f32 0.0, %v3614
      %v3616 = vpop.f32.mrf.mxu0
      %v3617 = vpop.f32.mrf.mxu0
      %v3618 = vadd.f32 0.0, %v3617
      %v3619 = vpop.f32.mrf.mxu0
      %3620 = vmatprep.mubr.bf16.mxu0 0
      %3621 = vmatmul.mubr.bf16.gmra.mxu0 %v3457
      %v3622 = vpop.f32.mrf.mxu0
      %v3623 = vpop.f32.mrf.mxu0
      %v3624 = vpop.f32.mrf.mxu0
      %v3625 = vadd.f32 0.0, %v3624
      %v3626 = vpop.f32.mrf.mxu0
      %3627 = vmatprep.mubr.bf16.mxu0 0
      %3628 = vmatmul.mubr.bf16.gmra.mxu0 %v3460
      %v3629 = vpop.f32.mrf.mxu0
      %v3630 = vadd.f32 0.0, %v3629
      %v3631 = vpop.f32.mrf.mxu0
      %v3632 = vpop.f32.mrf.mxu0
      %v3633 = vpop.f32.mrf.mxu0
      %3634 = vmatprep.mubr.bf16.mxu0 0
      %3635 = vmatmul.mubr.bf16.gmra.mxu0 %v3463
      %v3636 = vpop.f32.mrf.mxu0
      %v3637 = vadd.f32 0.0, %v3636
      %v3638 = vpop.f32.mrf.mxu0
      %v3639 = vpop.f32.mrf.mxu0
      %v3640 = vadd.f32 0.0, %v3639
      %v3641 = vpop.f32.mrf.mxu0
      %3642 = vmatprep.mubr.bf16.mxu0 0
      %3643 = vmatmul.mubr.bf16.gmra.mxu0 %v3466
      %v3644 = vpop.f32.mrf.mxu0
      %v3645 = vpop.f32.mrf.mxu0
      %v3646 = vpop.f32.mrf.mxu0
      %v3647 = vadd.f32 0.0, %v3646
      %v3648 = vpop.f32.mrf.mxu0
      %3649 = vmatprep.mubr.bf16.mxu0 0
      %3650 = vmatmul.mubr.bf16.gmra.mxu0 %v3469
      %v3651 = vpop.f32.mrf.mxu0
      %v3652 = vadd.f32 0.0, %v3651
      %v3653 = vpop.f32.mrf.mxu0
      %v3654 = vpop.f32.mrf.mxu0
      %v3655 = vpop.f32.mrf.mxu0
      %3656 = vmatprep.mubr.bf16.mxu0 0
      %3657 = vmatmul.mubr.bf16.gmra.mxu0 %v3472
      %v3658 = vpop.f32.mrf.mxu0
      %v3659 = vadd.f32 0.0, %v3658
      %v3660 = vpop.f32.mrf.mxu0
      %v3661 = vpop.f32.mrf.mxu0
      %v3662 = vadd.f32 0.0, %v3661
      %v3663 = vpop.f32.mrf.mxu0
      %3664 = vmatprep.mubr.bf16.mxu0 0
      %3665 = vmatmul.mubr.bf16.gmra.mxu0 %v3475
      %v3666 = vpop.f32.mrf.mxu0
      %v3667 = vpop.f32.mrf.mxu0
      %v3668 = vpop.f32.mrf.mxu0
      %v3669 = vadd.f32 0.0, %v3668
      %v3670 = vpop.f32.mrf.mxu0
      %3671 = vmatprep.mubr.bf16.mxu0 0
      %3672 = vmatmul.mubr.bf16.gmra.mxu0 %v3478
      %v3673 = vpop.f32.mrf.mxu0
      %v3674 = vadd.f32 0.0, %v3673
      %v3675 = vpop.f32.mrf.mxu0
      %v3676 = vpop.f32.mrf.mxu0
      %v3677 = vpop.f32.mrf.mxu0
      %3678 = vmatprep.mubr.bf16.mxu0 0
      %3679 = vmatmul.mubr.bf16.gmra.mxu0 %v3481
      %v3680 = vpop.f32.mrf.mxu0
      %v3681 = vadd.f32 0.0, %v3680
      %v3682 = vpop.f32.mrf.mxu0
      %v3683 = vpop.f32.mrf.mxu0
      %v3684 = vadd.f32 0.0, %v3683
      %v3685 = vpop.f32.mrf.mxu0
      %3686 = vmatprep.mubr.bf16.mxu0 0
      %3687 = vmatmul.mubr.bf16.gmra.mxu0 %v3484
      %v3688 = vpop.f32.mrf.mxu0
      %v3689 = vpop.f32.mrf.mxu0
      %v3690 = vpop.f32.mrf.mxu0
      %v3691 = vadd.f32 0.0, %v3690
      %v3692 = vpop.f32.mrf.mxu0
      %3693 = vmatprep.mubr.bf16.mxu0 0
      %3694 = vmatmul.mubr.bf16.gmra.mxu0 %v3487
      %v3695 = vpop.f32.mrf.mxu0
      %v3696 = vadd.f32 0.0, %v3695
      %v3697 = vpop.f32.mrf.mxu0
      %v3698 = vpop.f32.mrf.mxu0
      %v3699 = vpop.f32.mrf.mxu0
      %3700 = vdwg.mxu0
      %v3701 = vadd.f32 %v2156, %v3527
      %v3702 = vadd.f32 %v2159, %v3530
      %v3703 = vadd.f32 %v2166, %v3537
      %v3704 = vadd.f32 %v2171, %v3542
      %v3705 = vadd.f32 %v2178, %v3549
      %v3706 = vadd.f32 %v2181, %v3552
      %v3707 = vadd.f32 %v2188, %v3559
      %v3708 = vadd.f32 %v2193, %v3564
      %v3709 = vadd.f32 %v2200, %v3571
      %v3710 = vadd.f32 %v2203, %v3574
      %v3711 = vadd.f32 %v2210, %v3581
      %v3712 = vadd.f32 %v2215, %v3586
      %v3713 = vadd.f32 %v2222, %v3593
      %v3714 = vadd.f32 %v2225, %v3596
      %v3715 = vadd.f32 %v2232, %v3603
      %v3716 = vadd.f32 %v2237, %v3608
      %v3717 = vadd.f32 %v2244, %v3615
      %v3718 = vadd.f32 %v2247, %v3618
      %v3719 = vadd.f32 %v2254, %v3625
      %v3720 = vadd.f32 %v2259, %v3630
      %v3721 = vadd.f32 %v2266, %v3637
      %v3722 = vadd.f32 %v2269, %v3640
      %v3723 = vadd.f32 %v2276, %v3647
      %v3724 = vadd.f32 %v2281, %v3652
      %v3725 = vadd.f32 %v2288, %v3659
      %v3726 = vadd.f32 %v2291, %v3662
      %v3727 = vadd.f32 %v2298, %v3669
      %v3728 = vadd.f32 %v2303, %v3674
      %v3729 = vadd.f32 %v2310, %v3681
      %v3730 = vadd.f32 %v2313, %v3684
      %v3731 = vadd.f32 %v2320, %v3691
      %v3732 = vadd.f32 %v2325, %v3696
      %s3733 = scalar_lea.vmem %s4, 14
      %v3734 = vld [vmem:[%s3733] sm:$0x3]
      %v3736 = vsel %vm1713, %v3734, 0
      %3738 = vmatprep.subr.bf16.mxu0 0
      %3739 = vmatpush1.bf16.msra.mxu0 0
      %3740 = vmatprep.subr.bf16.mxu0 0
      %3741 = vmatpush1.bf16.msra.mxu0 0
      %3742 = vmatprep.subr.bf16.mxu0 0
      %3743 = vmatpush1.bf16.msra.mxu0 0
      %3744 = vmatprep.subr.bf16.mxu0 0
      %3745 = vmatpush1.bf16.msra.mxu0 0
      %3746 = vmatprep.subr.bf16.mxu0 0
      %3747 = vmatpush1.bf16.msra.mxu0 0
      %3748 = vmatprep.subr.bf16.mxu0 0
      %3749 = vmatpush1.bf16.msra.mxu0 0
      %3750 = vmatprep.subr.bf16.mxu0 0
      %3751 = vmatpush1.bf16.msra.mxu0 0
      %3752 = vmatprep.subr.bf16.mxu0 0
      %3753 = vmatpush1.bf16.msra.mxu0 %v3736
      %3754 = vmatprep.subr.bf16.mxu0 0
      %3755 = vmatpush2.bf16.msra.mxu0 0
      %3756 = vmatprep.subr.bf16.mxu0 0
      %3757 = vmatpush2.bf16.msra.mxu0 0
      %3758 = vmatprep.subr.bf16.mxu0 0
      %3759 = vmatpush2.bf16.msra.mxu0 0
      %3760 = vmatprep.subr.bf16.mxu0 0
      %3761 = vmatpush2.bf16.msra.mxu0 0
      %3762 = vmatprep.subr.bf16.mxu0 0
      %3763 = vmatpush2.bf16.msra.mxu0 0
      %3764 = vmatprep.subr.bf16.mxu0 0
      %3765 = vmatpush2.bf16.msra.mxu0 0
      %3766 = vmatprep.subr.bf16.mxu0 0
      %3767 = vmatpush2.bf16.msra.mxu0 0
      %3768 = vmatprep.subr.bf16.mxu0 0
      %3769 = vmatpush2.bf16.msra.mxu0 0
      %3770 = vmatprep.mubr.bf16.mxu0 0
      %3771 = vmatmul.mubr.bf16.gmra.mxu0 %v3418
      %v3772 = vpop.f32.mrf.mxu0
      %v3773 = vadd.f32 0.0, %v3772
      %v3774 = vpop.f32.mrf.mxu0
      %v3775 = vpop.f32.mrf.mxu0
      %v3776 = vadd.f32 0.0, %v3775
      %v3777 = vpop.f32.mrf.mxu0
      %3778 = vmatprep.mubr.bf16.mxu0 0
      %3779 = vmatmul.mubr.bf16.gmra.mxu0 %v3421
      %v3780 = vpop.f32.mrf.mxu0
      %v3781 = vadd.f32 0.0, %v3780
      %v3782 = vpop.f32.mrf.mxu0
      %v3783 = vpop.f32.mrf.mxu0
      %v3784 = vadd.f32 0.0, %v3783
      %v3785 = vpop.f32.mrf.mxu0
      %3786 = vmatprep.mubr.bf16.mxu0 0
      %3787 = vmatmul.mubr.bf16.gmra.mxu0 %v3424
      %v3788 = vpop.f32.mrf.mxu0
      %v3789 = vadd.f32 0.0, %v3788
      %v3790 = vpop.f32.mrf.mxu0
      %v3791 = vpop.f32.mrf.mxu0
      %v3792 = vadd.f32 0.0, %v3791
      %v3793 = vpop.f32.mrf.mxu0
      %3794 = vmatprep.mubr.bf16.mxu0 0
      %3795 = vmatmul.mubr.bf16.gmra.mxu0 %v3427
      %v3796 = vpop.f32.mrf.mxu0
      %v3797 = vadd.f32 0.0, %v3796
      %v3798 = vpop.f32.mrf.mxu0
      %v3799 = vpop.f32.mrf.mxu0
      %v3800 = vadd.f32 0.0, %v3799
      %v3801 = vpop.f32.mrf.mxu0
      %3802 = vmatprep.mubr.bf16.mxu0 0
      %3803 = vmatmul.mubr.bf16.gmra.mxu0 %v3430
      %v3804 = vpop.f32.mrf.mxu0
      %v3805 = vadd.f32 0.0, %v3804
      %v3806 = vpop.f32.mrf.mxu0
      %v3807 = vpop.f32.mrf.mxu0
      %v3808 = vadd.f32 0.0, %v3807
      %v3809 = vpop.f32.mrf.mxu0
      %3810 = vmatprep.mubr.bf16.mxu0 0
      %3811 = vmatmul.mubr.bf16.gmra.mxu0 %v3433
      %v3812 = vpop.f32.mrf.mxu0
      %v3813 = vadd.f32 0.0, %v3812
      %v3814 = vpop.f32.mrf.mxu0
      %v3815 = vpop.f32.mrf.mxu0
      %v3816 = vadd.f32 0.0, %v3815
      %v3817 = vpop.f32.mrf.mxu0
      %3818 = vmatprep.mubr.bf16.mxu0 0
      %3819 = vmatmul.mubr.bf16.gmra.mxu0 %v3436
      %v3820 = vpop.f32.mrf.mxu0
      %v3821 = vadd.f32 0.0, %v3820
      %v3822 = vpop.f32.mrf.mxu0
      %v3823 = vpop.f32.mrf.mxu0
      %v3824 = vadd.f32 0.0, %v3823
      %v3825 = vpop.f32.mrf.mxu0
      %3826 = vmatprep.mubr.bf16.mxu0 0
      %3827 = vmatmul.mubr.bf16.gmra.mxu0 %v3439
      %v3828 = vpop.f32.mrf.mxu0
      %v3829 = vadd.f32 0.0, %v3828
      %v3830 = vpop.f32.mrf.mxu0
      %v3831 = vpop.f32.mrf.mxu0
      %v3832 = vadd.f32 0.0, %v3831
      %v3833 = vpop.f32.mrf.mxu0
      %3834 = vmatprep.mubr.bf16.mxu0 0
      %3835 = vmatmul.mubr.bf16.gmra.mxu0 %v3442
      %v3836 = vpop.f32.mrf.mxu0
      %v3837 = vadd.f32 0.0, %v3836
      %v3838 = vpop.f32.mrf.mxu0
      %v3839 = vpop.f32.mrf.mxu0
      %v3840 = vadd.f32 0.0, %v3839
      %v3841 = vpop.f32.mrf.mxu0
      %3842 = vmatprep.mubr.bf16.mxu0 0
      %3843 = vmatmul.mubr.bf16.gmra.mxu0 %v3445
      %v3844 = vpop.f32.mrf.mxu0
      %v3845 = vadd.f32 0.0, %v3844
      %v3846 = vpop.f32.mrf.mxu0
      %v3847 = vpop.f32.mrf.mxu0
      %v3848 = vadd.f32 0.0, %v3847
      %v3849 = vpop.f32.mrf.mxu0
      %3850 = vmatprep.mubr.bf16.mxu0 0
      %3851 = vmatmul.mubr.bf16.gmra.mxu0 %v3448
      %v3852 = vpop.f32.mrf.mxu0
      %v3853 = vadd.f32 0.0, %v3852
      %v3854 = vpop.f32.mrf.mxu0
      %v3855 = vpop.f32.mrf.mxu0
      %v3856 = vadd.f32 0.0, %v3855
      %v3857 = vpop.f32.mrf.mxu0
      %3858 = vmatprep.mubr.bf16.mxu0 0
      %3859 = vmatmul.mubr.bf16.gmra.mxu0 %v3451
      %v3860 = vpop.f32.mrf.mxu0
      %v3861 = vadd.f32 0.0, %v3860
      %v3862 = vpop.f32.mrf.mxu0
      %v3863 = vpop.f32.mrf.mxu0
      %v3864 = vadd.f32 0.0, %v3863
      %v3865 = vpop.f32.mrf.mxu0
      %3866 = vmatprep.mubr.bf16.mxu0 0
      %3867 = vmatmul.mubr.bf16.gmra.mxu0 %v3454
      %v3868 = vpop.f32.mrf.mxu0
      %v3869 = vadd.f32 0.0, %v3868
      %v3870 = vpop.f32.mrf.mxu0
      %v3871 = vpop.f32.mrf.mxu0
      %v3872 = vadd.f32 0.0, %v3871
      %v3873 = vpop.f32.mrf.mxu0
      %3874 = vmatprep.mubr.bf16.mxu0 0
      %3875 = vmatmul.mubr.bf16.gmra.mxu0 %v3457
      %v3876 = vpop.f32.mrf.mxu0
      %v3877 = vadd.f32 0.0, %v3876
      %v3878 = vpop.f32.mrf.mxu0
      %v3879 = vpop.f32.mrf.mxu0
      %v3880 = vadd.f32 0.0, %v3879
      %v3881 = vpop.f32.mrf.mxu0
      %3882 = vmatprep.mubr.bf16.mxu0 0
      %3883 = vmatmul.mubr.bf16.gmra.mxu0 %v3460
      %v3884 = vpop.f32.mrf.mxu0
      %v3885 = vadd.f32 0.0, %v3884
      %v3886 = vpop.f32.mrf.mxu0
      %v3887 = vpop.f32.mrf.mxu0
      %v3888 = vadd.f32 0.0, %v3887
      %v3889 = vpop.f32.mrf.mxu0
      %3890 = vmatprep.mubr.bf16.mxu0 0
      %3891 = vmatmul.mubr.bf16.gmra.mxu0 %v3463
      %v3892 = vpop.f32.mrf.mxu0
      %v3893 = vadd.f32 0.0, %v3892
      %v3894 = vpop.f32.mrf.mxu0
      %v3895 = vpop.f32.mrf.mxu0
      %v3896 = vadd.f32 0.0, %v3895
      %v3897 = vpop.f32.mrf.mxu0
      %3898 = vmatprep.mubr.bf16.mxu0 0
      %3899 = vmatmul.mubr.bf16.gmra.mxu0 %v3466
      %v3900 = vpop.f32.mrf.mxu0
      %v3901 = vadd.f32 0.0, %v3900
      %v3902 = vpop.f32.mrf.mxu0
      %v3903 = vpop.f32.mrf.mxu0
      %v3904 = vadd.f32 0.0, %v3903
      %v3905 = vpop.f32.mrf.mxu0
      %3906 = vmatprep.mubr.bf16.mxu0 0
      %3907 = vmatmul.mubr.bf16.gmra.mxu0 %v3469
      %v3908 = vpop.f32.mrf.mxu0
      %v3909 = vadd.f32 0.0, %v3908
      %v3910 = vpop.f32.mrf.mxu0
      %v3911 = vpop.f32.mrf.mxu0
      %v3912 = vadd.f32 0.0, %v3911
      %v3913 = vpop.f32.mrf.mxu0
      %3914 = vmatprep.mubr.bf16.mxu0 0
      %3915 = vmatmul.mubr.bf16.gmra.mxu0 %v3472
      %v3916 = vpop.f32.mrf.mxu0
      %v3917 = vadd.f32 0.0, %v3916
      %v3918 = vpop.f32.mrf.mxu0
      %v3919 = vpop.f32.mrf.mxu0
      %v3920 = vadd.f32 0.0, %v3919
      %v3921 = vpop.f32.mrf.mxu0
      %3922 = vmatprep.mubr.bf16.mxu0 0
      %3923 = vmatmul.mubr.bf16.gmra.mxu0 %v3475
      %v3924 = vpop.f32.mrf.mxu0
      %v3925 = vadd.f32 0.0, %v3924
      %v3926 = vpop.f32.mrf.mxu0
      %v3927 = vpop.f32.mrf.mxu0
      %v3928 = vadd.f32 0.0, %v3927
      %v3929 = vpop.f32.mrf.mxu0
      %3930 = vmatprep.mubr.bf16.mxu0 0
      %3931 = vmatmul.mubr.bf16.gmra.mxu0 %v3478
      %v3932 = vpop.f32.mrf.mxu0
      %v3933 = vadd.f32 0.0, %v3932
      %v3934 = vpop.f32.mrf.mxu0
      %v3935 = vpop.f32.mrf.mxu0
      %v3936 = vadd.f32 0.0, %v3935
      %v3937 = vpop.f32.mrf.mxu0
      %3938 = vmatprep.mubr.bf16.mxu0 0
      %3939 = vmatmul.mubr.bf16.gmra.mxu0 %v3481
      %v3940 = vpop.f32.mrf.mxu0
      %v3941 = vadd.f32 0.0, %v3940
      %v3942 = vpop.f32.mrf.mxu0
      %v3943 = vpop.f32.mrf.mxu0
      %v3944 = vadd.f32 0.0, %v3943
      %v3945 = vpop.f32.mrf.mxu0
      %3946 = vmatprep.mubr.bf16.mxu0 0
      %3947 = vmatmul.mubr.bf16.gmra.mxu0 %v3484
      %v3948 = vpop.f32.mrf.mxu0
      %v3949 = vadd.f32 0.0, %v3948
      %v3950 = vpop.f32.mrf.mxu0
      %v3951 = vpop.f32.mrf.mxu0
      %v3952 = vadd.f32 0.0, %v3951
      %v3953 = vpop.f32.mrf.mxu0
      %3954 = vmatprep.mubr.bf16.mxu0 0
      %3955 = vmatmul.mubr.bf16.gmra.mxu0 %v3487
      %v3956 = vpop.f32.mrf.mxu0
      %v3957 = vadd.f32 0.0, %v3956
      %v3958 = vpop.f32.mrf.mxu0
      %v3959 = vpop.f32.mrf.mxu0
      %v3960 = vadd.f32 0.0, %v3959
      %v3961 = vpop.f32.mrf.mxu0
      %3962 = vdwg.mxu0
      %v3963 = vadd.f32 %v2598, %v3773
      %v3964 = vadd.f32 %v2601, %v3776
      %v3965 = vadd.f32 %v2606, %v3781
      %v3966 = vadd.f32 %v2609, %v3784
      %v3967 = vadd.f32 %v2614, %v3789
      %v3968 = vadd.f32 %v2617, %v3792
      %v3969 = vadd.f32 %v2622, %v3797
      %v3970 = vadd.f32 %v2625, %v3800
      %v3971 = vadd.f32 %v2630, %v3805
      %v3972 = vadd.f32 %v2633, %v3808
      %v3973 = vadd.f32 %v2638, %v3813
      %v3974 = vadd.f32 %v2641, %v3816
      %v3975 = vadd.f32 %v2646, %v3821
      %v3976 = vadd.f32 %v2649, %v3824
      %v3977 = vadd.f32 %v2654, %v3829
      %v3978 = vadd.f32 %v2657, %v3832
      %v3979 = vadd.f32 %v2662, %v3837
      %v3980 = vadd.f32 %v2665, %v3840
      %v3981 = vadd.f32 %v2670, %v3845
      %v3982 = vadd.f32 %v2673, %v3848
      %v3983 = vadd.f32 %v2678, %v3853
      %v3984 = vadd.f32 %v2681, %v3856
      %v3985 = vadd.f32 %v2686, %v3861
      %v3986 = vadd.f32 %v2689, %v3864
      %v3987 = vadd.f32 %v2694, %v3869
      %v3988 = vadd.f32 %v2697, %v3872
      %v3989 = vadd.f32 %v2702, %v3877
      %v3990 = vadd.f32 %v2705, %v3880
      %v3991 = vadd.f32 %v2710, %v3885
      %v3992 = vadd.f32 %v2713, %v3888
      %v3993 = vadd.f32 %v2718, %v3893
      %v3994 = vadd.f32 %v2721, %v3896
      %v3995 = vadd.f32 %v2726, %v3901
      %v3996 = vadd.f32 %v2729, %v3904
      %v3997 = vadd.f32 %v2734, %v3909
      %v3998 = vadd.f32 %v2737, %v3912
      %v3999 = vadd.f32 %v2742, %v3917
      %v4000 = vadd.f32 %v2745, %v3920
      %v4001 = vadd.f32 %v2750, %v3925
      %v4002 = vadd.f32 %v2753, %v3928
      %v4003 = vadd.f32 %v2758, %v3933
      %v4004 = vadd.f32 %v2761, %v3936
      %v4005 = vadd.f32 %v2766, %v3941
      %v4006 = vadd.f32 %v2769, %v3944
      %v4007 = vadd.f32 %v2774, %v3949
      %v4008 = vadd.f32 %v2777, %v3952
      %v4009 = vadd.f32 %v2782, %v3957
      %v4010 = vadd.f32 %v2785, %v3960
      %s4011 = scalar_lea.vmem %s4, 16
      %v4012 = vld [vmem:[%s4011] sm:$0x3]
      %v4014 = vsel %vm1713, %v4012, 0
      %4016 = vmatprep.subr.bf16.mxu0 0
      %4017 = vmatpush1.bf16.msra.mxu0 0
      %4018 = vmatprep.subr.bf16.mxu0 0
      %4019 = vmatpush1.bf16.msra.mxu0 0
      %4020 = vmatprep.subr.bf16.mxu0 0
      %4021 = vmatpush1.bf16.msra.mxu0 0
      %4022 = vmatprep.subr.bf16.mxu0 0
      %4023 = vmatpush1.bf16.msra.mxu0 0
      %4024 = vmatprep.subr.bf16.mxu0 0
      %4025 = vmatpush1.bf16.msra.mxu0 0
      %4026 = vmatprep.subr.bf16.mxu0 0
      %4027 = vmatpush1.bf16.msra.mxu0 0
      %4028 = vmatprep.subr.bf16.mxu0 0
      %4029 = vmatpush1.bf16.msra.mxu0 0
      %4030 = vmatprep.subr.bf16.mxu0 0
      %4031 = vmatpush1.bf16.msra.mxu0 %v4014
      %4032 = vmatprep.subr.bf16.mxu0 0
      %4033 = vmatpush2.bf16.msra.mxu0 0
      %4034 = vmatprep.subr.bf16.mxu0 0
      %4035 = vmatpush2.bf16.msra.mxu0 0
      %4036 = vmatprep.subr.bf16.mxu0 0
      %4037 = vmatpush2.bf16.msra.mxu0 0
      %4038 = vmatprep.subr.bf16.mxu0 0
      %4039 = vmatpush2.bf16.msra.mxu0 0
      %4040 = vmatprep.subr.bf16.mxu0 0
      %4041 = vmatpush2.bf16.msra.mxu0 0
      %4042 = vmatprep.subr.bf16.mxu0 0
      %4043 = vmatpush2.bf16.msra.mxu0 0
      %4044 = vmatprep.subr.bf16.mxu0 0
      %4045 = vmatpush2.bf16.msra.mxu0 0
      %4046 = vmatprep.subr.bf16.mxu0 0
      %4047 = vmatpush2.bf16.msra.mxu0 0
      %4048 = vmatprep.mubr.bf16.mxu0 0
      %4049 = vmatmul.mubr.bf16.gmra.mxu0 %v3418
      %v4050 = vpop.f32.mrf.mxu0
      %v4051 = vadd.f32 0.0, %v4050
      %v4052 = vpop.f32.mrf.mxu0
      %v4053 = vpop.f32.mrf.mxu0
      %v4054 = vadd.f32 0.0, %v4053
      %v4055 = vpop.f32.mrf.mxu0
      %4056 = vmatprep.mubr.bf16.mxu0 0
      %4057 = vmatmul.mubr.bf16.gmra.mxu0 %v3421
      %v4058 = vpop.f32.mrf.mxu0
      %v4059 = vadd.f32 0.0, %v4058
      %v4060 = vpop.f32.mrf.mxu0
      %v4061 = vpop.f32.mrf.mxu0
      %v4062 = vadd.f32 0.0, %v4061
      %v4063 = vpop.f32.mrf.mxu0
      %4064 = vmatprep.mubr.bf16.mxu0 0
      %4065 = vmatmul.mubr.bf16.gmra.mxu0 %v3424
      %v4066 = vpop.f32.mrf.mxu0
      %v4067 = vadd.f32 0.0, %v4066
      %v4068 = vpop.f32.mrf.mxu0
      %v4069 = vpop.f32.mrf.mxu0
      %v4070 = vadd.f32 0.0, %v4069
      %v4071 = vpop.f32.mrf.mxu0
      %4072 = vmatprep.mubr.bf16.mxu0 0
      %4073 = vmatmul.mubr.bf16.gmra.mxu0 %v3427
      %v4074 = vpop.f32.mrf.mxu0
      %v4075 = vadd.f32 0.0, %v4074
      %v4076 = vpop.f32.mrf.mxu0
      %v4077 = vpop.f32.mrf.mxu0
      %v4078 = vadd.f32 0.0, %v4077
      %v4079 = vpop.f32.mrf.mxu0
      %4080 = vmatprep.mubr.bf16.mxu0 0
      %4081 = vmatmul.mubr.bf16.gmra.mxu0 %v3430
      %v4082 = vpop.f32.mrf.mxu0
      %v4083 = vadd.f32 0.0, %v4082
      %v4084 = vpop.f32.mrf.mxu0
      %v4085 = vpop.f32.mrf.mxu0
      %v4086 = vadd.f32 0.0, %v4085
      %v4087 = vpop.f32.mrf.mxu0
      %4088 = vmatprep.mubr.bf16.mxu0 0
      %4089 = vmatmul.mubr.bf16.gmra.mxu0 %v3433
      %v4090 = vpop.f32.mrf.mxu0
      %v4091 = vadd.f32 0.0, %v4090
      %v4092 = vpop.f32.mrf.mxu0
      %v4093 = vpop.f32.mrf.mxu0
      %v4094 = vadd.f32 0.0, %v4093
      %v4095 = vpop.f32.mrf.mxu0
      %4096 = vmatprep.mubr.bf16.mxu0 0
      %4097 = vmatmul.mubr.bf16.gmra.mxu0 %v3436
      %v4098 = vpop.f32.mrf.mxu0
      %v4099 = vadd.f32 0.0, %v4098
      %v4100 = vpop.f32.mrf.mxu0
      %v4101 = vpop.f32.mrf.mxu0
      %v4102 = vadd.f32 0.0, %v4101
      %v4103 = vpop.f32.mrf.mxu0
      %4104 = vmatprep.mubr.bf16.mxu0 0
      %4105 = vmatmul.mubr.bf16.gmra.mxu0 %v3439
      %v4106 = vpop.f32.mrf.mxu0
      %v4107 = vadd.f32 0.0, %v4106
      %v4108 = vpop.f32.mrf.mxu0
      %v4109 = vpop.f32.mrf.mxu0
      %v4110 = vadd.f32 0.0, %v4109
      %v4111 = vpop.f32.mrf.mxu0
      %4112 = vmatprep.mubr.bf16.mxu0 0
      %4113 = vmatmul.mubr.bf16.gmra.mxu0 %v3442
      %v4114 = vpop.f32.mrf.mxu0
      %v4115 = vadd.f32 0.0, %v4114
      %v4116 = vpop.f32.mrf.mxu0
      %v4117 = vpop.f32.mrf.mxu0
      %v4118 = vadd.f32 0.0, %v4117
      %v4119 = vpop.f32.mrf.mxu0
      %4120 = vmatprep.mubr.bf16.mxu0 0
      %4121 = vmatmul.mubr.bf16.gmra.mxu0 %v3445
      %v4122 = vpop.f32.mrf.mxu0
      %v4123 = vadd.f32 0.0, %v4122
      %v4124 = vpop.f32.mrf.mxu0
      %v4125 = vpop.f32.mrf.mxu0
      %v4126 = vadd.f32 0.0, %v4125
      %v4127 = vpop.f32.mrf.mxu0
      %4128 = vmatprep.mubr.bf16.mxu0 0
      %4129 = vmatmul.mubr.bf16.gmra.mxu0 %v3448
      %v4130 = vpop.f32.mrf.mxu0
      %v4131 = vadd.f32 0.0, %v4130
      %v4132 = vpop.f32.mrf.mxu0
      %v4133 = vpop.f32.mrf.mxu0
      %v4134 = vadd.f32 0.0, %v4133
      %v4135 = vpop.f32.mrf.mxu0
      %4136 = vmatprep.mubr.bf16.mxu0 0
      %4137 = vmatmul.mubr.bf16.gmra.mxu0 %v3451
      %v4138 = vpop.f32.mrf.mxu0
      %v4139 = vadd.f32 0.0, %v4138
      %v4140 = vpop.f32.mrf.mxu0
      %v4141 = vpop.f32.mrf.mxu0
      %v4142 = vadd.f32 0.0, %v4141
      %v4143 = vpop.f32.mrf.mxu0
      %4144 = vmatprep.mubr.bf16.mxu0 0
      %4145 = vmatmul.mubr.bf16.gmra.mxu0 %v3454
      %v4146 = vpop.f32.mrf.mxu0
      %v4147 = vadd.f32 0.0, %v4146
      %v4148 = vpop.f32.mrf.mxu0
      %v4149 = vpop.f32.mrf.mxu0
      %v4150 = vadd.f32 0.0, %v4149
      %v4151 = vpop.f32.mrf.mxu0
      %4152 = vmatprep.mubr.bf16.mxu0 0
      %4153 = vmatmul.mubr.bf16.gmra.mxu0 %v3457
      %v4154 = vpop.f32.mrf.mxu0
      %v4155 = vadd.f32 0.0, %v4154
      %v4156 = vpop.f32.mrf.mxu0
      %v4157 = vpop.f32.mrf.mxu0
      %v4158 = vadd.f32 0.0, %v4157
      %v4159 = vpop.f32.mrf.mxu0
      %4160 = vmatprep.mubr.bf16.mxu0 0
      %4161 = vmatmul.mubr.bf16.gmra.mxu0 %v3460
      %v4162 = vpop.f32.mrf.mxu0
      %v4163 = vadd.f32 0.0, %v4162
      %v4164 = vpop.f32.mrf.mxu0
      %v4165 = vpop.f32.mrf.mxu0
      %v4166 = vadd.f32 0.0, %v4165
      %v4167 = vpop.f32.mrf.mxu0
      %4168 = vmatprep.mubr.bf16.mxu0 0
      %4169 = vmatmul.mubr.bf16.gmra.mxu0 %v3463
      %v4170 = vpop.f32.mrf.mxu0
      %v4171 = vadd.f32 0.0, %v4170
      %v4172 = vpop.f32.mrf.mxu0
      %v4173 = vpop.f32.mrf.mxu0
      %v4174 = vadd.f32 0.0, %v4173
      %v4175 = vpop.f32.mrf.mxu0
      %4176 = vmatprep.mubr.bf16.mxu0 0
      %4177 = vmatmul.mubr.bf16.gmra.mxu0 %v3466
      %v4178 = vpop.f32.mrf.mxu0
      %v4179 = vadd.f32 0.0, %v4178
      %v4180 = vpop.f32.mrf.mxu0
      %v4181 = vpop.f32.mrf.mxu0
      %v4182 = vadd.f32 0.0, %v4181
      %v4183 = vpop.f32.mrf.mxu0
      %4184 = vmatprep.mubr.bf16.mxu0 0
      %4185 = vmatmul.mubr.bf16.gmra.mxu0 %v3469
      %v4186 = vpop.f32.mrf.mxu0
      %v4187 = vadd.f32 0.0, %v4186
      %v4188 = vpop.f32.mrf.mxu0
      %v4189 = vpop.f32.mrf.mxu0
      %v4190 = vadd.f32 0.0, %v4189
      %v4191 = vpop.f32.mrf.mxu0
      %4192 = vmatprep.mubr.bf16.mxu0 0
      %4193 = vmatmul.mubr.bf16.gmra.mxu0 %v3472
      %v4194 = vpop.f32.mrf.mxu0
      %v4195 = vadd.f32 0.0, %v4194
      %v4196 = vpop.f32.mrf.mxu0
      %v4197 = vpop.f32.mrf.mxu0
      %v4198 = vadd.f32 0.0, %v4197
      %v4199 = vpop.f32.mrf.mxu0
      %4200 = vmatprep.mubr.bf16.mxu0 0
      %4201 = vmatmul.mubr.bf16.gmra.mxu0 %v3475
      %v4202 = vpop.f32.mrf.mxu0
      %v4203 = vadd.f32 0.0, %v4202
      %v4204 = vpop.f32.mrf.mxu0
      %v4205 = vpop.f32.mrf.mxu0
      %v4206 = vadd.f32 0.0, %v4205
      %v4207 = vpop.f32.mrf.mxu0
      %4208 = vmatprep.mubr.bf16.mxu0 0
      %4209 = vmatmul.mubr.bf16.gmra.mxu0 %v3478
      %v4210 = vpop.f32.mrf.mxu0
      %v4211 = vadd.f32 0.0, %v4210
      %v4212 = vpop.f32.mrf.mxu0
      %v4213 = vpop.f32.mrf.mxu0
      %v4214 = vadd.f32 0.0, %v4213
      %v4215 = vpop.f32.mrf.mxu0
      %4216 = vmatprep.mubr.bf16.mxu0 0
      %4217 = vmatmul.mubr.bf16.gmra.mxu0 %v3481
      %v4218 = vpop.f32.mrf.mxu0
      %v4219 = vadd.f32 0.0, %v4218
      %v4220 = vpop.f32.mrf.mxu0
      %v4221 = vpop.f32.mrf.mxu0
      %v4222 = vadd.f32 0.0, %v4221
      %v4223 = vpop.f32.mrf.mxu0
      %4224 = vmatprep.mubr.bf16.mxu0 0
      %4225 = vmatmul.mubr.bf16.gmra.mxu0 %v3484
      %v4226 = vpop.f32.mrf.mxu0
      %v4227 = vadd.f32 0.0, %v4226
      %v4228 = vpop.f32.mrf.mxu0
      %v4229 = vpop.f32.mrf.mxu0
      %v4230 = vadd.f32 0.0, %v4229
      %v4231 = vpop.f32.mrf.mxu0
      %4232 = vmatprep.mubr.bf16.mxu0 0
      %4233 = vmatmul.mubr.bf16.gmra.mxu0 %v3487
      %v4234 = vpop.f32.mrf.mxu0
      %v4235 = vadd.f32 0.0, %v4234
      %v4236 = vpop.f32.mrf.mxu0
      %v4237 = vpop.f32.mrf.mxu0
      %v4238 = vadd.f32 0.0, %v4237
      %v4239 = vpop.f32.mrf.mxu0
      %4240 = vdwg.mxu0
      %v4241 = vadd.f32 %v3056, %v4051
      %v4242 = vadd.f32 %v3059, %v4054
      %v4243 = vadd.f32 %v3064, %v4059
      %v4244 = vadd.f32 %v3067, %v4062
      %v4245 = vadd.f32 %v3072, %v4067
      %v4246 = vadd.f32 %v3075, %v4070
      %v4247 = vadd.f32 %v3080, %v4075
      %v4248 = vadd.f32 %v3083, %v4078
      %v4249 = vadd.f32 %v3088, %v4083
      %v4250 = vadd.f32 %v3091, %v4086
      %v4251 = vadd.f32 %v3096, %v4091
      %v4252 = vadd.f32 %v3099, %v4094
      %v4253 = vadd.f32 %v3104, %v4099
      %v4254 = vadd.f32 %v3107, %v4102
      %v4255 = vadd.f32 %v3112, %v4107
      %v4256 = vadd.f32 %v3115, %v4110
      %v4257 = vadd.f32 %v3120, %v4115
      %v4258 = vadd.f32 %v3123, %v4118
      %v4259 = vadd.f32 %v3128, %v4123
      %v4260 = vadd.f32 %v3131, %v4126
      %v4261 = vadd.f32 %v3136, %v4131
      %v4262 = vadd.f32 %v3139, %v4134
      %v4263 = vadd.f32 %v3144, %v4139
      %v4264 = vadd.f32 %v3147, %v4142
      %v4265 = vadd.f32 %v3152, %v4147
      %v4266 = vadd.f32 %v3155, %v4150
      %v4267 = vadd.f32 %v3160, %v4155
      %v4268 = vadd.f32 %v3163, %v4158
      %v4269 = vadd.f32 %v3168, %v4163
      %v4270 = vadd.f32 %v3171, %v4166
      %v4271 = vadd.f32 %v3176, %v4171
      %v4272 = vadd.f32 %v3179, %v4174
      %v4273 = vadd.f32 %v3184, %v4179
      %v4274 = vadd.f32 %v3187, %v4182
      %v4275 = vadd.f32 %v3192, %v4187
      %v4276 = vadd.f32 %v3195, %v4190
      %v4277 = vadd.f32 %v3200, %v4195
      %v4278 = vadd.f32 %v3203, %v4198
      %v4279 = vadd.f32 %v3208, %v4203
      %v4280 = vadd.f32 %v3211, %v4206
      %v4281 = vadd.f32 %v3216, %v4211
      %v4282 = vadd.f32 %v3219, %v4214
      %v4283 = vadd.f32 %v3224, %v4219
      %v4284 = vadd.f32 %v3227, %v4222
      %v4285 = vadd.f32 %v3232, %v4227
      %v4286 = vadd.f32 %v3235, %v4230
      %v4287 = vadd.f32 %v3240, %v4235
      %v4288 = vadd.f32 %v3243, %v4238
      %vm4337 = vcmask 1046528
      %v4338 = vrot.slane %v3963, 1
      %v4339 = vrot.slane %v3964, 1
      %v4340 = vsel %vm4337, %v4338, %v4339
      %v4341 = vrot.slane %v3965, 1
      %v4342 = vsel %vm4337, %v4339, %v4341
      %v4343 = vrot.slane %v3966, 1
      %v4344 = vrot.slane %v3967, 1
      %v4345 = vsel %vm4337, %v4343, %v4344
      %v4346 = vrot.slane %v3968, 1
      %v4347 = vsel %vm4337, %v4344, %v4346
      %v4348 = vrot.slane %v3969, 1
      %v4349 = vrot.slane %v3970, 1
      %v4350 = vsel %vm4337, %v4348, %v4349
      %v4351 = vrot.slane %v3971, 1
      %v4352 = vsel %vm4337, %v4349, %v4351
      %v4353 = vrot.slane %v3972, 1
      %v4354 = vrot.slane %v3973, 1
      %v4355 = vsel %vm4337, %v4353, %v4354
      %v4356 = vrot.slane %v3974, 1
      %v4357 = vsel %vm4337, %v4354, %v4356
      %v4358 = vrot.slane %v3975, 1
      %v4359 = vrot.slane %v3976, 1
      %v4360 = vsel %vm4337, %v4358, %v4359
      %v4361 = vrot.slane %v3977, 1
      %v4362 = vsel %vm4337, %v4359, %v4361
      %v4363 = vrot.slane %v3978, 1
      %v4364 = vrot.slane %v3979, 1
      %v4365 = vsel %vm4337, %v4363, %v4364
      %v4366 = vrot.slane %v3980, 1
      %v4367 = vsel %vm4337, %v4364, %v4366
      %v4368 = vrot.slane %v3981, 1
      %v4369 = vrot.slane %v3982, 1
      %v4370 = vsel %vm4337, %v4368, %v4369
      %v4371 = vrot.slane %v3983, 1
      %v4372 = vsel %vm4337, %v4369, %v4371
      %v4373 = vrot.slane %v3984, 1
      %v4374 = vrot.slane %v3985, 1
      %v4375 = vsel %vm4337, %v4373, %v4374
      %v4376 = vrot.slane %v3986, 1
      %v4377 = vsel %vm4337, %v4374, %v4376
      %v4378 = vrot.slane %v3987, 1
      %v4379 = vrot.slane %v3988, 1
      %v4380 = vsel %vm4337, %v4378, %v4379
      %v4381 = vrot.slane %v3989, 1
      %v4382 = vsel %vm4337, %v4379, %v4381
      %v4383 = vrot.slane %v3990, 1
      %v4384 = vrot.slane %v3991, 1
      %v4385 = vsel %vm4337, %v4383, %v4384
      %v4386 = vrot.slane %v3992, 1
      %v4387 = vsel %vm4337, %v4384, %v4386
      %v4388 = vrot.slane %v3993, 1
      %v4389 = vrot.slane %v3994, 1
      %v4390 = vsel %vm4337, %v4388, %v4389
      %v4391 = vrot.slane %v3995, 1
      %v4392 = vsel %vm4337, %v4389, %v4391
      %v4393 = vrot.slane %v3996, 1
      %v4394 = vrot.slane %v3997, 1
      %v4395 = vsel %vm4337, %v4393, %v4394
      %v4396 = vrot.slane %v3998, 1
      %v4397 = vsel %vm4337, %v4394, %v4396
      %v4398 = vrot.slane %v3999, 1
      %v4399 = vrot.slane %v4000, 1
      %v4400 = vsel %vm4337, %v4398, %v4399
      %v4401 = vrot.slane %v4001, 1
      %v4402 = vsel %vm4337, %v4399, %v4401
      %v4403 = vrot.slane %v4002, 1
      %v4404 = vrot.slane %v4003, 1
      %v4405 = vsel %vm4337, %v4403, %v4404
      %v4406 = vrot.slane %v4004, 1
      %v4407 = vsel %vm4337, %v4404, %v4406
      %v4408 = vrot.slane %v4005, 1
      %v4409 = vrot.slane %v4006, 1
      %v4410 = vsel %vm4337, %v4408, %v4409
      %v4411 = vrot.slane %v4007, 1
      %v4412 = vsel %vm4337, %v4409, %v4411
      %v4413 = vrot.slane %v4008, 1
      %v4414 = vrot.slane %v4009, 1
      %v4415 = vsel %vm4337, %v4413, %v4414
      %v4416 = vrot.slane %v4010, 1
      %v4417 = vsel %vm4337, %v4414, %v4416
      %v4450 = vadd.f32 %v3701, %v4340
      %v4451 = vadd.f32 %v3702, %v4342
      %v4452 = vadd.f32 %v3703, %v4345
      %v4453 = vadd.f32 %v3704, %v4347
      %v4454 = vadd.f32 %v3705, %v4350
      %v4455 = vadd.f32 %v3706, %v4352
      %v4456 = vadd.f32 %v3707, %v4355
      %v4457 = vadd.f32 %v3708, %v4357
      %v4458 = vadd.f32 %v3709, %v4360
      %v4459 = vadd.f32 %v3710, %v4362
      %v4460 = vadd.f32 %v3711, %v4365
      %v4461 = vadd.f32 %v3712, %v4367
      %v4462 = vadd.f32 %v3713, %v4370
      %v4463 = vadd.f32 %v3714, %v4372
      %v4464 = vadd.f32 %v3715, %v4375
      %v4465 = vadd.f32 %v3716, %v4377
      %v4466 = vadd.f32 %v3717, %v4380
      %v4467 = vadd.f32 %v3718, %v4382
      %v4468 = vadd.f32 %v3719, %v4385
      %v4469 = vadd.f32 %v3720, %v4387
      %v4470 = vadd.f32 %v3721, %v4390
      %v4471 = vadd.f32 %v3722, %v4392
      %v4472 = vadd.f32 %v3723, %v4395
      %v4473 = vadd.f32 %v3724, %v4397
      %v4474 = vadd.f32 %v3725, %v4400
      %v4475 = vadd.f32 %v3726, %v4402
      %v4476 = vadd.f32 %v3727, %v4405
      %v4477 = vadd.f32 %v3728, %v4407
      %v4478 = vadd.f32 %v3729, %v4410
      %v4479 = vadd.f32 %v3730, %v4412
      %v4480 = vadd.f32 %v3731, %v4415
      %v4481 = vadd.f32 %v3732, %v4417
      %vm4530 = vcmask 1045504
      %v4531 = vrot.slane %v4241, 2
      %v4532 = vrot.slane %v4242, 2
      %v4533 = vsel %vm4530, %v4531, %v4532
      %v4534 = vrot.slane %v4243, 2
      %v4535 = vsel %vm4530, %v4532, %v4534
      %v4536 = vrot.slane %v4244, 2
      %v4537 = vrot.slane %v4245, 2
      %v4538 = vsel %vm4530, %v4536, %v4537
      %v4539 = vrot.slane %v4246, 2
      %v4540 = vsel %vm4530, %v4537, %v4539
      %v4541 = vrot.slane %v4247, 2
      %v4542 = vrot.slane %v4248, 2
      %v4543 = vsel %vm4530, %v4541, %v4542
      %v4544 = vrot.slane %v4249, 2
      %v4545 = vsel %vm4530, %v4542, %v4544
      %v4546 = vrot.slane %v4250, 2
      %v4547 = vrot.slane %v4251, 2
      %v4548 = vsel %vm4530, %v4546, %v4547
      %v4549 = vrot.slane %v4252, 2
      %v4550 = vsel %vm4530, %v4547, %v4549
      %v4551 = vrot.slane %v4253, 2
      %v4552 = vrot.slane %v4254, 2
      %v4553 = vsel %vm4530, %v4551, %v4552
      %v4554 = vrot.slane %v4255, 2
      %v4555 = vsel %vm4530, %v4552, %v4554
      %v4556 = vrot.slane %v4256, 2
      %v4557 = vrot.slane %v4257, 2
      %v4558 = vsel %vm4530, %v4556, %v4557
      %v4559 = vrot.slane %v4258, 2
      %v4560 = vsel %vm4530, %v4557, %v4559
      %v4561 = vrot.slane %v4259, 2
      %v4562 = vrot.slane %v4260, 2
      %v4563 = vsel %vm4530, %v4561, %v4562
      %v4564 = vrot.slane %v4261, 2
      %v4565 = vsel %vm4530, %v4562, %v4564
      %v4566 = vrot.slane %v4262, 2
      %v4567 = vrot.slane %v4263, 2
      %v4568 = vsel %vm4530, %v4566, %v4567
      %v4569 = vrot.slane %v4264, 2
      %v4570 = vsel %vm4530, %v4567, %v4569
      %v4571 = vrot.slane %v4265, 2
      %v4572 = vrot.slane %v4266, 2
      %v4573 = vsel %vm4530, %v4571, %v4572
      %v4574 = vrot.slane %v4267, 2
      %v4575 = vsel %vm4530, %v4572, %v4574
      %v4576 = vrot.slane %v4268, 2
      %v4577 = vrot.slane %v4269, 2
      %v4578 = vsel %vm4530, %v4576, %v4577
      %v4579 = vrot.slane %v4270, 2
      %v4580 = vsel %vm4530, %v4577, %v4579
      %v4581 = vrot.slane %v4271, 2
      %v4582 = vrot.slane %v4272, 2
      %v4583 = vsel %vm4530, %v4581, %v4582
      %v4584 = vrot.slane %v4273, 2
      %v4585 = vsel %vm4530, %v4582, %v4584
      %v4586 = vrot.slane %v4274, 2
      %v4587 = vrot.slane %v4275, 2
      %v4588 = vsel %vm4530, %v4586, %v4587
      %v4589 = vrot.slane %v4276, 2
      %v4590 = vsel %vm4530, %v4587, %v4589
      %v4591 = vrot.slane %v4277, 2
      %v4592 = vrot.slane %v4278, 2
      %v4593 = vsel %vm4530, %v4591, %v4592
      %v4594 = vrot.slane %v4279, 2
      %v4595 = vsel %vm4530, %v4592, %v4594
      %v4596 = vrot.slane %v4280, 2
      %v4597 = vrot.slane %v4281, 2
      %v4598 = vsel %vm4530, %v4596, %v4597
      %v4599 = vrot.slane %v4282, 2
      %v4600 = vsel %vm4530, %v4597, %v4599
      %v4601 = vrot.slane %v4283, 2
      %v4602 = vrot.slane %v4284, 2
      %v4603 = vsel %vm4530, %v4601, %v4602
      %v4604 = vrot.slane %v4285, 2
      %v4605 = vsel %vm4530, %v4602, %v4604
      %v4606 = vrot.slane %v4286, 2
      %v4607 = vrot.slane %v4287, 2
      %v4608 = vsel %vm4530, %v4606, %v4607
      %v4609 = vrot.slane %v4288, 2
      %v4610 = vsel %vm4530, %v4607, %v4609
      %v4643 = vadd.f32 %v4450, %v4533
      %v4644 = vadd.f32 %v4451, %v4535
      %v4645 = vadd.f32 %v4452, %v4538
      %v4646 = vadd.f32 %v4453, %v4540
      %v4647 = vadd.f32 %v4454, %v4543
      %v4648 = vadd.f32 %v4455, %v4545
      %v4649 = vadd.f32 %v4456, %v4548
      %v4650 = vadd.f32 %v4457, %v4550
      %v4651 = vadd.f32 %v4458, %v4553
      %v4652 = vadd.f32 %v4459, %v4555
      %v4653 = vadd.f32 %v4460, %v4558
      %v4654 = vadd.f32 %v4461, %v4560
      %v4655 = vadd.f32 %v4462, %v4563
      %v4656 = vadd.f32 %v4463, %v4565
      %v4657 = vadd.f32 %v4464, %v4568
      %v4658 = vadd.f32 %v4465, %v4570
      %v4659 = vadd.f32 %v4466, %v4573
      %v4660 = vadd.f32 %v4467, %v4575
      %v4661 = vadd.f32 %v4468, %v4578
      %v4662 = vadd.f32 %v4469, %v4580
      %v4663 = vadd.f32 %v4470, %v4583
      %v4664 = vadd.f32 %v4471, %v4585
      %v4665 = vadd.f32 %v4472, %v4588
      %v4666 = vadd.f32 %v4473, %v4590
      %v4667 = vadd.f32 %v4474, %v4593
      %v4668 = vadd.f32 %v4475, %v4595
      %v4669 = vadd.f32 %v4476, %v4598
      %v4670 = vadd.f32 %v4477, %v4600
      %v4671 = vadd.f32 %v4478, %v4603
      %v4672 = vadd.f32 %v4479, %v4605
      %v4673 = vadd.f32 %v4480, %v4608
      %v4674 = vadd.f32 %v4481, %v4610
      %v4675 = vld [vmem:[%s5] sm:$0x1]
      %v4677 = vlaneseq
      %v4678 = vshrl.u32 %v4677, 7
      %v4679 = vsub.s32 0, %v4678
      %v4680 = vrot.slane %v4675, %v4679
      %v4682 = vadd.f32 %v4643, %v4680
      %v4683 = vadd.f32 %v4644, %v4680
      %v4684 = vadd.f32 %v4645, %v4680
      %v4685 = vadd.f32 %v4646, %v4680
      %v4686 = vadd.f32 %v4647, %v4680
      %v4687 = vadd.f32 %v4648, %v4680
      %v4688 = vadd.f32 %v4649, %v4680
      %v4689 = vadd.f32 %v4650, %v4680
      %v4690 = vadd.f32 %v4651, %v4680
      %v4691 = vadd.f32 %v4652, %v4680
      %v4692 = vadd.f32 %v4653, %v4680
      %v4693 = vadd.f32 %v4654, %v4680
      %v4694 = vadd.f32 %v4655, %v4680
      %v4695 = vadd.f32 %v4656, %v4680
      %v4696 = vadd.f32 %v4657, %v4680
      %v4697 = vadd.f32 %v4658, %v4680
      %v4698 = vadd.f32 %v4659, %v4680
      %v4699 = vadd.f32 %v4660, %v4680
      %v4700 = vadd.f32 %v4661, %v4680
      %v4701 = vadd.f32 %v4662, %v4680
      %v4702 = vadd.f32 %v4663, %v4680
      %v4703 = vadd.f32 %v4664, %v4680
      %v4704 = vadd.f32 %v4665, %v4680
      %v4705 = vadd.f32 %v4666, %v4680
      %v4706 = vadd.f32 %v4667, %v4680
      %v4707 = vadd.f32 %v4668, %v4680
      %v4708 = vadd.f32 %v4669, %v4680
      %v4709 = vadd.f32 %v4670, %v4680
      %v4710 = vadd.f32 %v4671, %v4680
      %v4711 = vadd.f32 %v4672, %v4680
      %v4712 = vadd.f32 %v4673, %v4680
      %v4713 = vadd.f32 %v4674, %v4680
      %v4714 = vmax.f32 %v4682, 0.0
      %v4715 = vmax.f32 %v4683, 0.0
      %v4716 = vmax.f32 %v4684, 0.0
      %v4717 = vmax.f32 %v4685, 0.0
      %v4718 = vmax.f32 %v4686, 0.0
      %v4719 = vmax.f32 %v4687, 0.0
      %v4720 = vmax.f32 %v4688, 0.0
      %v4721 = vmax.f32 %v4689, 0.0
      %v4722 = vmax.f32 %v4690, 0.0
      %v4723 = vmax.f32 %v4691, 0.0
      %v4724 = vmax.f32 %v4692, 0.0
      %v4725 = vmax.f32 %v4693, 0.0
      %v4726 = vmax.f32 %v4694, 0.0
      %v4727 = vmax.f32 %v4695, 0.0
      %v4728 = vmax.f32 %v4696, 0.0
      %v4729 = vmax.f32 %v4697, 0.0
      %v4730 = vmax.f32 %v4698, 0.0
      %v4731 = vmax.f32 %v4699, 0.0
      %v4732 = vmax.f32 %v4700, 0.0
      %v4733 = vmax.f32 %v4701, 0.0
      %v4734 = vmax.f32 %v4702, 0.0
      %v4735 = vmax.f32 %v4703, 0.0
      %v4736 = vmax.f32 %v4704, 0.0
      %v4737 = vmax.f32 %v4705, 0.0
      %v4738 = vmax.f32 %v4706, 0.0
      %v4739 = vmax.f32 %v4707, 0.0
      %v4740 = vmax.f32 %v4708, 0.0
      %v4741 = vmax.f32 %v4709, 0.0
      %v4742 = vmax.f32 %v4710, 0.0
      %v4743 = vmax.f32 %v4711, 0.0
      %v4744 = vmax.f32 %v4712, 0.0
      %v4745 = vmax.f32 %v4713, 0.0
      %v4746 = vpack.c.bf16 %v4715, %v4714
      %v4747 = vpack.c.bf16 %v4717, %v4716
      %v4748 = vpack.c.bf16 %v4719, %v4718
      %v4749 = vpack.c.bf16 %v4721, %v4720
      %v4750 = vpack.c.bf16 %v4723, %v4722
      %v4751 = vpack.c.bf16 %v4725, %v4724
      %v4752 = vpack.c.bf16 %v4727, %v4726
      %v4753 = vpack.c.bf16 %v4729, %v4728
      %v4754 = vpack.c.bf16 %v4731, %v4730
      %v4755 = vpack.c.bf16 %v4733, %v4732
      %v4756 = vpack.c.bf16 %v4735, %v4734
      %v4757 = vpack.c.bf16 %v4737, %v4736
      %v4758 = vpack.c.bf16 %v4739, %v4738
      %v4759 = vpack.c.bf16 %v4741, %v4740
      %v4760 = vpack.c.bf16 %v4743, %v4742
      %v4761 = vpack.c.bf16 %v4745, %v4744
      %v4762 = vld [vmem:[%s6] sm:$0x3]
      %v4763 = vld [vmem:[%s7] sm:$0x1]
      %v4765 = vlaneseq
      %v4766 = vshrl.u32 %v4765, 7
      %v4767 = vsub.s32 0, %v4766
      %v4768 = vrot.slane %v4763, %v4767
      %v4771 = vsel %vm1640, %v4746, 0
      %v4774 = vsel %vm1640, %v4747, 0
      %v4777 = vsel %vm1640, %v4748, 0
      %v4780 = vsel %vm1640, %v4749, 0
      %v4783 = vsel %vm1640, %v4750, 0
      %v4786 = vsel %vm1640, %v4751, 0
      %v4789 = vsel %vm1640, %v4752, 0
      %v4792 = vsel %vm1640, %v4753, 0
      %v4795 = vsel %vm1640, %v4754, 0
      %v4798 = vsel %vm1640, %v4755, 0
      %v4801 = vsel %vm1640, %v4756, 0
      %v4804 = vsel %vm1640, %v4757, 0
      %v4807 = vsel %vm1640, %v4758, 0
      %v4810 = vsel %vm1640, %v4759, 0
      %v4813 = vsel %vm1640, %v4760, 0
      %v4816 = vsel %vm1640, %v4761, 0
      %v4819 = vsel %vm1713, %v4762, 0
      %4821 = vmatprep.subr.bf16.mxu0 0
      %4822 = vmatpush1.bf16.msra.mxu0 0
      %4823 = vmatprep.subr.bf16.mxu0 0
      %4824 = vmatpush1.bf16.msra.mxu0 0
      %4825 = vmatprep.subr.bf16.mxu0 0
      %4826 = vmatpush1.bf16.msra.mxu0 0
      %4827 = vmatprep.subr.bf16.mxu0 0
      %4828 = vmatpush1.bf16.msra.mxu0 0
      %4829 = vmatprep.subr.bf16.mxu0 0
      %4830 = vmatpush1.bf16.msra.mxu0 0
      %4831 = vmatprep.subr.bf16.mxu0 0
      %4832 = vmatpush1.bf16.msra.mxu0 0
      %4833 = vmatprep.subr.bf16.mxu0 0
      %4834 = vmatpush1.bf16.msra.mxu0 0
      %4835 = vmatprep.subr.bf16.mxu0 0
      %4836 = vmatpush1.bf16.msra.mxu0 %v4819
      %4837 = vmatprep.subr.bf16.mxu0 0
      %4838 = vmatpush2.bf16.msra.mxu0 0
      %4839 = vmatprep.subr.bf16.mxu0 0
      %4840 = vmatpush2.bf16.msra.mxu0 0
      %4841 = vmatprep.subr.bf16.mxu0 0
      %4842 = vmatpush2.bf16.msra.mxu0 0
      %4843 = vmatprep.subr.bf16.mxu0 0
      %4844 = vmatpush2.bf16.msra.mxu0 0
      %4845 = vmatprep.subr.bf16.mxu0 0
      %4846 = vmatpush2.bf16.msra.mxu0 0
      %4847 = vmatprep.subr.bf16.mxu0 0
      %4848 = vmatpush2.bf16.msra.mxu0 0
      %4849 = vmatprep.subr.bf16.mxu0 0
      %4850 = vmatpush2.bf16.msra.mxu0 0
      %4851 = vmatprep.subr.bf16.mxu0 0
      %4852 = vmatpush2.bf16.msra.mxu0 0
      %4853 = vmatprep.mubr.bf16.mxu0 0
      %4854 = vmatmul.mubr.bf16.gmra.mxu0 %v4771
      %v4855 = vpop.f32.mrf.mxu0
      %v4856 = vadd.f32 %v4768, %v4855
      %v4857 = vpop.f32.mrf.mxu0
      %v4858 = vpop.f32.mrf.mxu0
      %v4859 = vadd.f32 %v4768, %v4858
      %v4860 = vpop.f32.mrf.mxu0
      %4861 = vmatprep.mubr.bf16.mxu0 0
      %4862 = vmatmul.mubr.bf16.gmra.mxu0 %v4774
      %v4863 = vpop.f32.mrf.mxu0
      %v4864 = vadd.f32 %v4768, %v4863
      %v4865 = vpop.f32.mrf.mxu0
      %v4866 = vpop.f32.mrf.mxu0
      %v4867 = vadd.f32 %v4768, %v4866
      %v4868 = vpop.f32.mrf.mxu0
      %4869 = vmatprep.mubr.bf16.mxu0 0
      %4870 = vmatmul.mubr.bf16.gmra.mxu0 %v4777
      %v4871 = vpop.f32.mrf.mxu0
      %v4872 = vadd.f32 %v4768, %v4871
      %v4873 = vpop.f32.mrf.mxu0
      %v4874 = vpop.f32.mrf.mxu0
      %v4875 = vadd.f32 %v4768, %v4874
      %v4876 = vpop.f32.mrf.mxu0
      %4877 = vmatprep.mubr.bf16.mxu0 0
      %4878 = vmatmul.mubr.bf16.gmra.mxu0 %v4780
      %v4879 = vpop.f32.mrf.mxu0
      %v4880 = vadd.f32 %v4768, %v4879
      %v4881 = vpop.f32.mrf.mxu0
      %v4882 = vpop.f32.mrf.mxu0
      %v4883 = vadd.f32 %v4768, %v4882
      %v4884 = vpop.f32.mrf.mxu0
      %4885 = vmatprep.mubr.bf16.mxu0 0
      %4886 = vmatmul.mubr.bf16.gmra.mxu0 %v4783
      %v4887 = vpop.f32.mrf.mxu0
      %v4888 = vadd.f32 %v4768, %v4887
      %v4889 = vpop.f32.mrf.mxu0
      %v4890 = vpop.f32.mrf.mxu0
      %v4891 = vadd.f32 %v4768, %v4890
      %v4892 = vpop.f32.mrf.mxu0
      %4893 = vmatprep.mubr.bf16.mxu0 0
      %4894 = vmatmul.mubr.bf16.gmra.mxu0 %v4786
      %v4895 = vpop.f32.mrf.mxu0
      %v4896 = vadd.f32 %v4768, %v4895
      %v4897 = vpop.f32.mrf.mxu0
      %v4898 = vpop.f32.mrf.mxu0
      %v4899 = vadd.f32 %v4768, %v4898
      %v4900 = vpop.f32.mrf.mxu0
      %4901 = vmatprep.mubr.bf16.mxu0 0
      %4902 = vmatmul.mubr.bf16.gmra.mxu0 %v4789
      %v4903 = vpop.f32.mrf.mxu0
      %v4904 = vadd.f32 %v4768, %v4903
      %v4905 = vpop.f32.mrf.mxu0
      %v4906 = vpop.f32.mrf.mxu0
      %v4907 = vadd.f32 %v4768, %v4906
      %v4908 = vpop.f32.mrf.mxu0
      %4909 = vmatprep.mubr.bf16.mxu0 0
      %4910 = vmatmul.mubr.bf16.gmra.mxu0 %v4792
      %v4911 = vpop.f32.mrf.mxu0
      %v4912 = vadd.f32 %v4768, %v4911
      %v4913 = vpop.f32.mrf.mxu0
      %v4914 = vpop.f32.mrf.mxu0
      %v4915 = vadd.f32 %v4768, %v4914
      %v4916 = vpop.f32.mrf.mxu0
      %4917 = vmatprep.mubr.bf16.mxu0 0
      %4918 = vmatmul.mubr.bf16.gmra.mxu0 %v4795
      %v4919 = vpop.f32.mrf.mxu0
      %v4920 = vadd.f32 %v4768, %v4919
      %v4921 = vpop.f32.mrf.mxu0
      %v4922 = vpop.f32.mrf.mxu0
      %v4923 = vadd.f32 %v4768, %v4922
      %v4924 = vpop.f32.mrf.mxu0
      %4925 = vmatprep.mubr.bf16.mxu0 0
      %4926 = vmatmul.mubr.bf16.gmra.mxu0 %v4798
      %v4927 = vpop.f32.mrf.mxu0
      %v4928 = vadd.f32 %v4768, %v4927
      %v4929 = vpop.f32.mrf.mxu0
      %v4930 = vpop.f32.mrf.mxu0
      %v4931 = vadd.f32 %v4768, %v4930
      %v4932 = vpop.f32.mrf.mxu0
      %4933 = vmatprep.mubr.bf16.mxu0 0
      %4934 = vmatmul.mubr.bf16.gmra.mxu0 %v4801
      %v4935 = vpop.f32.mrf.mxu0
      %v4936 = vadd.f32 %v4768, %v4935
      %v4937 = vpop.f32.mrf.mxu0
      %v4938 = vpop.f32.mrf.mxu0
      %v4939 = vadd.f32 %v4768, %v4938
      %v4940 = vpop.f32.mrf.mxu0
      %4941 = vmatprep.mubr.bf16.mxu0 0
      %4942 = vmatmul.mubr.bf16.gmra.mxu0 %v4804
      %v4943 = vpop.f32.mrf.mxu0
      %v4944 = vadd.f32 %v4768, %v4943
      %v4945 = vpop.f32.mrf.mxu0
      %v4946 = vpop.f32.mrf.mxu0
      %v4947 = vadd.f32 %v4768, %v4946
      %v4948 = vpop.f32.mrf.mxu0
      %4949 = vmatprep.mubr.bf16.mxu0 0
      %4950 = vmatmul.mubr.bf16.gmra.mxu0 %v4807
      %v4951 = vpop.f32.mrf.mxu0
      %v4952 = vadd.f32 %v4768, %v4951
      %v4953 = vpop.f32.mrf.mxu0
      %v4954 = vpop.f32.mrf.mxu0
      %v4955 = vadd.f32 %v4768, %v4954
      %v4956 = vpop.f32.mrf.mxu0
      %4957 = vmatprep.mubr.bf16.mxu0 0
      %4958 = vmatmul.mubr.bf16.gmra.mxu0 %v4810
      %v4959 = vpop.f32.mrf.mxu0
      %v4960 = vadd.f32 %v4768, %v4959
      %v4961 = vpop.f32.mrf.mxu0
      %v4962 = vpop.f32.mrf.mxu0
      %v4963 = vadd.f32 %v4768, %v4962
      %v4964 = vpop.f32.mrf.mxu0
      %4965 = vmatprep.mubr.bf16.mxu0 0
      %4966 = vmatmul.mubr.bf16.gmra.mxu0 %v4813
      %v4967 = vpop.f32.mrf.mxu0
      %v4968 = vadd.f32 %v4768, %v4967
      %v4969 = vpop.f32.mrf.mxu0
      %v4970 = vpop.f32.mrf.mxu0
      %v4971 = vadd.f32 %v4768, %v4970
      %v4972 = vpop.f32.mrf.mxu0
      %4973 = vmatprep.mubr.bf16.mxu0 0
      %4974 = vmatmul.mubr.bf16.gmra.mxu0 %v4816
      %v4975 = vpop.f32.mrf.mxu0
      %v4976 = vadd.f32 %v4768, %v4975
      %v4977 = vpop.f32.mrf.mxu0
      %v4978 = vpop.f32.mrf.mxu0
      %v4979 = vadd.f32 %v4768, %v4978
      %v4980 = vpop.f32.mrf.mxu0
      %4981 = vdwg.mxu0
      %v4982 = vadd.f32 %v4856, %v434
      %v4983 = vadd.f32 %v4859, %v435
      %v4984 = vadd.f32 %v4864, %v436
      %v4985 = vadd.f32 %v4867, %v437
      %v4986 = vadd.f32 %v4872, %v438
      %v4987 = vadd.f32 %v4875, %v439
      %v4988 = vadd.f32 %v4880, %v440
      %v4989 = vadd.f32 %v4883, %v441
      %v4990 = vadd.f32 %v4888, %v442
      %v4991 = vadd.f32 %v4891, %v443
      %v4992 = vadd.f32 %v4896, %v444
      %v4993 = vadd.f32 %v4899, %v445
      %v4994 = vadd.f32 %v4904, %v446
      %v4995 = vadd.f32 %v4907, %v447
      %v4996 = vadd.f32 %v4912, %v448
      %v4997 = vadd.f32 %v4915, %v449
      %v4998 = vadd.f32 %v4920, %v450
      %v4999 = vadd.f32 %v4923, %v451
      %v5000 = vadd.f32 %v4928, %v452
      %v5001 = vadd.f32 %v4931, %v453
      %v5002 = vadd.f32 %v4936, %v454
      %v5003 = vadd.f32 %v4939, %v455
      %v5004 = vadd.f32 %v4944, %v456
      %v5005 = vadd.f32 %v4947, %v457
      %v5006 = vadd.f32 %v4952, %v458
      %v5007 = vadd.f32 %v4955, %v459
      %v5008 = vadd.f32 %v4960, %v460
      %v5009 = vadd.f32 %v4963, %v461
      %v5010 = vadd.f32 %v4968, %v462
      %v5011 = vadd.f32 %v4971, %v463
      %v5012 = vadd.f32 %v4976, %v464
      %v5013 = vadd.f32 %v4979, %v465
      %v5014 = vmax.f32 %v4982, 0.0
      %v5015 = vmax.f32 %v4983, 0.0
      %v5016 = vmax.f32 %v4984, 0.0
      %v5017 = vmax.f32 %v4985, 0.0
      %v5018 = vmax.f32 %v4986, 0.0
      %v5019 = vmax.f32 %v4987, 0.0
      %v5020 = vmax.f32 %v4988, 0.0
      %v5021 = vmax.f32 %v4989, 0.0
      %v5022 = vmax.f32 %v4990, 0.0
      %v5023 = vmax.f32 %v4991, 0.0
      %v5024 = vmax.f32 %v4992, 0.0
      %v5025 = vmax.f32 %v4993, 0.0
      %v5026 = vmax.f32 %v4994, 0.0
      %v5027 = vmax.f32 %v4995, 0.0
      %v5028 = vmax.f32 %v4996, 0.0
      %v5029 = vmax.f32 %v4997, 0.0
      %v5030 = vmax.f32 %v4998, 0.0
      %v5031 = vmax.f32 %v4999, 0.0
      %v5032 = vmax.f32 %v5000, 0.0
      %v5033 = vmax.f32 %v5001, 0.0
      %v5034 = vmax.f32 %v5002, 0.0
      %v5035 = vmax.f32 %v5003, 0.0
      %v5036 = vmax.f32 %v5004, 0.0
      %v5037 = vmax.f32 %v5005, 0.0
      %v5038 = vmax.f32 %v5006, 0.0
      %v5039 = vmax.f32 %v5007, 0.0
      %v5040 = vmax.f32 %v5008, 0.0
      %v5041 = vmax.f32 %v5009, 0.0
      %v5042 = vmax.f32 %v5010, 0.0
      %v5043 = vmax.f32 %v5011, 0.0
      %v5044 = vmax.f32 %v5012, 0.0
      %v5045 = vmax.f32 %v5013, 0.0
      %5046 = vst.msk [vmem:[%s373] sm:$0xff] %vm494, %v5014
      %5047 = vst.msk [vmem:[%s373 + $0x8] sm:$0xff] %vm494, %v5015
      %5048 = vst.msk [vmem:[%s373 + $0x10] sm:$0xff] %vm494, %v5016
      %5049 = vst.msk [vmem:[%s373 + $0x18] sm:$0xff] %vm494, %v5017
      %5050 = vst.msk [vmem:[%s373 + $0x20] sm:$0xff] %vm494, %v5018
      %5051 = vst.msk [vmem:[%s373 + $0x28] sm:$0xff] %vm494, %v5019
      %5052 = vst.msk [vmem:[%s373 + $0x30] sm:$0xff] %vm494, %v5020
      %5053 = vst.msk [vmem:[%s373 + $0x38] sm:$0xff] %vm494, %v5021
      %5054 = vst.msk [vmem:[%s373 + $0x40] sm:$0xff] %vm494, %v5022
      %5055 = vst.msk [vmem:[%s373 + $0x48] sm:$0xff] %vm494, %v5023
      %5056 = vst.msk [vmem:[%s373 + $0x50] sm:$0xff] %vm494, %v5024
      %5057 = vst.msk [vmem:[%s373 + $0x58] sm:$0xff] %vm494, %v5025
      %5058 = vst.msk [vmem:[%s373 + $0x60] sm:$0xff] %vm494, %v5026
      %5059 = vst.msk [vmem:[%s373 + $0x68] sm:$0xff] %vm494, %v5027
      %5060 = vst.msk [vmem:[%s373 + $0x70] sm:$0xff] %vm494, %v5028
      %5061 = vst.msk [vmem:[%s373 + $0x78] sm:$0xff] %vm494, %v5029
      %5062 = vst.msk [vmem:[%s373 + $0x80] sm:$0xff] %vm494, %v5030
      %5063 = vst.msk [vmem:[%s373 + $0x88] sm:$0xff] %vm494, %v5031
      %5064 = vst.msk [vmem:[%s373 + $0x90] sm:$0xff] %vm494, %v5032
      %5065 = vst.msk [vmem:[%s373 + $0x98] sm:$0xff] %vm494, %v5033
      %5066 = vst.msk [vmem:[%s373 + $0xa0] sm:$0xff] %vm494, %v5034
      %5067 = vst.msk [vmem:[%s373 + $0xa8] sm:$0xff] %vm494, %v5035
      %5068 = vst.msk [vmem:[%s373 + $0xb0] sm:$0xff] %vm494, %v5036
      %5069 = vst.msk [vmem:[%s373 + $0xb8] sm:$0xff] %vm494, %v5037
      %5070 = vst.msk [vmem:[%s373 + $0xc0] sm:$0xff] %vm494, %v5038
      %5071 = vst.msk [vmem:[%s373 + $0xc8] sm:$0xff] %vm494, %v5039
      %5072 = vst.msk [vmem:[%s373 + $0xd0] sm:$0xff] %vm494, %v5040
      %5073 = vst.msk [vmem:[%s373 + $0xd8] sm:$0xff] %vm494, %v5041
      %5074 = vst.msk [vmem:[%s373 + $0xe0] sm:$0xff] %vm494, %v5042
      %5075 = vst.msk [vmem:[%s373 + $0xe8] sm:$0xff] %vm494, %v5043
      %5076 = vst.msk [vmem:[%s373 + $0xf0] sm:$0xff] %vm494, %v5044
      %5077 = vst.msk [vmem:[%s373 + $0xf8] sm:$0xff] %vm494, %v5045
      %s5078 = smul.u32 32, %s24
      %p5079 = scmp.lt.s32.totalorder %s23, 1
      %s5080 = scalar_select %p5079, %s23, 1
      %p5081 = scmp.lt.s32.totalorder %s5078, 31
      %s5082 = scalar_select %p5081, %s5078, 31
      %s5083 = smul.addr %s5080, 32
      %s5084 = sadd.s32 %s5082, %s5083
      %s5085 = smul.addr %s5084, 8
      %s5086 = scalar_lea.vmem %s8, %s5085
      // Predicated region
      $region53: #{bottleneck_forward.1} parent=51 // pred_check
        %p5087 = pneg %p233
      $region54: #{bottleneck_forward.1} parent=51 // pred_check_branch
        %5089 = sbr.rel (%p5087) target = $region56
      $region55: #{bottleneck_forward.1} parent=51 // pred_region
        %s5090 = smul.u32 32, %s24
      $region56: #{bottleneck_forward.1} parent=51 // pred_fallthru
        _
    $region52: #{bottleneck_forward.1} parent=5 // pred_fallthru
      _
    %p5091 = scmp.le.s32.totalorder 2, %s14
    // Predicated region
    $region57: #{bottleneck_forward.1} parent=5 // pred_check
      %p5092 = pneg %p5091
    $region58: #{bottleneck_forward.1} parent=5 // pred_check_branch
      %5094 = sbr.rel (%p5092) target = $region60
    $region59: #{bottleneck_forward.1} parent=5 // pred_region
      %s5095 = ssub.s32 %s14, 2
      // Predicated region
      $region61: #{bottleneck_forward.1} parent=59 // pred_check
        %p5096 = pneg %p239
      $region62: #{bottleneck_forward.1} parent=59 // pred_check_branch
        %5098 = sbr.rel (%p5096) target = $region64
      $region63: #{bottleneck_forward.1} parent=59 // pred_region
        %s5099 = smul.u32 32, %s26
        %p5100 = scmp.lt.s32.totalorder %s25, 1
        %s5101 = scalar_select %p5100, %s25, 1
        %p5102 = scmp.lt.s32.totalorder %s5099, 31
        %s5103 = scalar_select %p5102, %s5099, 31
        %s5104 = smul.addr %s5101, 32
        %s5105 = sadd.s32 %s5103, %s5104
        %s5106 = smul.addr %s5105, 8
        %s5107 = scalar_lea.vmem %s8, %s5106
      $region64: #{bottleneck_forward.1} parent=59 // pred_fallthru
        _
    $region60: #{bottleneck_forward.1} parent=5 // pred_fallthru
      _
  $region6: #{bottleneck_forward.1} parent=0 // loop_footer
    %s18 = sadd.s32 1, %s14
  $region7: #{bottleneck_forward.1} parent=0 // loop_footer_branch
    %13 = sbr.rel target = $region3
  $region8: #{bottleneck_forward.1} parent=0 // loop_exit
    _

</llo_original>
